<compile_context>
chip_gen: v5e
topology: v5e:2x2
jax: 0.10.0
libtpu: 0.0.40
codegen_flags: <defaults>
</compile_context>

<pallas_src>
import functools
import math

import jax
import jax.numpy as jnp
from jax.experimental import pallas as pl
from jax.experimental.pallas import tpu as pltpu


# ------------------------------ Pallas kernel --------------------------------
def _residual_block_kernel(x_ref, w1_ref, s1_ref, w2_ref, s2_ref, o_ref,
                           pad_ref, *, H, W, C):
    """Whole residual block for one batch sample (one grid step).

    x_ref  : (1, H, W, C)      f32  NHWC activation
    w*_ref : (9*C, C)          bf16 conv weight, rows ordered (kh, kw, Cin)
    s*_ref : (2, C)            f32  rows = [BN scale, BN shift (conv bias folded)]
    o_ref  : (1, H, W, C)      f32  output  x + block(x)
    pad_ref: (1, H+2, W+2, C)  f32  VMEM scratch: reflection-padded conv input
    """

    def reflect_pad_into(v):
        # ReflectionPad2d(1): interior, reflected rows, then reflected columns
        # (column writes read back the just-written rows -> corners correct).
        pad_ref[:, 1:H + 1, 1:W + 1, :] = v
        pad_ref[:, 0:1, 1:W + 1, :] = v[:, 1:2, :, :]
        pad_ref[:, H + 1:H + 2, 1:W + 1, :] = v[:, H - 2:H - 1, :, :]
        pad_ref[:, :, 0:1, :] = pad_ref[:, :, 2:3, :]
        pad_ref[:, :, W + 1:W + 2, :] = pad_ref[:, :, W - 1:W, :]

    def conv3x3_bn(w_ref, s_ref):
        # In-VMEM im2col: 9 shifted views of the padded scratch concatenated
        # along the lane-aligned channel axis -> a single MXU GEMM (K = 9*C).
        cols = [pad_ref[:, kh:kh + H, kw:kw + W, :]
                for kh in range(3) for kw in range(3)]
        patches = jnp.concatenate(cols, axis=-1).reshape(H * W, 9 * C)
        acc = jnp.dot(patches.astype(jnp.bfloat16), w_ref[...],
                      preferred_element_type=jnp.float32)
        s = s_ref[...]
        acc = acc * s[0:1, :] + s[1:2, :]   # conv bias + eval BN, f32 epilogue
        return acc.reshape(1, H, W, C)

    x = x_ref[...].astype(jnp.float32)
    reflect_pad_into(x)
    y = jnp.maximum(conv3x3_bn(w1_ref, s1_ref), 0.0)   # conv1 + BN1 + ReLU
    reflect_pad_into(y)
    y = conv3x3_bn(w2_ref, s2_ref)                     # conv2 + BN2
    o_ref[...] = (x + y).astype(o_ref.dtype)           # residual add


# --------------------------------- wrapper ------------------------------------
def residual_block_forward(x_nchw, params):
    """x_nchw: [B, C, H, W] f32 (PyTorch layout). Returns [B, C, H, W] f32."""
    w1, s1, w2, s2 = params
    B, C, H, W = x_nchw.shape
    x = jnp.transpose(x_nchw, (0, 2, 3, 1)).astype(jnp.float32)  # -> NHWC
    kernel = functools.partial(_residual_block_kernel, H=H, W=W, C=C)
    out = pl.pallas_call(
        kernel,
        out_shape=jax.ShapeDtypeStruct((B, H, W, C), jnp.float32),
        grid=(B,),
        in_specs=[
            pl.BlockSpec((1, H, W, C), lambda b: (b, 0, 0, 0)),  # x: one sample
            pl.BlockSpec((9 * C, C), lambda b: (0, 0)),          # w1 (resident)
            pl.BlockSpec((2, C), lambda b: (0, 0)),              # scale/shift 1
            pl.BlockSpec((9 * C, C), lambda b: (0, 0)),          # w2 (resident)
            pl.BlockSpec((2, C), lambda b: (0, 0)),              # scale/shift 2
        ],
        out_specs=pl.BlockSpec((1, H, W, C), lambda b: (b, 0, 0, 0)),
        scratch_shapes=[pltpu.VMEM((1, H + 2, W + 2, C), jnp.float32)],
        compiler_params=pltpu.CompilerParams(
            dimension_semantics=("parallel",),          # megacore over batch
            vmem_limit_bytes=48 * 1024 * 1024,          # < v7x's 64 MiB VMEM
        ),
    )(x, w1, s1, w2, s2)
    return jnp.transpose(out, (0, 3, 1, 2))             # back to NCHW


# --------------------------- params + pure-JAX reference ----------------------
def init_params(key, C, eps=1e-5):
    """Raw PyTorch-style params + folded / pre-laid-out kernel params."""
    kw1, kb1, kw2, kb2 = jax.random.split(key, 4)
    fan_in = 9 * C
    bound = 1.0 / math.sqrt(fan_in)          # PyTorch Conv2d default init range
    w1 = jax.random.uniform(kw1, (C, C, 3, 3), jnp.float32, -bound, bound)  # OIHW
    b1 = jax.random.uniform(kb1, (C,), jnp.float32, -bound, bound)
    w2 = jax.random.uniform(kw2, (C, C, 3, 3), jnp.float32, -bound, bound)
    b2 = jax.random.uniform(kb2, (C,), jnp.float32, -bound, bound)
    # Fresh BatchNorm2d buffers / affine params (eval mode).
    gamma = jnp.ones((C,), jnp.float32)
    beta = jnp.zeros((C,), jnp.float32)
    mean = jnp.zeros((C,), jnp.float32)
    var = jnp.ones((C,), jnp.float32)

    def fold(w_oihw, b):
        scale = gamma / jnp.sqrt(var + eps)
        shift = beta + scale * (b - mean)
        # OIHW -> rows (kh, kw, Cin) x cols Cout, pre-cast to bf16 for the MXU.
        w_col = jnp.transpose(w_oihw, (2, 3, 1, 0)).reshape(9 * C, C)
        return w_col.astype(jnp.bfloat16), jnp.stack([scale, shift])

    w1c, s1 = fold(w1, b1)
    w2c, s2 = fold(w2, b2)
    raw = (w1, b1, w2, b2, (gamma, beta, mean, var), eps)
    return raw, (w1c, s1, w2c, s2)


def reference_forward(x_nchw, raw):
    """Pure-JAX reference mirroring the PyTorch module (eval-mode BN)."""
    w1, b1, w2, b2, (gamma, beta, mean, var), eps = raw

    def conv_bn(x, w, b):
        xp = jnp.pad(x, ((0, 0), (0, 0), (1, 1), (1, 1)), mode="reflect")
        y = jax.lax.conv_general_dilated(
            xp, w, window_strides=(1, 1), padding="VALID",
            dimension_numbers=("NCHW", "OIHW", "NCHW"))
        y = y + b[None, :, None, None]
        inv = (gamma / jnp.sqrt(var + eps))[None, :, None, None]
        return inv * (y - mean[None, :, None, None]) + beta[None, :, None, None]

    y = jnp.maximum(conv_bn(x_nchw, w1, b1), 0.0)
    y = conv_bn(y, w2, b2)
    return x_nchw + y


# ----------------------------------- main -------------------------------------
if __name__ == "__main__":
    B, C, H, W = 2, 128, 16, 16   # in_features=128 (lane-dense), small spatial
    key = jax.random.PRNGKey(0)
    kp, kx = jax.random.split(key)

    raw, params = init_params(kp, C)
    x = jax.random.normal(kx, (B, C, H, W), dtype=jnp.float32)  # NCHW input

    fwd = jax.jit(residual_block_forward)
    out = jax.block_until_ready(fwd(x, params))
    assert out.shape == (B, C, H, W), out.shape
    assert bool(jnp.all(jnp.isfinite(out)))

    ref = reference_forward(x, raw)
    max_err = float(jnp.max(jnp.abs(out - ref)))
    assert jnp.allclose(out, ref, atol=5e-2, rtol=5e-2), f"max abs err {max_err}"
    print("KERNEL_OK")
</pallas_src>

<mosaic_0001>
module attributes {stable_mosaic.version = 11 : i64} {
  func.func @_residual_block_kernel(%arg0: i32, %arg1: memref<1x16x16x128xf32, #tpu.memory_space<vmem>>, %arg2: memref<1152x128xbf16, #tpu.memory_space<vmem>>, %arg3: memref<2x128xf32, #tpu.memory_space<vmem>>, %arg4: memref<1152x128xbf16, #tpu.memory_space<vmem>>, %arg5: memref<2x128xf32, #tpu.memory_space<vmem>>, %arg6: memref<1x16x16x128xf32, #tpu.memory_space<vmem>>, %arg7: memref<1x18x18x128xf32, #tpu.memory_space<vmem>>) attributes {dimension_semantics = [#tpu.dimension_semantics<parallel>], iteration_bounds = array<i64: 2>, scalar_prefetch = 0 : i64, scratch_operands = 1 : i64, tpu.core_type = #tpu.core_type<tc>, window_params = [{transform_indices = @transform_0, window_bounds = array<i64: 1, 16, 16, 128>}, {pipeline_mode = #tpu.pipeline_mode<synchronous>, transform_indices = @transform_1, window_bounds = array<i64: 1152, 128>}, {pipeline_mode = #tpu.pipeline_mode<synchronous>, transform_indices = @transform_2, window_bounds = array<i64: 2, 128>}, {pipeline_mode = #tpu.pipeline_mode<synchronous>, transform_indices = @transform_3, window_bounds = array<i64: 1152, 128>}, {pipeline_mode = #tpu.pipeline_mode<synchronous>, transform_indices = @transform_4, window_bounds = array<i64: 2, 128>}, {transform_indices = @transform_5, window_bounds = array<i64: 1, 16, 16, 128>}]} {
    %c0 = arith.constant 0 : index
    %c0_0 = arith.constant 0 : index
    %c0_1 = arith.constant 0 : index
    %c0_2 = arith.constant 0 : index
    %0 = vector.load %arg1[%c0, %c0_0, %c0_1, %c0_2] : memref<1x16x16x128xf32, #tpu.memory_space<vmem>>, vector<1x16x16x128xf32>
    %c0_3 = arith.constant 0 : index
    %c1 = arith.constant 1 : index
    %c1_4 = arith.constant 1 : index
    %c0_5 = arith.constant 0 : index
    %1 = vector.load %arg7[%c0_3, %c1, %c1_4, %c0_5] : memref<1x18x18x128xf32, #tpu.memory_space<vmem>>, vector<1x16x16x128xf32>
    tpu.vector_store %arg7[%c0_3, %c1, %c1_4, %c0_5], %0 {strides = array<i32>} : memref<1x18x18x128xf32, #tpu.memory_space<vmem>>, vector<1x16x16x128xf32>,
    %2 = vector.extract_strided_slice %0 {offsets = [0, 1, 0, 0], sizes = [1, 1, 16, 128], strides = [1, 1, 1, 1]} : vector<1x16x16x128xf32> to vector<1x1x16x128xf32>
    %c0_6 = arith.constant 0 : index
    %c0_7 = arith.constant 0 : index
    %c1_8 = arith.constant 1 : index
    %c0_9 = arith.constant 0 : index
    %3 = vector.load %arg7[%c0_6, %c0_7, %c1_8, %c0_9] : memref<1x18x18x128xf32, #tpu.memory_space<vmem>>, vector<1x1x16x128xf32>
    tpu.vector_store %arg7[%c0_6, %c0_7, %c1_8, %c0_9], %2 {strides = array<i32>} : memref<1x18x18x128xf32, #tpu.memory_space<vmem>>, vector<1x1x16x128xf32>,
    %4 = vector.extract_strided_slice %0 {offsets = [0, 14, 0, 0], sizes = [1, 1, 16, 128], strides = [1, 1, 1, 1]} : vector<1x16x16x128xf32> to vector<1x1x16x128xf32>
    %c0_10 = arith.constant 0 : index
    %c17 = arith.constant 17 : index
    %c1_11 = arith.constant 1 : index
    %c0_12 = arith.constant 0 : index
    %5 = vector.load %arg7[%c0_10, %c17, %c1_11, %c0_12] : memref<1x18x18x128xf32, #tpu.memory_space<vmem>>, vector<1x1x16x128xf32>
    tpu.vector_store %arg7[%c0_10, %c17, %c1_11, %c0_12], %4 {strides = array<i32>} : memref<1x18x18x128xf32, #tpu.memory_space<vmem>>, vector<1x1x16x128xf32>,
    %c0_13 = arith.constant 0 : index
    %c0_14 = arith.constant 0 : index
    %c2 = arith.constant 2 : index
    %c0_15 = arith.constant 0 : index
    %6 = vector.load %arg7[%c0_13, %c0_14, %c2, %c0_15] : memref<1x18x18x128xf32, #tpu.memory_space<vmem>>, vector<1x18x1x128xf32>
    %c0_16 = arith.constant 0 : index
    %c0_17 = arith.constant 0 : index
    %c0_18 = arith.constant 0 : index
    %c0_19 = arith.constant 0 : index
    %7 = vector.load %arg7[%c0_16, %c0_17, %c0_18, %c0_19] : memref<1x18x18x128xf32, #tpu.memory_space<vmem>>, vector<1x18x1x128xf32>
    tpu.vector_store %arg7[%c0_16, %c0_17, %c0_18, %c0_19], %6 {strides = array<i32>} : memref<1x18x18x128xf32, #tpu.memory_space<vmem>>, vector<1x18x1x128xf32>,
    %c0_20 = arith.constant 0 : index
    %c0_21 = arith.constant 0 : index
    %c15 = arith.constant 15 : index
    %c0_22 = arith.constant 0 : index
    %8 = vector.load %arg7[%c0_20, %c0_21, %c15, %c0_22] : memref<1x18x18x128xf32, #tpu.memory_space<vmem>>, vector<1x18x1x128xf32>
    %c0_23 = arith.constant 0 : index
    %c0_24 = arith.constant 0 : index
    %c17_25 = arith.constant 17 : index
    %c0_26 = arith.constant 0 : index
    %9 = vector.load %arg7[%c0_23, %c0_24, %c17_25, %c0_26] : memref<1x18x18x128xf32, #tpu.memory_space<vmem>>, vector<1x18x1x128xf32>
    tpu.vector_store %arg7[%c0_23, %c0_24, %c17_25, %c0_26], %8 {strides = array<i32>} : memref<1x18x18x128xf32, #tpu.memory_space<vmem>>, vector<1x18x1x128xf32>,
    %c0_27 = arith.constant 0 : index
    %c0_28 = arith.constant 0 : index
    %c0_29 = arith.constant 0 : index
    %c0_30 = arith.constant 0 : index
    %10 = vector.load %arg7[%c0_27, %c0_28, %c0_29, %c0_30] : memref<1x18x18x128xf32, #tpu.memory_space<vmem>>, vector<1x16x16x128xf32>
    %c0_31 = arith.constant 0 : index
    %c0_32 = arith.constant 0 : index
    %c1_33 = arith.constant 1 : index
    %c0_34 = arith.constant 0 : index
    %11 = vector.load %arg7[%c0_31, %c0_32, %c1_33, %c0_34] : memref<1x18x18x128xf32, #tpu.memory_space<vmem>>, vector<1x16x16x128xf32>
    %c0_35 = arith.constant 0 : index
    %c0_36 = arith.constant 0 : index
    %c2_37 = arith.constant 2 : index
    %c0_38 = arith.constant 0 : index
    %12 = vector.load %arg7[%c0_35, %c0_36, %c2_37, %c0_38] : memref<1x18x18x128xf32, #tpu.memory_space<vmem>>, vector<1x16x16x128xf32>
    %c0_39 = arith.constant 0 : index
    %c1_40 = arith.constant 1 : index
    %c0_41 = arith.constant 0 : index
    %c0_42 = arith.constant 0 : index
    %13 = vector.load %arg7[%c0_39, %c1_40, %c0_41, %c0_42] : memref<1x18x18x128xf32, #tpu.memory_space<vmem>>, vector<1x16x16x128xf32>
    %c0_43 = arith.constant 0 : index
    %c1_44 = arith.constant 1 : index
    %c1_45 = arith.constant 1 : index
    %c0_46 = arith.constant 0 : index
    %14 = vector.load %arg7[%c0_43, %c1_44, %c1_45, %c0_46] : memref<1x18x18x128xf32, #tpu.memory_space<vmem>>, vector<1x16x16x128xf32>
    %c0_47 = arith.constant 0 : index
    %c1_48 = arith.constant 1 : index
    %c2_49 = arith.constant 2 : index
    %c0_50 = arith.constant 0 : index
    %15 = vector.load %arg7[%c0_47, %c1_48, %c2_49, %c0_50] : memref<1x18x18x128xf32, #tpu.memory_space<vmem>>, vector<1x16x16x128xf32>
    %c0_51 = arith.constant 0 : index
    %c2_52 = arith.constant 2 : index
    %c0_53 = arith.constant 0 : index
    %c0_54 = arith.constant 0 : index
    %16 = vector.load %arg7[%c0_51, %c2_52, %c0_53, %c0_54] : memref<1x18x18x128xf32, #tpu.memory_space<vmem>>, vector<1x16x16x128xf32>
    %c0_55 = arith.constant 0 : index
    %c2_56 = arith.constant 2 : index
    %c1_57 = arith.constant 1 : index
    %c0_58 = arith.constant 0 : index
    %17 = vector.load %arg7[%c0_55, %c2_56, %c1_57, %c0_58] : memref<1x18x18x128xf32, #tpu.memory_space<vmem>>, vector<1x16x16x128xf32>
    %c0_59 = arith.constant 0 : index
    %c2_60 = arith.constant 2 : index
    %c2_61 = arith.constant 2 : index
    %c0_62 = arith.constant 0 : index
    %18 = vector.load %arg7[%c0_59, %c2_60, %c2_61, %c0_62] : memref<1x18x18x128xf32, #tpu.memory_space<vmem>>, vector<1x16x16x128xf32>
    %19 = tpu.concatenate %10, %11, %12, %13, %14, %15, %16, %17, %18 in 3 : vector<1x16x16x128xf32>, vector<1x16x16x128xf32>, vector<1x16x16x128xf32>, vector<1x16x16x128xf32>, vector<1x16x16x128xf32>, vector<1x16x16x128xf32>, vector<1x16x16x128xf32>, vector<1x16x16x128xf32>, vector<1x16x16x128xf32> -> vector<1x16x16x1152xf32>
    %20 = vector.shape_cast %19 : vector<1x16x16x1152xf32> to vector<256x1152xf32>
    %21 = arith.truncf %20 : vector<256x1152xf32> to vector<256x1152xbf16>
    %c0_63 = arith.constant 0 : index
    %c0_64 = arith.constant 0 : index
    %22 = vector.load %arg2[%c0_63, %c0_64] : memref<1152x128xbf16, #tpu.memory_space<vmem>>, vector<1152x128xbf16>
    %cst = arith.constant dense<0.000000e+00> : vector<256x128xf32>
    %23 = tpu.matmul %21, %22, %cst {dimension_numbers = #tpu.dot_dimension_numbers<[1], [0], [0], [1], [0, 0, 1, 1], [], []>} : vector<256x1152xbf16>, vector<1152x128xbf16>, vector<256x128xf32> -> vector<256x128xf32>
    %c0_65 = arith.constant 0 : index
    %c0_66 = arith.constant 0 : index
    %24 = vector.load %arg3[%c0_65, %c0_66] : memref<2x128xf32, #tpu.memory_space<vmem>>, vector<2x128xf32>
    %25 = vector.extract_strided_slice %24 {offsets = [0, 0], sizes = [1, 128], strides = [1, 1]} : vector<2x128xf32> to vector<1x128xf32>
    %26 = vector.broadcast %25 : vector<1x128xf32> to vector<256x128xf32>
    %27 = arith.mulf %23, %26 : vector<256x128xf32>
    %28 = vector.extract_strided_slice %24 {offsets = [1, 0], sizes = [1, 128], strides = [1, 1]} : vector<2x128xf32> to vector<1x128xf32>
    %29 = vector.broadcast %28 : vector<1x128xf32> to vector<256x128xf32>
    %30 = arith.addf %27, %29 : vector<256x128xf32>
    %31 = vector.shape_cast %30 : vector<256x128xf32> to vector<1x16x16x128xf32>
    %cst_67 = arith.constant 0.000000e+00 : f32
    %32 = vector.broadcast %cst_67 : f32 to vector<1x16x16x128xf32>
    %33 = arith.maximumf %31, %32 : vector<1x16x16x128xf32>
    %c0_68 = arith.constant 0 : index
    %c1_69 = arith.constant 1 : index
    %c1_70 = arith.constant 1 : index
    %c0_71 = arith.constant 0 : index
    %34 = vector.load %arg7[%c0_68, %c1_69, %c1_70, %c0_71] : memref<1x18x18x128xf32, #tpu.memory_space<vmem>>, vector<1x16x16x128xf32>
    tpu.vector_store %arg7[%c0_68, %c1_69, %c1_70, %c0_71], %33 {strides = array<i32>} : memref<1x18x18x128xf32, #tpu.memory_space<vmem>>, vector<1x16x16x128xf32>,
    %35 = vector.extract_strided_slice %33 {offsets = [0, 1, 0, 0], sizes = [1, 1, 16, 128], strides = [1, 1, 1, 1]} : vector<1x16x16x128xf32> to vector<1x1x16x128xf32>
    %c0_72 = arith.constant 0 : index
    %c0_73 = arith.constant 0 : index
    %c1_74 = arith.constant 1 : index
    %c0_75 = arith.constant 0 : index
    %36 = vector.load %arg7[%c0_72, %c0_73, %c1_74, %c0_75] : memref<1x18x18x128xf32, #tpu.memory_space<vmem>>, vector<1x1x16x128xf32>
    tpu.vector_store %arg7[%c0_72, %c0_73, %c1_74, %c0_75], %35 {strides = array<i32>} : memref<1x18x18x128xf32, #tpu.memory_space<vmem>>, vector<1x1x16x128xf32>,
    %37 = vector.extract_strided_slice %33 {offsets = [0, 14, 0, 0], sizes = [1, 1, 16, 128], strides = [1, 1, 1, 1]} : vector<1x16x16x128xf32> to vector<1x1x16x128xf32>
    %c0_76 = arith.constant 0 : index
    %c17_77 = arith.constant 17 : index
    %c1_78 = arith.constant 1 : index
    %c0_79 = arith.constant 0 : index
    %38 = vector.load %arg7[%c0_76, %c17_77, %c1_78, %c0_79] : memref<1x18x18x128xf32, #tpu.memory_space<vmem>>, vector<1x1x16x128xf32>
    tpu.vector_store %arg7[%c0_76, %c17_77, %c1_78, %c0_79], %37 {strides = array<i32>} : memref<1x18x18x128xf32, #tpu.memory_space<vmem>>, vector<1x1x16x128xf32>,
    %c0_80 = arith.constant 0 : index
    %c0_81 = arith.constant 0 : index
    %c2_82 = arith.constant 2 : index
    %c0_83 = arith.constant 0 : index
    %39 = vector.load %arg7[%c0_80, %c0_81, %c2_82, %c0_83] : memref<1x18x18x128xf32, #tpu.memory_space<vmem>>, vector<1x18x1x128xf32>
    %c0_84 = arith.constant 0 : index
    %c0_85 = arith.constant 0 : index
    %c0_86 = arith.constant 0 : index
    %c0_87 = arith.constant 0 : index
    %40 = vector.load %arg7[%c0_84, %c0_85, %c0_86, %c0_87] : memref<1x18x18x128xf32, #tpu.memory_space<vmem>>, vector<1x18x1x128xf32>
    tpu.vector_store %arg7[%c0_84, %c0_85, %c0_86, %c0_87], %39 {strides = array<i32>} : memref<1x18x18x128xf32, #tpu.memory_space<vmem>>, vector<1x18x1x128xf32>,
    %c0_88 = arith.constant 0 : index
    %c0_89 = arith.constant 0 : index
    %c15_90 = arith.constant 15 : index
    %c0_91 = arith.constant 0 : index
    %41 = vector.load %arg7[%c0_88, %c0_89, %c15_90, %c0_91] : memref<1x18x18x128xf32, #tpu.memory_space<vmem>>, vector<1x18x1x128xf32>
    %c0_92 = arith.constant 0 : index
    %c0_93 = arith.constant 0 : index
    %c17_94 = arith.constant 17 : index
    %c0_95 = arith.constant 0 : index
    %42 = vector.load %arg7[%c0_92, %c0_93, %c17_94, %c0_95] : memref<1x18x18x128xf32, #tpu.memory_space<vmem>>, vector<1x18x1x128xf32>
    tpu.vector_store %arg7[%c0_92, %c0_93, %c17_94, %c0_95], %41 {strides = array<i32>} : memref<1x18x18x128xf32, #tpu.memory_space<vmem>>, vector<1x18x1x128xf32>,
    %c0_96 = arith.constant 0 : index
    %c0_97 = arith.constant 0 : index
    %c0_98 = arith.constant 0 : index
    %c0_99 = arith.constant 0 : index
    %43 = vector.load %arg7[%c0_96, %c0_97, %c0_98, %c0_99] : memref<1x18x18x128xf32, #tpu.memory_space<vmem>>, vector<1x16x16x128xf32>
    %c0_100 = arith.constant 0 : index
    %c0_101 = arith.constant 0 : index
    %c1_102 = arith.constant 1 : index
    %c0_103 = arith.constant 0 : index
    %44 = vector.load %arg7[%c0_100, %c0_101, %c1_102, %c0_103] : memref<1x18x18x128xf32, #tpu.memory_space<vmem>>, vector<1x16x16x128xf32>
    %c0_104 = arith.constant 0 : index
    %c0_105 = arith.constant 0 : index
    %c2_106 = arith.constant 2 : index
    %c0_107 = arith.constant 0 : index
    %45 = vector.load %arg7[%c0_104, %c0_105, %c2_106, %c0_107] : memref<1x18x18x128xf32, #tpu.memory_space<vmem>>, vector<1x16x16x128xf32>
    %c0_108 = arith.constant 0 : index
    %c1_109 = arith.constant 1 : index
    %c0_110 = arith.constant 0 : index
    %c0_111 = arith.constant 0 : index
    %46 = vector.load %arg7[%c0_108, %c1_109, %c0_110, %c0_111] : memref<1x18x18x128xf32, #tpu.memory_space<vmem>>, vector<1x16x16x128xf32>
    %c0_112 = arith.constant 0 : index
    %c1_113 = arith.constant 1 : index
    %c1_114 = arith.constant 1 : index
    %c0_115 = arith.constant 0 : index
    %47 = vector.load %arg7[%c0_112, %c1_113, %c1_114, %c0_115] : memref<1x18x18x128xf32, #tpu.memory_space<vmem>>, vector<1x16x16x128xf32>
    %c0_116 = arith.constant 0 : index
    %c1_117 = arith.constant 1 : index
    %c2_118 = arith.constant 2 : index
    %c0_119 = arith.constant 0 : index
    %48 = vector.load %arg7[%c0_116, %c1_117, %c2_118, %c0_119] : memref<1x18x18x128xf32, #tpu.memory_space<vmem>>, vector<1x16x16x128xf32>
    %c0_120 = arith.constant 0 : index
    %c2_121 = arith.constant 2 : index
    %c0_122 = arith.constant 0 : index
    %c0_123 = arith.constant 0 : index
    %49 = vector.load %arg7[%c0_120, %c2_121, %c0_122, %c0_123] : memref<1x18x18x128xf32, #tpu.memory_space<vmem>>, vector<1x16x16x128xf32>
    %c0_124 = arith.constant 0 : index
    %c2_125 = arith.constant 2 : index
    %c1_126 = arith.constant 1 : index
    %c0_127 = arith.constant 0 : index
    %50 = vector.load %arg7[%c0_124, %c2_125, %c1_126, %c0_127] : memref<1x18x18x128xf32, #tpu.memory_space<vmem>>, vector<1x16x16x128xf32>
    %c0_128 = arith.constant 0 : index
    %c2_129 = arith.constant 2 : index
    %c2_130 = arith.constant 2 : index
    %c0_131 = arith.constant 0 : index
    %51 = vector.load %arg7[%c0_128, %c2_129, %c2_130, %c0_131] : memref<1x18x18x128xf32, #tpu.memory_space<vmem>>, vector<1x16x16x128xf32>
    %52 = tpu.concatenate %43, %44, %45, %46, %47, %48, %49, %50, %51 in 3 : vector<1x16x16x128xf32>, vector<1x16x16x128xf32>, vector<1x16x16x128xf32>, vector<1x16x16x128xf32>, vector<1x16x16x128xf32>, vector<1x16x16x128xf32>, vector<1x16x16x128xf32>, vector<1x16x16x128xf32>, vector<1x16x16x128xf32> -> vector<1x16x16x1152xf32>
    %53 = vector.shape_cast %52 : vector<1x16x16x1152xf32> to vector<256x1152xf32>
    %54 = arith.truncf %53 : vector<256x1152xf32> to vector<256x1152xbf16>
    %c0_132 = arith.constant 0 : index
    %c0_133 = arith.constant 0 : index
    %55 = vector.load %arg4[%c0_132, %c0_133] : memref<1152x128xbf16, #tpu.memory_space<vmem>>, vector<1152x128xbf16>
    %cst_134 = arith.constant dense<0.000000e+00> : vector<256x128xf32>
    %56 = tpu.matmul %54, %55, %cst_134 {dimension_numbers = #tpu.dot_dimension_numbers<[1], [0], [0], [1], [0, 0, 1, 1], [], []>} : vector<256x1152xbf16>, vector<1152x128xbf16>, vector<256x128xf32> -> vector<256x128xf32>
    %c0_135 = arith.constant 0 : index
    %c0_136 = arith.constant 0 : index
    %57 = vector.load %arg5[%c0_135, %c0_136] : memref<2x128xf32, #tpu.memory_space<vmem>>, vector<2x128xf32>
    %58 = vector.extract_strided_slice %57 {offsets = [0, 0], sizes = [1, 128], strides = [1, 1]} : vector<2x128xf32> to vector<1x128xf32>
    %59 = vector.broadcast %58 : vector<1x128xf32> to vector<256x128xf32>
    %60 = arith.mulf %56, %59 : vector<256x128xf32>
    %61 = vector.extract_strided_slice %57 {offsets = [1, 0], sizes = [1, 128], strides = [1, 1]} : vector<2x128xf32> to vector<1x128xf32>
    %62 = vector.broadcast %61 : vector<1x128xf32> to vector<256x128xf32>
    %63 = arith.addf %60, %62 : vector<256x128xf32>
    %64 = vector.shape_cast %63 : vector<256x128xf32> to vector<1x16x16x128xf32>
    %65 = arith.addf %0, %64 : vector<1x16x16x128xf32>
    %c0_137 = arith.constant 0 : index
    %c0_138 = arith.constant 0 : index
    %c0_139 = arith.constant 0 : index
    %c0_140 = arith.constant 0 : index
    %66 = vector.load %arg6[%c0_137, %c0_138, %c0_139, %c0_140] : memref<1x16x16x128xf32, #tpu.memory_space<vmem>>, vector<1x16x16x128xf32>
    tpu.vector_store %arg6[%c0_137, %c0_138, %c0_139, %c0_140], %65 {strides = array<i32>} : memref<1x16x16x128xf32, #tpu.memory_space<vmem>>, vector<1x16x16x128xf32>,
    return
  }
  func.func @transform_0(%arg0: i32) -> (i32, i32, i32, i32) {
    %c0_i32 = arith.constant 0 : i32
    %c0_i32_0 = arith.constant 0 : i32
    %c0_i32_1 = arith.constant 0 : i32
    %c0_i32_2 = arith.constant 0 : i32
    return %arg0, %c0_i32, %c0_i32_0, %c0_i32_1 : i32, i32, i32, i32
  }
  func.func @transform_1(%arg0: i32) -> (i32, i32) {
    %c0_i32 = arith.constant 0 : i32
    %c0_i32_0 = arith.constant 0 : i32
    %c0_i32_1 = arith.constant 0 : i32
    return %c0_i32, %c0_i32_0 : i32, i32
  }
  func.func @transform_2(%arg0: i32) -> (i32, i32) {
    %c0_i32 = arith.constant 0 : i32
    %c0_i32_0 = arith.constant 0 : i32
    %c0_i32_1 = arith.constant 0 : i32
    return %c0_i32, %c0_i32_0 : i32, i32
  }
  func.func @transform_3(%arg0: i32) -> (i32, i32) {
    %c0_i32 = arith.constant 0 : i32
    %c0_i32_0 = arith.constant 0 : i32
    %c0_i32_1 = arith.constant 0 : i32
    return %c0_i32, %c0_i32_0 : i32, i32
  }
  func.func @transform_4(%arg0: i32) -> (i32, i32) {
    %c0_i32 = arith.constant 0 : i32
    %c0_i32_0 = arith.constant 0 : i32
    %c0_i32_1 = arith.constant 0 : i32
    return %c0_i32, %c0_i32_0 : i32, i32
  }
  func.func @transform_5(%arg0: i32) -> (i32, i32, i32, i32) {
    %c0_i32 = arith.constant 0 : i32
    %c0_i32_0 = arith.constant 0 : i32
    %c0_i32_1 = arith.constant 0 : i32
    %c0_i32_2 = arith.constant 0 : i32
    return %arg0, %c0_i32, %c0_i32_0, %c0_i32_1 : i32, i32, i32, i32
  }
}

</mosaic_0001>

<llo_original>
// kernel: residual_block_forward.1
$region0: #{residual_block_forward.1}
  #allocation0 [shape = 'u32[]', space=smem, size = 0x4, offset = 0x4, fixed_abs, tag = 'smem constant byte address 0x4 - core index']
  #allocation1 [shape = 'u32[72,128]{1,0:T(1,128)}', space=vmem, size = 0x9000, scoped, tag = 'internal scratch']
  #allocation2 [shape = 'f32[1,18,18,128]{3,2,1,0:T(8,128)}', space=vmem, size = 0x36000, scoped, tag = 'scratch operand']
  %s0 = inlined_call_operand.hbm [shape: f32[2,16,16,128], index: 0, kind: input, shape index: {}]
  %s1 = inlined_call_operand.hbm [shape: bf16[1152,128], index: 1, kind: input, shape index: {}]
  %s2 = inlined_call_operand.vmem [shape: f32[2,128], index: 2, kind: input, shape index: {}]
  %s3 = inlined_call_operand.hbm [shape: bf16[1152,128], index: 3, kind: input, shape index: {}]
  %s4 = inlined_call_operand.vmem [shape: f32[2,128], index: 4, kind: input, shape index: {}]
  %s5 = inlined_call_operand.hbm [shape: f32[2,16,16,128], index: 5, kind: output, shape index: {}]
  %s6 = sld [smem:[#allocation0]]
  $region65: #{residual_block_forward.1} parent=0
    _
  %s8 = ssub.s32 1, %s6
  %s9 = scalar_select 0, %s8, %s6
  $region1: #{residual_block_forward.1} parent=0
    #allocation3 [shape = 'u8[262144]{0}', space=vmem, size = 0x40000, scoped, tag = 'input window, operand 0']
    #allocation4 [shape = 's32[2]{0}', space=sflag, size = 0x8, scoped, tag = 'scoped memory for residual_block_forward.1']
    #allocation5 [shape = 's32[2]{0}', space=sflag, size = 0x8, scoped, tag = 'scoped memory for residual_block_forward.1']
    #allocation6 [shape = 'u8[294912]{0}', space=vmem, size = 0x48000, scoped, tag = 'input window, operand 1, single buffered']
    #allocation7 [shape = 's32[1]{0}', space=sflag, size = 0x4, scoped, tag = 'scoped memory for residual_block_forward.1']
    #allocation8 [shape = 'u8[294912]{0}', space=vmem, size = 0x48000, scoped, tag = 'input window, operand 3, single buffered']
    #allocation9 [shape = 'u8[262144]{0}', space=vmem, size = 0x40000, scoped, tag = 'output window, operand 0']
    %10 = vsyncpa [#allocation4], 0
    %s11 = scalar_lea.sflag [#allocation4], 1
    %12 = vsyncpa %s11, 0
    %13 = vsyncpa [#allocation7], 0
    %14 = vsyncpa [#allocation5], 0
    %s15 = scalar_lea.sflag [#allocation5], 1
    %16 = vsyncpa %s15, 0
    loop: start=0, step=1, limit=4
    $region2: #{residual_block_forward.1} parent=1 // loop_pre_header
      _
    $region3: #{residual_block_forward.1} parent=1 // loop_header
      %s18 = sphi 0, %s22
      %p19 = scmp.ge.s32.totalorder %s18, 4
      %s28 = sphi 0, %s30
      %s31 = sphi 0, %s28
      %s32 = sphi 0, %s31
      %s48 = sphi 0, %s32
      %s52 = sphi 0, %s52
      %s54 = sphi 0, %s52
      %s55 = sphi 0, %s54
      %s69 = sphi 0, %s55
      %s73 = sphi 0, %s73
      %s75 = sphi 0, %s73
      %s76 = sphi 0, %s75
      %s90 = sphi 0, %s76
      %s94 = sphi 0, %s94
      %s96 = sphi 0, %s94
      %s97 = sphi 0, %s96
      %s111 = sphi 0, %s97
      %s115 = sphi 0, %s115
      %s117 = sphi 0, %s115
      %s118 = sphi 0, %s117
      %s132 = sphi 0, %s118
      %s138 = sphi 0, %s140
      %s141 = sphi 0, %s138
      %s142 = sphi 0, %s141
      %s158 = sphi 0, %s142
    $region4: #{residual_block_forward.1} parent=1 // loop_header_branch
      %21 = sbr.rel (%p19) target = $region8
    $region5: #{residual_block_forward.1} parent=1 // loop_body
      %s23 = ssub.s32 %s18, 1
      %s24 = ssub.s32 %s18, 2
      %s25 = sadd.s32 %s18, 1
      %s26 = ssub.s32 %s18, %s25
      %p27 = scmp.eq.s32.totalorder %s26, 0
      %s29 = sadd.s32 %s28, 1
      %s30 = scalar_select %p27, %s28, %s29
      %p33 = pneg %p27
      %p34 = scmp.eq.s32.totalorder %s18, 1
      %p35 = por %p33, %p34
      %p36 = scmp.ne.s32.totalorder %s28, %s31
      %p37 = scmp.eq.s32.totalorder %s18, 0
      %p38 = por %p36, %p37
      %p39 = scmp.ne.s32.totalorder %s28, %s31
      %p40 = scmp.eq.s32.totalorder %s23, 1
      %p41 = por %p39, %p40
      %p42 = scmp.ne.s32.totalorder %s31, %s32
      %p43 = scmp.eq.s32.totalorder %s23, 0
      %p44 = por %p42, %p43
      %p45 = scmp.ne.s32.totalorder %s31, %s32
      %p46 = scmp.eq.s32.totalorder %s24, 1
      %p47 = por %p45, %p46
      %p49 = scmp.ne.s32.totalorder %s32, %s48
      %p50 = scmp.eq.s32.totalorder %s24, 0
      %p51 = por %p49, %p50
      %s53 = sadd.s32 %s52, 1
      %p56 = scmp.eq.s32.totalorder %s18, 1
      %p57 = scmp.ne.s32.totalorder %s52, %s54
      %p58 = scmp.eq.s32.totalorder %s18, 0
      %p59 = por %p57, %p58
      %p60 = scmp.ne.s32.totalorder %s52, %s54
      %p61 = scmp.eq.s32.totalorder %s23, 1
      %p62 = por %p60, %p61
      %p63 = scmp.ne.s32.totalorder %s54, %s55
      %p64 = scmp.eq.s32.totalorder %s23, 0
      %p65 = por %p63, %p64
      %p66 = scmp.ne.s32.totalorder %s54, %s55
      %p67 = scmp.eq.s32.totalorder %s24, 1
      %p68 = por %p66, %p67
      %p70 = scmp.ne.s32.totalorder %s55, %s69
      %p71 = scmp.eq.s32.totalorder %s24, 0
      %p72 = por %p70, %p71
      %s74 = sadd.s32 %s73, 1
      %p77 = scmp.eq.s32.totalorder %s18, 1
      %p78 = scmp.ne.s32.totalorder %s73, %s75
      %p79 = scmp.eq.s32.totalorder %s18, 0
      %p80 = por %p78, %p79
      %p81 = scmp.ne.s32.totalorder %s73, %s75
      %p82 = scmp.eq.s32.totalorder %s23, 1
      %p83 = por %p81, %p82
      %p84 = scmp.ne.s32.totalorder %s75, %s76
      %p85 = scmp.eq.s32.totalorder %s23, 0
      %p86 = por %p84, %p85
      %p87 = scmp.ne.s32.totalorder %s75, %s76
      %p88 = scmp.eq.s32.totalorder %s24, 1
      %p89 = por %p87, %p88
      %p91 = scmp.ne.s32.totalorder %s76, %s90
      %p92 = scmp.eq.s32.totalorder %s24, 0
      %p93 = por %p91, %p92
      %s95 = sadd.s32 %s94, 1
      %p98 = scmp.eq.s32.totalorder %s18, 1
      %p99 = scmp.ne.s32.totalorder %s94, %s96
      %p100 = scmp.eq.s32.totalorder %s18, 0
      %p101 = por %p99, %p100
      %p102 = scmp.ne.s32.totalorder %s94, %s96
      %p103 = scmp.eq.s32.totalorder %s23, 1
      %p104 = por %p102, %p103
      %p105 = scmp.ne.s32.totalorder %s96, %s97
      %p106 = scmp.eq.s32.totalorder %s23, 0
      %p107 = por %p105, %p106
      %p108 = scmp.ne.s32.totalorder %s96, %s97
      %p109 = scmp.eq.s32.totalorder %s24, 1
      %p110 = por %p108, %p109
      %p112 = scmp.ne.s32.totalorder %s97, %s111
      %p113 = scmp.eq.s32.totalorder %s24, 0
      %p114 = por %p112, %p113
      %s116 = sadd.s32 %s115, 1
      %p119 = scmp.eq.s32.totalorder %s18, 1
      %p120 = scmp.ne.s32.totalorder %s115, %s117
      %p121 = scmp.eq.s32.totalorder %s18, 0
      %p122 = por %p120, %p121
      %p123 = scmp.ne.s32.totalorder %s115, %s117
      %p124 = scmp.eq.s32.totalorder %s23, 1
      %p125 = por %p123, %p124
      %p126 = scmp.ne.s32.totalorder %s117, %s118
      %p127 = scmp.eq.s32.totalorder %s23, 0
      %p128 = por %p126, %p127
      %p129 = scmp.ne.s32.totalorder %s117, %s118
      %p130 = scmp.eq.s32.totalorder %s24, 1
      %p131 = por %p129, %p130
      %p133 = scmp.ne.s32.totalorder %s118, %s132
      %p134 = scmp.eq.s32.totalorder %s24, 0
      %p135 = por %p133, %p134
      %s136 = ssub.s32 %s18, %s25
      %p137 = scmp.eq.s32.totalorder %s136, 0
      %s139 = sadd.s32 %s138, 1
      %s140 = scalar_select %p137, %s138, %s139
      %p143 = pneg %p137
      %p144 = scmp.eq.s32.totalorder %s18, 1
      %p145 = por %p143, %p144
      %p146 = scmp.ne.s32.totalorder %s138, %s141
      %p147 = scmp.eq.s32.totalorder %s18, 0
      %p148 = por %p146, %p147
      %p149 = scmp.ne.s32.totalorder %s138, %s141
      %p150 = scmp.eq.s32.totalorder %s23, 1
      %p151 = por %p149, %p150
      %p152 = scmp.ne.s32.totalorder %s141, %s142
      %p153 = scmp.eq.s32.totalorder %s23, 0
      %p154 = por %p152, %p153
      %p155 = scmp.ne.s32.totalorder %s141, %s142
      %p156 = scmp.eq.s32.totalorder %s24, 1
      %p157 = por %p155, %p156
      %p159 = scmp.ne.s32.totalorder %s142, %s158
      %p160 = scmp.eq.s32.totalorder %s24, 0
      %p161 = por %p159, %p160
      %p162 = scmp.le.s32.totalorder 1, %s18
      %p163 = scmp.lt.s32.totalorder %s18, 3
      %p164 = pnand %p162, %p163
      %p165 = pneg %p164
      // Predicated region
      $region9: #{residual_block_forward.1} parent=5 // pred_check
        _
      $region10: #{residual_block_forward.1} parent=5 // pred_check_branch
        %167 = sbr.rel (%p164) target = $region12
      $region11: #{residual_block_forward.1} parent=5 // pred_region
        %s168 = ssub.s32 %s18, 1
        // Predicated region
        $region13: #{residual_block_forward.1} parent=11 // pred_check
          %p169 = pneg %p65
        $region14: #{residual_block_forward.1} parent=11 // pred_check_branch
          %171 = sbr.rel (%p169) target = $region16
        $region15: #{residual_block_forward.1} parent=11 // pred_region
          %173 = vsyncadd [#allocation7], 0
          %s174 = sshll.u32 %s1, 4
          %s175 = int_to_ptr.hbm [resolvable:$true] %s174
          %s176 = sshll.u32 [#allocation6], 4
          %s177 = int_to_ptr.vmem [resolvable:$true] %s176
          %182 = dma.hbm_to_vmem [thread:$0]  %s175, 9216, %s177, [#allocation7], 64, 64, 4
        $region16: #{residual_block_forward.1} parent=11 // pred_fallthru
          _
        // Predicated region
        $region17: #{residual_block_forward.1} parent=11 // pred_check
          %p183 = pneg %p86
        $region18: #{residual_block_forward.1} parent=11 // pred_check_branch
          %185 = sbr.rel (%p183) target = $region20
        $region19: #{residual_block_forward.1} parent=11 // pred_region
          _
        $region20: #{residual_block_forward.1} parent=11 // pred_fallthru
          _
        // Predicated region
        $region21: #{residual_block_forward.1} parent=11 // pred_check
          %p186 = pneg %p107
        $region22: #{residual_block_forward.1} parent=11 // pred_check_branch
          %188 = sbr.rel (%p186) target = $region24
        $region23: #{residual_block_forward.1} parent=11 // pred_region
          %190 = vsyncadd [#allocation7], 0
          %s191 = sshll.u32 %s3, 4
          %s192 = int_to_ptr.hbm [resolvable:$true] %s191
          %s193 = sshll.u32 [#allocation8], 4
          %s194 = int_to_ptr.vmem [resolvable:$true] %s193
          %199 = dma.hbm_to_vmem [thread:$0]  %s192, 9216, %s194, [#allocation7], 64, 64, 4
        $region24: #{residual_block_forward.1} parent=11 // pred_fallthru
          _
        // Predicated region
        $region25: #{residual_block_forward.1} parent=11 // pred_check
          %p200 = pneg %p128
        $region26: #{residual_block_forward.1} parent=11 // pred_check_branch
          %202 = sbr.rel (%p200) target = $region28
        $region27: #{residual_block_forward.1} parent=11 // pred_region
          _
        $region28: #{residual_block_forward.1} parent=11 // pred_fallthru
          _
      $region12: #{residual_block_forward.1} parent=5 // pred_fallthru
        _
      %p203 = scmp.lt.s32.totalorder %s18, 2
      // Predicated region
      $region29: #{residual_block_forward.1} parent=5 // pred_check
        %p204 = pneg %p203
      $region30: #{residual_block_forward.1} parent=5 // pred_check_branch
        %206 = sbr.rel (%p204) target = $region32
      $region31: #{residual_block_forward.1} parent=5 // pred_region
        // Predicated region
        $region33: #{residual_block_forward.1} parent=31 // pred_check
          %p207 = pneg %p38
        $region34: #{residual_block_forward.1} parent=31 // pred_check_branch
          %209 = sbr.rel (%p207) target = $region36
        $region35: #{residual_block_forward.1} parent=31 // pred_region
          %s210 = sand.u32 %s28, 1
          %s211 = scalar_lea.sflag [#allocation4], %s210
          %s212 = sand.u32 %s28, 1
          %s213 = smul.addr %s212, 256
          %s214 = scalar_lea.vmem [#allocation3], %s213
          %216 = vsyncadd %s211, 0
          %s217 = smul.addr %s18, 32
          %s218 = smul.addr %s217, 8
          %s219 = scalar_lea.hbm %s0, %s218
          %s220 = sshll.u32 %s219, 4
          %s221 = int_to_ptr.hbm [resolvable:$true] %s220
          %s222 = sshll.u32 %s214, 4
          %s223 = int_to_ptr.vmem [resolvable:$true] %s222
          %228 = dma.hbm_to_vmem [thread:$0]  %s221, 4096, %s223, %s211, 128, 128, 8
        $region36: #{residual_block_forward.1} parent=31 // pred_fallthru
          _
      $region32: #{residual_block_forward.1} parent=5 // pred_fallthru
        _
      %p229 = scmp.le.s32.totalorder 1, %s18
      %p230 = scmp.lt.s32.totalorder %s18, 3
      %p231 = pnand %p229, %p230
      %p232 = pneg %p231
      // Predicated region
      $region37: #{residual_block_forward.1} parent=5 // pred_check
        _
      $region38: #{residual_block_forward.1} parent=5 // pred_check_branch
        %234 = sbr.rel (%p231) target = $region40
      $region39: #{residual_block_forward.1} parent=5 // pred_region
        %s235 = ssub.s32 %s18, 1
        %s236 = sand.u32 %s31, 1
        %s237 = scalar_lea.sflag [#allocation4], %s236
        %s238 = sand.u32 %s31, 1
        %s239 = smul.addr %s238, 256
        %s240 = scalar_lea.vmem [#allocation3], %s239
        // Predicated region
        $region41: #{residual_block_forward.1} parent=39 // pred_check
          %p241 = pneg %p44
        $region42: #{residual_block_forward.1} parent=39 // pred_check_branch
          %243 = sbr.rel (%p241) target = $region44
        $region43: #{residual_block_forward.1} parent=39 // pred_region
          %245 = dma.done %s237, 4096
        $region44: #{residual_block_forward.1} parent=39 // pred_fallthru
          _
        // Predicated region
        $region45: #{residual_block_forward.1} parent=39 // pred_check
          %p246 = pneg %p65
        $region46: #{residual_block_forward.1} parent=39 // pred_check_branch
          %248 = sbr.rel (%p246) target = $region48
        $region47: #{residual_block_forward.1} parent=39 // pred_region
          %250 = dma.done [#allocation7], 9216
        $region48: #{residual_block_forward.1} parent=39 // pred_fallthru
          _
        // Predicated region
        $region49: #{residual_block_forward.1} parent=39 // pred_check
          %p251 = pneg %p107
        $region50: #{residual_block_forward.1} parent=39 // pred_check_branch
          %253 = sbr.rel (%p251) target = $region52
        $region51: #{residual_block_forward.1} parent=39 // pred_region
          %255 = dma.done [#allocation7], 9216
        $region52: #{residual_block_forward.1} parent=39 // pred_fallthru
          _
        %s256 = sand.u32 %s31, 1
        %s257 = scalar_lea.sflag [#allocation4], %s256
        %s258 = sand.u32 %s31, 1
        %s259 = smul.addr %s258, 256
        %s260 = scalar_lea.vmem [#allocation3], %s259
        %p261 = pneg %p44
        %p262 = pneg %p41
        %p263 = pneg %p65
        %p264 = pneg %p62
        %p265 = pneg %p86
        %p266 = pneg %p83
        %p267 = pneg %p107
        %p268 = pneg %p104
        %p269 = pneg %p128
        %p270 = pneg %p125
        %p271 = pneg %p154
        %p272 = pneg %p151
        %s273 = sand.u32 %s141, 1
        %s274 = scalar_lea.sflag [#allocation5], %s273
        %s275 = sand.u32 %s141, 1
        %s276 = smul.addr %s275, 256
        %s277 = scalar_lea.vmem [#allocation9], %s276
        %v278 = vld [vmem:[%s240] sm:$0xff]
        %v279 = vld [vmem:[%s240 + $0x8] sm:$0xff]
        %v280 = vld [vmem:[%s240 + $0x10] sm:$0xff]
        %v281 = vld [vmem:[%s240 + $0x18] sm:$0xff]
        %v282 = vld [vmem:[%s240 + $0x20] sm:$0xff]
        %v283 = vld [vmem:[%s240 + $0x28] sm:$0xff]
        %v284 = vld [vmem:[%s240 + $0x30] sm:$0xff]
        %v285 = vld [vmem:[%s240 + $0x38] sm:$0xff]
        %v286 = vld [vmem:[%s240 + $0x40] sm:$0xff]
        %v287 = vld [vmem:[%s240 + $0x48] sm:$0xff]
        %v288 = vld [vmem:[%s240 + $0x50] sm:$0xff]
        %v289 = vld [vmem:[%s240 + $0x58] sm:$0xff]
        %v290 = vld [vmem:[%s240 + $0x60] sm:$0xff]
        %v291 = vld [vmem:[%s240 + $0x68] sm:$0xff]
        %v292 = vld [vmem:[%s240 + $0x70] sm:$0xff]
        %v293 = vld [vmem:[%s240 + $0x78] sm:$0xff]
        %v294 = vld [vmem:[%s240 + $0x80] sm:$0xff]
        %v295 = vld [vmem:[%s240 + $0x88] sm:$0xff]
        %v296 = vld [vmem:[%s240 + $0x90] sm:$0xff]
        %v297 = vld [vmem:[%s240 + $0x98] sm:$0xff]
        %v298 = vld [vmem:[%s240 + $0xa0] sm:$0xff]
        %v299 = vld [vmem:[%s240 + $0xa8] sm:$0xff]
        %v300 = vld [vmem:[%s240 + $0xb0] sm:$0xff]
        %v301 = vld [vmem:[%s240 + $0xb8] sm:$0xff]
        %v302 = vld [vmem:[%s240 + $0xc0] sm:$0xff]
        %v303 = vld [vmem:[%s240 + $0xc8] sm:$0xff]
        %v304 = vld [vmem:[%s240 + $0xd0] sm:$0xff]
        %v305 = vld [vmem:[%s240 + $0xd8] sm:$0xff]
        %v306 = vld [vmem:[%s240 + $0xe0] sm:$0xff]
        %v307 = vld [vmem:[%s240 + $0xe8] sm:$0xff]
        %v308 = vld [vmem:[%s240 + $0xf0] sm:$0xff]
        %v309 = vld [vmem:[%s240 + $0xf8] sm:$0xff]
        %s310 = scalar_lea.vmem [#allocation2], 24
        %311 = vst [vmem:[%s310 + $0x1] sm:$0xff] %v278
        %312 = vst [vmem:[%s310 + $0x9] sm:$0xff] %v279
        %313 = vst [vmem:[%s310 + $0x19] sm:$0xff] %v280
        %314 = vst [vmem:[%s310 + $0x21] sm:$0xff] %v281
        %315 = vst [vmem:[%s310 + $0x31] sm:$0xff] %v282
        %316 = vst [vmem:[%s310 + $0x39] sm:$0xff] %v283
        %317 = vst [vmem:[%s310 + $0x49] sm:$0xff] %v284
        %318 = vst [vmem:[%s310 + $0x51] sm:$0xff] %v285
        %319 = vst [vmem:[%s310 + $0x61] sm:$0xff] %v286
        %320 = vst [vmem:[%s310 + $0x69] sm:$0xff] %v287
        %321 = vst [vmem:[%s310 + $0x79] sm:$0xff] %v288
        %322 = vst [vmem:[%s310 + $0x81] sm:$0xff] %v289
        %323 = vst [vmem:[%s310 + $0x91] sm:$0xff] %v290
        %324 = vst [vmem:[%s310 + $0x99] sm:$0xff] %v291
        %325 = vst [vmem:[%s310 + $0xa9] sm:$0xff] %v292
        %326 = vst [vmem:[%s310 + $0xb1] sm:$0xff] %v293
        %327 = vst [vmem:[%s310 + $0xc1] sm:$0xff] %v294
        %328 = vst [vmem:[%s310 + $0xc9] sm:$0xff] %v295
        %329 = vst [vmem:[%s310 + $0xd9] sm:$0xff] %v296
        %330 = vst [vmem:[%s310 + $0xe1] sm:$0xff] %v297
        %331 = vst [vmem:[%s310 + $0xf1] sm:$0xff] %v298
        %332 = vst [vmem:[%s310 + $0xf9] sm:$0xff] %v299
        %333 = vst [vmem:[%s310 + $0x109] sm:$0xff] %v300
        %334 = vst [vmem:[%s310 + $0x111] sm:$0xff] %v301
        %335 = vst [vmem:[%s310 + $0x121] sm:$0xff] %v302
        %336 = vst [vmem:[%s310 + $0x129] sm:$0xff] %v303
        %337 = vst [vmem:[%s310 + $0x139] sm:$0xff] %v304
        %338 = vst [vmem:[%s310 + $0x141] sm:$0xff] %v305
        %339 = vst [vmem:[%s310 + $0x151] sm:$0xff] %v306
        %340 = vst [vmem:[%s310 + $0x159] sm:$0xff] %v307
        %341 = vst [vmem:[%s310 + $0x169] sm:$0xff] %v308
        %342 = vst [vmem:[%s310 + $0x171] sm:$0xff] %v309
        %343 = vst [vmem:[#allocation2 + $0x1] sm:$0xff] %v280
        %344 = vst [vmem:[#allocation2 + $0x9] sm:$0xff] %v281
        %s345 = scalar_lea.vmem [#allocation2], 408
        %346 = vst [vmem:[%s345 + $0x1] sm:$0xff] %v306
        %347 = vst [vmem:[%s345 + $0x9] sm:$0xff] %v307
        %v348 = vld [vmem:[#allocation2 + $0x2] sm:$0x1]
        %v349 = vld [vmem:[#allocation2 + $0x1a] sm:$0x1]
        %v350 = vld [vmem:[#allocation2 + $0x32] sm:$0x1]
        %v351 = vld [vmem:[#allocation2 + $0x4a] sm:$0x1]
        %v352 = vld [vmem:[#allocation2 + $0x62] sm:$0x1]
        %v353 = vld [vmem:[#allocation2 + $0x7a] sm:$0x1]
        %v354 = vld [vmem:[#allocation2 + $0x92] sm:$0x1]
        %v355 = vld [vmem:[#allocation2 + $0xaa] sm:$0x1]
        %v356 = vld [vmem:[#allocation2 + $0xc2] sm:$0x1]
        %v357 = vld [vmem:[#allocation2 + $0xda] sm:$0x1]
        %v358 = vld [vmem:[#allocation2 + $0xf2] sm:$0x1]
        %v359 = vld [vmem:[#allocation2 + $0x10a] sm:$0x1]
        %v360 = vld [vmem:[#allocation2 + $0x122] sm:$0x1]
        %v361 = vld [vmem:[#allocation2 + $0x13a] sm:$0x1]
        %v362 = vld [vmem:[#allocation2 + $0x152] sm:$0x1]
        %v363 = vld [vmem:[#allocation2 + $0x16a] sm:$0x1]
        %v364 = vld [vmem:[#allocation2 + $0x182] sm:$0x1]
        %v365 = vld [vmem:[#allocation2 + $0x19a] sm:$0x1]
        %366 = vst [vmem:[#allocation2] sm:$0x1] %v348
        %367 = vst [vmem:[#allocation2 + $0x18] sm:$0x1] %v349
        %368 = vst [vmem:[#allocation2 + $0x30] sm:$0x1] %v350
        %369 = vst [vmem:[#allocation2 + $0x48] sm:$0x1] %v351
        %370 = vst [vmem:[#allocation2 + $0x60] sm:$0x1] %v352
        %371 = vst [vmem:[#allocation2 + $0x78] sm:$0x1] %v353
        %372 = vst [vmem:[#allocation2 + $0x90] sm:$0x1] %v354
        %373 = vst [vmem:[#allocation2 + $0xa8] sm:$0x1] %v355
        %374 = vst [vmem:[#allocation2 + $0xc0] sm:$0x1] %v356
        %375 = vst [vmem:[#allocation2 + $0xd8] sm:$0x1] %v357
        %376 = vst [vmem:[#allocation2 + $0xf0] sm:$0x1] %v358
        %377 = vst [vmem:[#allocation2 + $0x108] sm:$0x1] %v359
        %378 = vst [vmem:[#allocation2 + $0x120] sm:$0x1] %v360
        %379 = vst [vmem:[#allocation2 + $0x138] sm:$0x1] %v361
        %380 = vst [vmem:[#allocation2 + $0x150] sm:$0x1] %v362
        %381 = vst [vmem:[#allocation2 + $0x168] sm:$0x1] %v363
        %382 = vst [vmem:[#allocation2 + $0x180] sm:$0x1] %v364
        %383 = vst [vmem:[#allocation2 + $0x198] sm:$0x1] %v365
        %v384 = vld [vmem:[#allocation2 + $0xf] sm:$0x1]
        %v385 = vld [vmem:[#allocation2 + $0x27] sm:$0x1]
        %v386 = vld [vmem:[#allocation2 + $0x3f] sm:$0x1]
        %v387 = vld [vmem:[#allocation2 + $0x57] sm:$0x1]
        %v388 = vld [vmem:[#allocation2 + $0x6f] sm:$0x1]
        %v389 = vld [vmem:[#allocation2 + $0x87] sm:$0x1]
        %v390 = vld [vmem:[#allocation2 + $0x9f] sm:$0x1]
        %v391 = vld [vmem:[#allocation2 + $0xb7] sm:$0x1]
        %v392 = vld [vmem:[#allocation2 + $0xcf] sm:$0x1]
        %v393 = vld [vmem:[#allocation2 + $0xe7] sm:$0x1]
        %v394 = vld [vmem:[#allocation2 + $0xff] sm:$0x1]
        %v395 = vld [vmem:[#allocation2 + $0x117] sm:$0x1]
        %v396 = vld [vmem:[#allocation2 + $0x12f] sm:$0x1]
        %v397 = vld [vmem:[#allocation2 + $0x147] sm:$0x1]
        %v398 = vld [vmem:[#allocation2 + $0x15f] sm:$0x1]
        %v399 = vld [vmem:[#allocation2 + $0x177] sm:$0x1]
        %v400 = vld [vmem:[#allocation2 + $0x18f] sm:$0x1]
        %v401 = vld [vmem:[#allocation2 + $0x1a7] sm:$0x1]
        %402 = vst [vmem:[#allocation2 + $0x11] sm:$0x1] %v384
        %403 = vst [vmem:[#allocation2 + $0x29] sm:$0x1] %v385
        %404 = vst [vmem:[#allocation2 + $0x41] sm:$0x1] %v386
        %405 = vst [vmem:[#allocation2 + $0x59] sm:$0x1] %v387
        %406 = vst [vmem:[#allocation2 + $0x71] sm:$0x1] %v388
        %407 = vst [vmem:[#allocation2 + $0x89] sm:$0x1] %v389
        %408 = vst [vmem:[#allocation2 + $0xa1] sm:$0x1] %v390
        %409 = vst [vmem:[#allocation2 + $0xb9] sm:$0x1] %v391
        %410 = vst [vmem:[#allocation2 + $0xd1] sm:$0x1] %v392
        %411 = vst [vmem:[#allocation2 + $0xe9] sm:$0x1] %v393
        %412 = vst [vmem:[#allocation2 + $0x101] sm:$0x1] %v394
        %413 = vst [vmem:[#allocation2 + $0x119] sm:$0x1] %v395
        %414 = vst [vmem:[#allocation2 + $0x131] sm:$0x1] %v396
        %415 = vst [vmem:[#allocation2 + $0x149] sm:$0x1] %v397
        %416 = vst [vmem:[#allocation2 + $0x161] sm:$0x1] %v398
        %417 = vst [vmem:[#allocation2 + $0x179] sm:$0x1] %v399
        %418 = vst [vmem:[#allocation2 + $0x191] sm:$0x1] %v400
        %419 = vst [vmem:[#allocation2 + $0x1a9] sm:$0x1] %v401
        %v420 = vld [vmem:[#allocation2] sm:$0xff]
        %v421 = vld [vmem:[#allocation2 + $0x8] sm:$0xff]
        %v422 = vld [vmem:[#allocation2 + $0x18] sm:$0xff]
        %v423 = vld [vmem:[#allocation2 + $0x20] sm:$0xff]
        %v424 = vld [vmem:[#allocation2 + $0x30] sm:$0xff]
        %v425 = vld [vmem:[#allocation2 + $0x38] sm:$0xff]
        %v426 = vld [vmem:[#allocation2 + $0x48] sm:$0xff]
        %v427 = vld [vmem:[#allocation2 + $0x50] sm:$0xff]
        %v428 = vld [vmem:[#allocation2 + $0x60] sm:$0xff]
        %v429 = vld [vmem:[#allocation2 + $0x68] sm:$0xff]
        %v430 = vld [vmem:[#allocation2 + $0x78] sm:$0xff]
        %v431 = vld [vmem:[#allocation2 + $0x80] sm:$0xff]
        %v432 = vld [vmem:[#allocation2 + $0x90] sm:$0xff]
        %v433 = vld [vmem:[#allocation2 + $0x98] sm:$0xff]
        %v434 = vld [vmem:[#allocation2 + $0xa8] sm:$0xff]
        %v435 = vld [vmem:[#allocation2 + $0xb0] sm:$0xff]
        %v436 = vld [vmem:[#allocation2 + $0xc0] sm:$0xff]
        %v437 = vld [vmem:[#allocation2 + $0xc8] sm:$0xff]
        %v438 = vld [vmem:[#allocation2 + $0xd8] sm:$0xff]
        %v439 = vld [vmem:[#allocation2 + $0xe0] sm:$0xff]
        %v440 = vld [vmem:[#allocation2 + $0xf0] sm:$0xff]
        %v441 = vld [vmem:[#allocation2 + $0xf8] sm:$0xff]
        %v442 = vld [vmem:[#allocation2 + $0x108] sm:$0xff]
        %v443 = vld [vmem:[#allocation2 + $0x110] sm:$0xff]
        %v444 = vld [vmem:[#allocation2 + $0x120] sm:$0xff]
        %v445 = vld [vmem:[#allocation2 + $0x128] sm:$0xff]
        %v446 = vld [vmem:[#allocation2 + $0x138] sm:$0xff]
        %v447 = vld [vmem:[#allocation2 + $0x140] sm:$0xff]
        %v448 = vld [vmem:[#allocation2 + $0x150] sm:$0xff]
        %v449 = vld [vmem:[#allocation2 + $0x158] sm:$0xff]
        %v450 = vld [vmem:[#allocation2 + $0x168] sm:$0xff]
        %v451 = vld [vmem:[#allocation2 + $0x170] sm:$0xff]
        %v452 = vld [vmem:[#allocation2 + $0x1] sm:$0xff]
        %v453 = vld [vmem:[#allocation2 + $0x9] sm:$0xff]
        %v454 = vld [vmem:[#allocation2 + $0x19] sm:$0xff]
        %v455 = vld [vmem:[#allocation2 + $0x21] sm:$0xff]
        %v456 = vld [vmem:[#allocation2 + $0x31] sm:$0xff]
        %v457 = vld [vmem:[#allocation2 + $0x39] sm:$0xff]
        %v458 = vld [vmem:[#allocation2 + $0x49] sm:$0xff]
        %v459 = vld [vmem:[#allocation2 + $0x51] sm:$0xff]
        %v460 = vld [vmem:[#allocation2 + $0x61] sm:$0xff]
        %v461 = vld [vmem:[#allocation2 + $0x69] sm:$0xff]
        %v462 = vld [vmem:[#allocation2 + $0x79] sm:$0xff]
        %v463 = vld [vmem:[#allocation2 + $0x81] sm:$0xff]
        %v464 = vld [vmem:[#allocation2 + $0x91] sm:$0xff]
        %v465 = vld [vmem:[#allocation2 + $0x99] sm:$0xff]
        %v466 = vld [vmem:[#allocation2 + $0xa9] sm:$0xff]
        %v467 = vld [vmem:[#allocation2 + $0xb1] sm:$0xff]
        %v468 = vld [vmem:[#allocation2 + $0xc1] sm:$0xff]
        %v469 = vld [vmem:[#allocation2 + $0xc9] sm:$0xff]
        %v470 = vld [vmem:[#allocation2 + $0xd9] sm:$0xff]
        %v471 = vld [vmem:[#allocation2 + $0xe1] sm:$0xff]
        %v472 = vld [vmem:[#allocation2 + $0xf1] sm:$0xff]
        %v473 = vld [vmem:[#allocation2 + $0xf9] sm:$0xff]
        %v474 = vld [vmem:[#allocation2 + $0x109] sm:$0xff]
        %v475 = vld [vmem:[#allocation2 + $0x111] sm:$0xff]
        %v476 = vld [vmem:[#allocation2 + $0x121] sm:$0xff]
        %v477 = vld [vmem:[#allocation2 + $0x129] sm:$0xff]
        %v478 = vld [vmem:[#allocation2 + $0x139] sm:$0xff]
        %v479 = vld [vmem:[#allocation2 + $0x141] sm:$0xff]
        %v480 = vld [vmem:[#allocation2 + $0x151] sm:$0xff]
        %v481 = vld [vmem:[#allocation2 + $0x159] sm:$0xff]
        %v482 = vld [vmem:[#allocation2 + $0x169] sm:$0xff]
        %v483 = vld [vmem:[#allocation2 + $0x171] sm:$0xff]
        %v484 = vld [vmem:[#allocation2 + $0x2] sm:$0xff]
        %v485 = vld [vmem:[#allocation2 + $0xa] sm:$0xff]
        %v486 = vld [vmem:[#allocation2 + $0x1a] sm:$0xff]
        %v487 = vld [vmem:[#allocation2 + $0x22] sm:$0xff]
        %v488 = vld [vmem:[#allocation2 + $0x32] sm:$0xff]
        %v489 = vld [vmem:[#allocation2 + $0x3a] sm:$0xff]
        %v490 = vld [vmem:[#allocation2 + $0x4a] sm:$0xff]
        %v491 = vld [vmem:[#allocation2 + $0x52] sm:$0xff]
        %v492 = vld [vmem:[#allocation2 + $0x62] sm:$0xff]
        %v493 = vld [vmem:[#allocation2 + $0x6a] sm:$0xff]
        %v494 = vld [vmem:[#allocation2 + $0x7a] sm:$0xff]
        %v495 = vld [vmem:[#allocation2 + $0x82] sm:$0xff]
        %v496 = vld [vmem:[#allocation2 + $0x92] sm:$0xff]
        %v497 = vld [vmem:[#allocation2 + $0x9a] sm:$0xff]
        %v498 = vld [vmem:[#allocation2 + $0xaa] sm:$0xff]
        %v499 = vld [vmem:[#allocation2 + $0xb2] sm:$0xff]
        %v500 = vld [vmem:[#allocation2 + $0xc2] sm:$0xff]
        %v501 = vld [vmem:[#allocation2 + $0xca] sm:$0xff]
        %v502 = vld [vmem:[#allocation2 + $0xda] sm:$0xff]
        %v503 = vld [vmem:[#allocation2 + $0xe2] sm:$0xff]
        %v504 = vld [vmem:[#allocation2 + $0xf2] sm:$0xff]
        %v505 = vld [vmem:[#allocation2 + $0xfa] sm:$0xff]
        %v506 = vld [vmem:[#allocation2 + $0x10a] sm:$0xff]
        %v507 = vld [vmem:[#allocation2 + $0x112] sm:$0xff]
        %v508 = vld [vmem:[#allocation2 + $0x122] sm:$0xff]
        %v509 = vld [vmem:[#allocation2 + $0x12a] sm:$0xff]
        %v510 = vld [vmem:[#allocation2 + $0x13a] sm:$0xff]
        %v511 = vld [vmem:[#allocation2 + $0x142] sm:$0xff]
        %v512 = vld [vmem:[#allocation2 + $0x152] sm:$0xff]
        %v513 = vld [vmem:[#allocation2 + $0x15a] sm:$0xff]
        %v514 = vld [vmem:[#allocation2 + $0x16a] sm:$0xff]
        %v515 = vld [vmem:[#allocation2 + $0x172] sm:$0xff]
        %v516 = vld [vmem:[%s310] sm:$0xff]
        %v517 = vld [vmem:[%s310 + $0x8] sm:$0xff]
        %v518 = vld [vmem:[%s310 + $0x18] sm:$0xff]
        %v519 = vld [vmem:[%s310 + $0x20] sm:$0xff]
        %v520 = vld [vmem:[%s310 + $0x30] sm:$0xff]
        %v521 = vld [vmem:[%s310 + $0x38] sm:$0xff]
        %v522 = vld [vmem:[%s310 + $0x48] sm:$0xff]
        %v523 = vld [vmem:[%s310 + $0x50] sm:$0xff]
        %v524 = vld [vmem:[%s310 + $0x60] sm:$0xff]
        %v525 = vld [vmem:[%s310 + $0x68] sm:$0xff]
        %v526 = vld [vmem:[%s310 + $0x78] sm:$0xff]
        %v527 = vld [vmem:[%s310 + $0x80] sm:$0xff]
        %v528 = vld [vmem:[%s310 + $0x90] sm:$0xff]
        %v529 = vld [vmem:[%s310 + $0x98] sm:$0xff]
        %v530 = vld [vmem:[%s310 + $0xa8] sm:$0xff]
        %v531 = vld [vmem:[%s310 + $0xb0] sm:$0xff]
        %v532 = vld [vmem:[%s310 + $0xc0] sm:$0xff]
        %v533 = vld [vmem:[%s310 + $0xc8] sm:$0xff]
        %v534 = vld [vmem:[%s310 + $0xd8] sm:$0xff]
        %v535 = vld [vmem:[%s310 + $0xe0] sm:$0xff]
        %v536 = vld [vmem:[%s310 + $0xf0] sm:$0xff]
        %v537 = vld [vmem:[%s310 + $0xf8] sm:$0xff]
        %v538 = vld [vmem:[%s310 + $0x108] sm:$0xff]
        %v539 = vld [vmem:[%s310 + $0x110] sm:$0xff]
        %v540 = vld [vmem:[%s310 + $0x120] sm:$0xff]
        %v541 = vld [vmem:[%s310 + $0x128] sm:$0xff]
        %v542 = vld [vmem:[%s310 + $0x138] sm:$0xff]
        %v543 = vld [vmem:[%s310 + $0x140] sm:$0xff]
        %v544 = vld [vmem:[%s310 + $0x150] sm:$0xff]
        %v545 = vld [vmem:[%s310 + $0x158] sm:$0xff]
        %v546 = vld [vmem:[%s310 + $0x168] sm:$0xff]
        %v547 = vld [vmem:[%s310 + $0x170] sm:$0xff]
        %v548 = vld [vmem:[%s310 + $0x1] sm:$0xff]
        %v549 = vld [vmem:[%s310 + $0x9] sm:$0xff]
        %v550 = vld [vmem:[%s310 + $0x19] sm:$0xff]
        %v551 = vld [vmem:[%s310 + $0x21] sm:$0xff]
        %v552 = vld [vmem:[%s310 + $0x31] sm:$0xff]
        %v553 = vld [vmem:[%s310 + $0x39] sm:$0xff]
        %v554 = vld [vmem:[%s310 + $0x49] sm:$0xff]
        %v555 = vld [vmem:[%s310 + $0x51] sm:$0xff]
        %v556 = vld [vmem:[%s310 + $0x61] sm:$0xff]
        %v557 = vld [vmem:[%s310 + $0x69] sm:$0xff]
        %v558 = vld [vmem:[%s310 + $0x79] sm:$0xff]
        %v559 = vld [vmem:[%s310 + $0x81] sm:$0xff]
        %v560 = vld [vmem:[%s310 + $0x91] sm:$0xff]
        %v561 = vld [vmem:[%s310 + $0x99] sm:$0xff]
        %v562 = vld [vmem:[%s310 + $0xa9] sm:$0xff]
        %v563 = vld [vmem:[%s310 + $0xb1] sm:$0xff]
        %v564 = vld [vmem:[%s310 + $0xc1] sm:$0xff]
        %v565 = vld [vmem:[%s310 + $0xc9] sm:$0xff]
        %v566 = vld [vmem:[%s310 + $0xd9] sm:$0xff]
        %v567 = vld [vmem:[%s310 + $0xe1] sm:$0xff]
        %v568 = vld [vmem:[%s310 + $0xf1] sm:$0xff]
        %v569 = vld [vmem:[%s310 + $0xf9] sm:$0xff]
        %v570 = vld [vmem:[%s310 + $0x109] sm:$0xff]
        %v571 = vld [vmem:[%s310 + $0x111] sm:$0xff]
        %v572 = vld [vmem:[%s310 + $0x121] sm:$0xff]
        %v573 = vld [vmem:[%s310 + $0x129] sm:$0xff]
        %v574 = vld [vmem:[%s310 + $0x139] sm:$0xff]
        %v575 = vld [vmem:[%s310 + $0x141] sm:$0xff]
        %v576 = vld [vmem:[%s310 + $0x151] sm:$0xff]
        %v577 = vld [vmem:[%s310 + $0x159] sm:$0xff]
        %v578 = vld [vmem:[%s310 + $0x169] sm:$0xff]
        %v579 = vld [vmem:[%s310 + $0x171] sm:$0xff]
        %v580 = vld [vmem:[%s310 + $0x2] sm:$0xff]
        %v581 = vld [vmem:[%s310 + $0xa] sm:$0xff]
        %v582 = vld [vmem:[%s310 + $0x1a] sm:$0xff]
        %v583 = vld [vmem:[%s310 + $0x22] sm:$0xff]
        %v584 = vld [vmem:[%s310 + $0x32] sm:$0xff]
        %v585 = vld [vmem:[%s310 + $0x3a] sm:$0xff]
        %v586 = vld [vmem:[%s310 + $0x4a] sm:$0xff]
        %v587 = vld [vmem:[%s310 + $0x52] sm:$0xff]
        %v588 = vld [vmem:[%s310 + $0x62] sm:$0xff]
        %v589 = vld [vmem:[%s310 + $0x6a] sm:$0xff]
        %v590 = vld [vmem:[%s310 + $0x7a] sm:$0xff]
        %v591 = vld [vmem:[%s310 + $0x82] sm:$0xff]
        %v592 = vld [vmem:[%s310 + $0x92] sm:$0xff]
        %v593 = vld [vmem:[%s310 + $0x9a] sm:$0xff]
        %v594 = vld [vmem:[%s310 + $0xaa] sm:$0xff]
        %v595 = vld [vmem:[%s310 + $0xb2] sm:$0xff]
        %v596 = vld [vmem:[%s310 + $0xc2] sm:$0xff]
        %v597 = vld [vmem:[%s310 + $0xca] sm:$0xff]
        %v598 = vld [vmem:[%s310 + $0xda] sm:$0xff]
        %v599 = vld [vmem:[%s310 + $0xe2] sm:$0xff]
        %v600 = vld [vmem:[%s310 + $0xf2] sm:$0xff]
        %v601 = vld [vmem:[%s310 + $0xfa] sm:$0xff]
        %v602 = vld [vmem:[%s310 + $0x10a] sm:$0xff]
        %v603 = vld [vmem:[%s310 + $0x112] sm:$0xff]
        %v604 = vld [vmem:[%s310 + $0x122] sm:$0xff]
        %v605 = vld [vmem:[%s310 + $0x12a] sm:$0xff]
        %v606 = vld [vmem:[%s310 + $0x13a] sm:$0xff]
        %v607 = vld [vmem:[%s310 + $0x142] sm:$0xff]
        %v608 = vld [vmem:[%s310 + $0x152] sm:$0xff]
        %v609 = vld [vmem:[%s310 + $0x15a] sm:$0xff]
        %v610 = vld [vmem:[%s310 + $0x16a] sm:$0xff]
        %v611 = vld [vmem:[%s310 + $0x172] sm:$0xff]
        %s612 = scalar_lea.vmem [#allocation2], 48
        %v613 = vld [vmem:[%s612] sm:$0xff]
        %v614 = vld [vmem:[%s612 + $0x8] sm:$0xff]
        %v615 = vld [vmem:[%s612 + $0x18] sm:$0xff]
        %v616 = vld [vmem:[%s612 + $0x20] sm:$0xff]
        %v617 = vld [vmem:[%s612 + $0x30] sm:$0xff]
        %v618 = vld [vmem:[%s612 + $0x38] sm:$0xff]
        %v619 = vld [vmem:[%s612 + $0x48] sm:$0xff]
        %v620 = vld [vmem:[%s612 + $0x50] sm:$0xff]
        %v621 = vld [vmem:[%s612 + $0x60] sm:$0xff]
        %v622 = vld [vmem:[%s612 + $0x68] sm:$0xff]
        %v623 = vld [vmem:[%s612 + $0x78] sm:$0xff]
        %v624 = vld [vmem:[%s612 + $0x80] sm:$0xff]
        %v625 = vld [vmem:[%s612 + $0x90] sm:$0xff]
        %v626 = vld [vmem:[%s612 + $0x98] sm:$0xff]
        %v627 = vld [vmem:[%s612 + $0xa8] sm:$0xff]
        %v628 = vld [vmem:[%s612 + $0xb0] sm:$0xff]
        %v629 = vld [vmem:[%s612 + $0xc0] sm:$0xff]
        %v630 = vld [vmem:[%s612 + $0xc8] sm:$0xff]
        %v631 = vld [vmem:[%s612 + $0xd8] sm:$0xff]
        %v632 = vld [vmem:[%s612 + $0xe0] sm:$0xff]
        %v633 = vld [vmem:[%s612 + $0xf0] sm:$0xff]
        %v634 = vld [vmem:[%s612 + $0xf8] sm:$0xff]
        %v635 = vld [vmem:[%s612 + $0x108] sm:$0xff]
        %v636 = vld [vmem:[%s612 + $0x110] sm:$0xff]
        %v637 = vld [vmem:[%s612 + $0x120] sm:$0xff]
        %v638 = vld [vmem:[%s612 + $0x128] sm:$0xff]
        %v639 = vld [vmem:[%s612 + $0x138] sm:$0xff]
        %v640 = vld [vmem:[%s612 + $0x140] sm:$0xff]
        %v641 = vld [vmem:[%s612 + $0x150] sm:$0xff]
        %v642 = vld [vmem:[%s612 + $0x158] sm:$0xff]
        %v643 = vld [vmem:[%s612 + $0x168] sm:$0xff]
        %v644 = vld [vmem:[%s612 + $0x170] sm:$0xff]
        %v645 = vld [vmem:[%s612 + $0x1] sm:$0xff]
        %v646 = vld [vmem:[%s612 + $0x9] sm:$0xff]
        %v647 = vld [vmem:[%s612 + $0x19] sm:$0xff]
        %v648 = vld [vmem:[%s612 + $0x21] sm:$0xff]
        %v649 = vld [vmem:[%s612 + $0x31] sm:$0xff]
        %v650 = vld [vmem:[%s612 + $0x39] sm:$0xff]
        %v651 = vld [vmem:[%s612 + $0x49] sm:$0xff]
        %v652 = vld [vmem:[%s612 + $0x51] sm:$0xff]
        %v653 = vld [vmem:[%s612 + $0x61] sm:$0xff]
        %v654 = vld [vmem:[%s612 + $0x69] sm:$0xff]
        %v655 = vld [vmem:[%s612 + $0x79] sm:$0xff]
        %v656 = vld [vmem:[%s612 + $0x81] sm:$0xff]
        %v657 = vld [vmem:[%s612 + $0x91] sm:$0xff]
        %v658 = vld [vmem:[%s612 + $0x99] sm:$0xff]
        %v659 = vld [vmem:[%s612 + $0xa9] sm:$0xff]
        %v660 = vld [vmem:[%s612 + $0xb1] sm:$0xff]
        %v661 = vld [vmem:[%s612 + $0xc1] sm:$0xff]
        %v662 = vld [vmem:[%s612 + $0xc9] sm:$0xff]
        %v663 = vld [vmem:[%s612 + $0xd9] sm:$0xff]
        %v664 = vld [vmem:[%s612 + $0xe1] sm:$0xff]
        %v665 = vld [vmem:[%s612 + $0xf1] sm:$0xff]
        %v666 = vld [vmem:[%s612 + $0xf9] sm:$0xff]
        %v667 = vld [vmem:[%s612 + $0x109] sm:$0xff]
        %v668 = vld [vmem:[%s612 + $0x111] sm:$0xff]
        %v669 = vld [vmem:[%s612 + $0x121] sm:$0xff]
        %v670 = vld [vmem:[%s612 + $0x129] sm:$0xff]
        %v671 = vld [vmem:[%s612 + $0x139] sm:$0xff]
        %v672 = vld [vmem:[%s612 + $0x141] sm:$0xff]
        %v673 = vld [vmem:[%s612 + $0x151] sm:$0xff]
        %v674 = vld [vmem:[%s612 + $0x159] sm:$0xff]
        %v675 = vld [vmem:[%s612 + $0x169] sm:$0xff]
        %v676 = vld [vmem:[%s612 + $0x171] sm:$0xff]
        %v677 = vld [vmem:[%s612 + $0x2] sm:$0xff]
        %v678 = vld [vmem:[%s612 + $0xa] sm:$0xff]
        %v679 = vld [vmem:[%s612 + $0x1a] sm:$0xff]
        %v680 = vld [vmem:[%s612 + $0x22] sm:$0xff]
        %v681 = vld [vmem:[%s612 + $0x32] sm:$0xff]
        %v682 = vld [vmem:[%s612 + $0x3a] sm:$0xff]
        %v683 = vld [vmem:[%s612 + $0x4a] sm:$0xff]
        %v684 = vld [vmem:[%s612 + $0x52] sm:$0xff]
        %v685 = vld [vmem:[%s612 + $0x62] sm:$0xff]
        %v686 = vld [vmem:[%s612 + $0x6a] sm:$0xff]
        %v687 = vld [vmem:[%s612 + $0x7a] sm:$0xff]
        %v688 = vld [vmem:[%s612 + $0x82] sm:$0xff]
        %v689 = vld [vmem:[%s612 + $0x92] sm:$0xff]
        %v690 = vld [vmem:[%s612 + $0x9a] sm:$0xff]
        %v691 = vld [vmem:[%s612 + $0xaa] sm:$0xff]
        %v692 = vld [vmem:[%s612 + $0xb2] sm:$0xff]
        %v693 = vld [vmem:[%s612 + $0xc2] sm:$0xff]
        %v694 = vld [vmem:[%s612 + $0xca] sm:$0xff]
        %v695 = vld [vmem:[%s612 + $0xda] sm:$0xff]
        %v696 = vld [vmem:[%s612 + $0xe2] sm:$0xff]
        %v697 = vld [vmem:[%s612 + $0xf2] sm:$0xff]
        %v698 = vld [vmem:[%s612 + $0xfa] sm:$0xff]
        %v699 = vld [vmem:[%s612 + $0x10a] sm:$0xff]
        %v700 = vld [vmem:[%s612 + $0x112] sm:$0xff]
        %v701 = vld [vmem:[%s612 + $0x122] sm:$0xff]
        %v702 = vld [vmem:[%s612 + $0x12a] sm:$0xff]
        %v703 = vld [vmem:[%s612 + $0x13a] sm:$0xff]
        %v704 = vld [vmem:[%s612 + $0x142] sm:$0xff]
        %v705 = vld [vmem:[%s612 + $0x152] sm:$0xff]
        %v706 = vld [vmem:[%s612 + $0x15a] sm:$0xff]
        %v707 = vld [vmem:[%s612 + $0x16a] sm:$0xff]
        %v708 = vld [vmem:[%s612 + $0x172] sm:$0xff]
        %v709 = vpack.c.bf16 %v421, %v420
        %v710 = vpack.c.bf16 %v453, %v452
        %v711 = vpack.c.bf16 %v485, %v484
        %v712 = vpack.c.bf16 %v517, %v516
        %v713 = vpack.c.bf16 %v549, %v548
        %v714 = vpack.c.bf16 %v581, %v580
        %v715 = vpack.c.bf16 %v614, %v613
        %v716 = vpack.c.bf16 %v646, %v645
        %v717 = vpack.c.bf16 %v678, %v677
        %v718 = vpack.c.bf16 %v423, %v422
        %v719 = vpack.c.bf16 %v455, %v454
        %v720 = vpack.c.bf16 %v487, %v486
        %v721 = vpack.c.bf16 %v519, %v518
        %v722 = vpack.c.bf16 %v551, %v550
        %v723 = vpack.c.bf16 %v583, %v582
        %v724 = vpack.c.bf16 %v616, %v615
        %v725 = vpack.c.bf16 %v648, %v647
        %v726 = vpack.c.bf16 %v680, %v679
        %v727 = vpack.c.bf16 %v425, %v424
        %v728 = vpack.c.bf16 %v457, %v456
        %v729 = vpack.c.bf16 %v489, %v488
        %v730 = vpack.c.bf16 %v521, %v520
        %v731 = vpack.c.bf16 %v553, %v552
        %v732 = vpack.c.bf16 %v585, %v584
        %v733 = vpack.c.bf16 %v618, %v617
        %v734 = vpack.c.bf16 %v650, %v649
        %v735 = vpack.c.bf16 %v682, %v681
        %v736 = vpack.c.bf16 %v427, %v426
        %v737 = vpack.c.bf16 %v459, %v458
        %v738 = vpack.c.bf16 %v491, %v490
        %v739 = vpack.c.bf16 %v523, %v522
        %v740 = vpack.c.bf16 %v555, %v554
        %v741 = vpack.c.bf16 %v587, %v586
        %v742 = vpack.c.bf16 %v620, %v619
        %v743 = vpack.c.bf16 %v652, %v651
        %v744 = vpack.c.bf16 %v684, %v683
        %v745 = vpack.c.bf16 %v429, %v428
        %v746 = vpack.c.bf16 %v461, %v460
        %v747 = vpack.c.bf16 %v493, %v492
        %v748 = vpack.c.bf16 %v525, %v524
        %v749 = vpack.c.bf16 %v557, %v556
        %v750 = vpack.c.bf16 %v589, %v588
        %v751 = vpack.c.bf16 %v622, %v621
        %v752 = vpack.c.bf16 %v654, %v653
        %v753 = vpack.c.bf16 %v686, %v685
        %v754 = vpack.c.bf16 %v431, %v430
        %v755 = vpack.c.bf16 %v463, %v462
        %v756 = vpack.c.bf16 %v495, %v494
        %v757 = vpack.c.bf16 %v527, %v526
        %v758 = vpack.c.bf16 %v559, %v558
        %v759 = vpack.c.bf16 %v591, %v590
        %v760 = vpack.c.bf16 %v624, %v623
        %v761 = vpack.c.bf16 %v656, %v655
        %v762 = vpack.c.bf16 %v688, %v687
        %v763 = vpack.c.bf16 %v433, %v432
        %v764 = vpack.c.bf16 %v465, %v464
        %v765 = vpack.c.bf16 %v497, %v496
        %v766 = vpack.c.bf16 %v529, %v528
        %v767 = vpack.c.bf16 %v561, %v560
        %v768 = vpack.c.bf16 %v593, %v592
        %v769 = vpack.c.bf16 %v626, %v625
        %v770 = vpack.c.bf16 %v658, %v657
        %v771 = vpack.c.bf16 %v690, %v689
        %v772 = vpack.c.bf16 %v435, %v434
        %v773 = vpack.c.bf16 %v467, %v466
        %v774 = vpack.c.bf16 %v499, %v498
        %v775 = vpack.c.bf16 %v531, %v530
        %v776 = vpack.c.bf16 %v563, %v562
        %v777 = vpack.c.bf16 %v595, %v594
        %v778 = vpack.c.bf16 %v628, %v627
        %v779 = vpack.c.bf16 %v660, %v659
        %v780 = vpack.c.bf16 %v692, %v691
        %v781 = vpack.c.bf16 %v437, %v436
        %v782 = vpack.c.bf16 %v469, %v468
        %v783 = vpack.c.bf16 %v501, %v500
        %v784 = vpack.c.bf16 %v533, %v532
        %v785 = vpack.c.bf16 %v565, %v564
        %v786 = vpack.c.bf16 %v597, %v596
        %v787 = vpack.c.bf16 %v630, %v629
        %v788 = vpack.c.bf16 %v662, %v661
        %v789 = vpack.c.bf16 %v694, %v693
        %v790 = vpack.c.bf16 %v439, %v438
        %v791 = vpack.c.bf16 %v471, %v470
        %v792 = vpack.c.bf16 %v503, %v502
        %v793 = vpack.c.bf16 %v535, %v534
        %v794 = vpack.c.bf16 %v567, %v566
        %v795 = vpack.c.bf16 %v599, %v598
        %v796 = vpack.c.bf16 %v632, %v631
        %v797 = vpack.c.bf16 %v664, %v663
        %v798 = vpack.c.bf16 %v696, %v695
        %v799 = vpack.c.bf16 %v441, %v440
        %v800 = vpack.c.bf16 %v473, %v472
        %v801 = vpack.c.bf16 %v505, %v504
        %v802 = vpack.c.bf16 %v537, %v536
        %v803 = vpack.c.bf16 %v569, %v568
        %v804 = vpack.c.bf16 %v601, %v600
        %v805 = vpack.c.bf16 %v634, %v633
        %v806 = vpack.c.bf16 %v666, %v665
        %v807 = vpack.c.bf16 %v698, %v697
        %v808 = vpack.c.bf16 %v443, %v442
        %v809 = vpack.c.bf16 %v475, %v474
        %v810 = vpack.c.bf16 %v507, %v506
        %v811 = vpack.c.bf16 %v539, %v538
        %v812 = vpack.c.bf16 %v571, %v570
        %v813 = vpack.c.bf16 %v603, %v602
        %v814 = vpack.c.bf16 %v636, %v635
        %v815 = vpack.c.bf16 %v668, %v667
        %v816 = vpack.c.bf16 %v700, %v699
        %v817 = vpack.c.bf16 %v445, %v444
        %v818 = vpack.c.bf16 %v477, %v476
        %v819 = vpack.c.bf16 %v509, %v508
        %v820 = vpack.c.bf16 %v541, %v540
        %v821 = vpack.c.bf16 %v573, %v572
        %v822 = vpack.c.bf16 %v605, %v604
        %v823 = vpack.c.bf16 %v638, %v637
        %v824 = vpack.c.bf16 %v670, %v669
        %v825 = vpack.c.bf16 %v702, %v701
        %v826 = vpack.c.bf16 %v447, %v446
        %v827 = vpack.c.bf16 %v479, %v478
        %v828 = vpack.c.bf16 %v511, %v510
        %v829 = vpack.c.bf16 %v543, %v542
        %v830 = vpack.c.bf16 %v575, %v574
        %v831 = vpack.c.bf16 %v607, %v606
        %v832 = vpack.c.bf16 %v640, %v639
        %v833 = vpack.c.bf16 %v672, %v671
        %v834 = vpack.c.bf16 %v704, %v703
        %v835 = vpack.c.bf16 %v449, %v448
        %v836 = vpack.c.bf16 %v481, %v480
        %v837 = vpack.c.bf16 %v513, %v512
        %v838 = vpack.c.bf16 %v545, %v544
        %v839 = vpack.c.bf16 %v577, %v576
        %v840 = vpack.c.bf16 %v609, %v608
        %v841 = vpack.c.bf16 %v642, %v641
        %v842 = vpack.c.bf16 %v674, %v673
        %v843 = vpack.c.bf16 %v706, %v705
        %v844 = vpack.c.bf16 %v451, %v450
        %v845 = vpack.c.bf16 %v483, %v482
        %v846 = vpack.c.bf16 %v515, %v514
        %v847 = vpack.c.bf16 %v547, %v546
        %v848 = vpack.c.bf16 %v579, %v578
        %v849 = vpack.c.bf16 %v611, %v610
        %v850 = vpack.c.bf16 %v644, %v643
        %v851 = vpack.c.bf16 %v676, %v675
        %v852 = vpack.c.bf16 %v708, %v707
        %v853 = vld [vmem:[#allocation6] sm:$0xf]
        %v854 = vld [vmem:[#allocation6 + $0x4] sm:$0xf]
        %v855 = vld [vmem:[#allocation6 + $0x8] sm:$0xf]
        %v856 = vld [vmem:[#allocation6 + $0xc] sm:$0xf]
        %v857 = vld [vmem:[#allocation6 + $0x10] sm:$0xf]
        %v858 = vld [vmem:[#allocation6 + $0x14] sm:$0xf]
        %v859 = vld [vmem:[#allocation6 + $0x18] sm:$0xf]
        %v860 = vld [vmem:[#allocation6 + $0x1c] sm:$0xf]
        %v861 = vld [vmem:[#allocation6 + $0x20] sm:$0xf]
        %v862 = vld [vmem:[#allocation6 + $0x24] sm:$0xf]
        %v863 = vld [vmem:[#allocation6 + $0x28] sm:$0xf]
        %v864 = vld [vmem:[#allocation6 + $0x2c] sm:$0xf]
        %v865 = vld [vmem:[#allocation6 + $0x30] sm:$0xf]
        %v866 = vld [vmem:[#allocation6 + $0x34] sm:$0xf]
        %v867 = vld [vmem:[#allocation6 + $0x38] sm:$0xf]
        %v868 = vld [vmem:[#allocation6 + $0x3c] sm:$0xf]
        %v869 = vld [vmem:[#allocation6 + $0x40] sm:$0xf]
        %v870 = vld [vmem:[#allocation6 + $0x44] sm:$0xf]
        %v871 = vld [vmem:[#allocation6 + $0x48] sm:$0xf]
        %v872 = vld [vmem:[#allocation6 + $0x4c] sm:$0xf]
        %v873 = vld [vmem:[#allocation6 + $0x50] sm:$0xf]
        %v874 = vld [vmem:[#allocation6 + $0x54] sm:$0xf]
        %v875 = vld [vmem:[#allocation6 + $0x58] sm:$0xf]
        %v876 = vld [vmem:[#allocation6 + $0x5c] sm:$0xf]
        %v877 = vld [vmem:[#allocation6 + $0x60] sm:$0xf]
        %v878 = vld [vmem:[#allocation6 + $0x64] sm:$0xf]
        %v879 = vld [vmem:[#allocation6 + $0x68] sm:$0xf]
        %v880 = vld [vmem:[#allocation6 + $0x6c] sm:$0xf]
        %v881 = vld [vmem:[#allocation6 + $0x70] sm:$0xf]
        %v882 = vld [vmem:[#allocation6 + $0x74] sm:$0xf]
        %v883 = vld [vmem:[#allocation6 + $0x78] sm:$0xf]
        %v884 = vld [vmem:[#allocation6 + $0x7c] sm:$0xf]
        %v885 = vld [vmem:[#allocation6 + $0x80] sm:$0xf]
        %v886 = vld [vmem:[#allocation6 + $0x84] sm:$0xf]
        %v887 = vld [vmem:[#allocation6 + $0x88] sm:$0xf]
        %v888 = vld [vmem:[#allocation6 + $0x8c] sm:$0xf]
        %v889 = vld [vmem:[#allocation6 + $0x90] sm:$0xf]
        %v890 = vld [vmem:[#allocation6 + $0x94] sm:$0xf]
        %v891 = vld [vmem:[#allocation6 + $0x98] sm:$0xf]
        %v892 = vld [vmem:[#allocation6 + $0x9c] sm:$0xf]
        %v893 = vld [vmem:[#allocation6 + $0xa0] sm:$0xf]
        %v894 = vld [vmem:[#allocation6 + $0xa4] sm:$0xf]
        %v895 = vld [vmem:[#allocation6 + $0xa8] sm:$0xf]
        %v896 = vld [vmem:[#allocation6 + $0xac] sm:$0xf]
        %v897 = vld [vmem:[#allocation6 + $0xb0] sm:$0xf]
        %v898 = vld [vmem:[#allocation6 + $0xb4] sm:$0xf]
        %v899 = vld [vmem:[#allocation6 + $0xb8] sm:$0xf]
        %v900 = vld [vmem:[#allocation6 + $0xbc] sm:$0xf]
        %v901 = vld [vmem:[#allocation6 + $0xc0] sm:$0xf]
        %v902 = vld [vmem:[#allocation6 + $0xc4] sm:$0xf]
        %v903 = vld [vmem:[#allocation6 + $0xc8] sm:$0xf]
        %v904 = vld [vmem:[#allocation6 + $0xcc] sm:$0xf]
        %v905 = vld [vmem:[#allocation6 + $0xd0] sm:$0xf]
        %v906 = vld [vmem:[#allocation6 + $0xd4] sm:$0xf]
        %v907 = vld [vmem:[#allocation6 + $0xd8] sm:$0xf]
        %v908 = vld [vmem:[#allocation6 + $0xdc] sm:$0xf]
        %v909 = vld [vmem:[#allocation6 + $0xe0] sm:$0xf]
        %v910 = vld [vmem:[#allocation6 + $0xe4] sm:$0xf]
        %v911 = vld [vmem:[#allocation6 + $0xe8] sm:$0xf]
        %v912 = vld [vmem:[#allocation6 + $0xec] sm:$0xf]
        %v913 = vld [vmem:[#allocation6 + $0xf0] sm:$0xf]
        %v914 = vld [vmem:[#allocation6 + $0xf4] sm:$0xf]
        %v915 = vld [vmem:[#allocation6 + $0xf8] sm:$0xf]
        %v916 = vld [vmem:[#allocation6 + $0xfc] sm:$0xf]
        %v917 = vld [vmem:[#allocation6 + $0x100] sm:$0xf]
        %v918 = vld [vmem:[#allocation6 + $0x104] sm:$0xf]
        %v919 = vld [vmem:[#allocation6 + $0x108] sm:$0xf]
        %v920 = vld [vmem:[#allocation6 + $0x10c] sm:$0xf]
        %v921 = vld [vmem:[#allocation6 + $0x110] sm:$0xf]
        %v922 = vld [vmem:[#allocation6 + $0x114] sm:$0xf]
        %v923 = vld [vmem:[#allocation6 + $0x118] sm:$0xf]
        %v924 = vld [vmem:[#allocation6 + $0x11c] sm:$0xf]
        %v925 = vld [vmem:[#allocation6 + $0x120] sm:$0xf]
        %v926 = vld [vmem:[#allocation6 + $0x124] sm:$0xf]
        %v927 = vld [vmem:[#allocation6 + $0x128] sm:$0xf]
        %v928 = vld [vmem:[#allocation6 + $0x12c] sm:$0xf]
        %v929 = vld [vmem:[#allocation6 + $0x130] sm:$0xf]
        %v930 = vld [vmem:[#allocation6 + $0x134] sm:$0xf]
        %v931 = vld [vmem:[#allocation6 + $0x138] sm:$0xf]
        %v932 = vld [vmem:[#allocation6 + $0x13c] sm:$0xf]
        %v933 = vld [vmem:[#allocation6 + $0x140] sm:$0xf]
        %v934 = vld [vmem:[#allocation6 + $0x144] sm:$0xf]
        %v935 = vld [vmem:[#allocation6 + $0x148] sm:$0xf]
        %v936 = vld [vmem:[#allocation6 + $0x14c] sm:$0xf]
        %v937 = vld [vmem:[#allocation6 + $0x150] sm:$0xf]
        %v938 = vld [vmem:[#allocation6 + $0x154] sm:$0xf]
        %v939 = vld [vmem:[#allocation6 + $0x158] sm:$0xf]
        %v940 = vld [vmem:[#allocation6 + $0x15c] sm:$0xf]
        %v941 = vld [vmem:[#allocation6 + $0x160] sm:$0xf]
        %v942 = vld [vmem:[#allocation6 + $0x164] sm:$0xf]
        %v943 = vld [vmem:[#allocation6 + $0x168] sm:$0xf]
        %v944 = vld [vmem:[#allocation6 + $0x16c] sm:$0xf]
        %v945 = vld [vmem:[#allocation6 + $0x170] sm:$0xf]
        %v946 = vld [vmem:[#allocation6 + $0x174] sm:$0xf]
        %v947 = vld [vmem:[#allocation6 + $0x178] sm:$0xf]
        %v948 = vld [vmem:[#allocation6 + $0x17c] sm:$0xf]
        %v949 = vld [vmem:[#allocation6 + $0x180] sm:$0xf]
        %v950 = vld [vmem:[#allocation6 + $0x184] sm:$0xf]
        %v951 = vld [vmem:[#allocation6 + $0x188] sm:$0xf]
        %v952 = vld [vmem:[#allocation6 + $0x18c] sm:$0xf]
        %v953 = vld [vmem:[#allocation6 + $0x190] sm:$0xf]
        %v954 = vld [vmem:[#allocation6 + $0x194] sm:$0xf]
        %v955 = vld [vmem:[#allocation6 + $0x198] sm:$0xf]
        %v956 = vld [vmem:[#allocation6 + $0x19c] sm:$0xf]
        %v957 = vld [vmem:[#allocation6 + $0x1a0] sm:$0xf]
        %v958 = vld [vmem:[#allocation6 + $0x1a4] sm:$0xf]
        %v959 = vld [vmem:[#allocation6 + $0x1a8] sm:$0xf]
        %v960 = vld [vmem:[#allocation6 + $0x1ac] sm:$0xf]
        %v961 = vld [vmem:[#allocation6 + $0x1b0] sm:$0xf]
        %v962 = vld [vmem:[#allocation6 + $0x1b4] sm:$0xf]
        %v963 = vld [vmem:[#allocation6 + $0x1b8] sm:$0xf]
        %v964 = vld [vmem:[#allocation6 + $0x1bc] sm:$0xf]
        %v965 = vld [vmem:[#allocation6 + $0x1c0] sm:$0xf]
        %v966 = vld [vmem:[#allocation6 + $0x1c4] sm:$0xf]
        %v967 = vld [vmem:[#allocation6 + $0x1c8] sm:$0xf]
        %v968 = vld [vmem:[#allocation6 + $0x1cc] sm:$0xf]
        %v969 = vld [vmem:[#allocation6 + $0x1d0] sm:$0xf]
        %v970 = vld [vmem:[#allocation6 + $0x1d4] sm:$0xf]
        %v971 = vld [vmem:[#allocation6 + $0x1d8] sm:$0xf]
        %v972 = vld [vmem:[#allocation6 + $0x1dc] sm:$0xf]
        %v973 = vld [vmem:[#allocation6 + $0x1e0] sm:$0xf]
        %v974 = vld [vmem:[#allocation6 + $0x1e4] sm:$0xf]
        %v975 = vld [vmem:[#allocation6 + $0x1e8] sm:$0xf]
        %v976 = vld [vmem:[#allocation6 + $0x1ec] sm:$0xf]
        %v977 = vld [vmem:[#allocation6 + $0x1f0] sm:$0xf]
        %v978 = vld [vmem:[#allocation6 + $0x1f4] sm:$0xf]
        %v979 = vld [vmem:[#allocation6 + $0x1f8] sm:$0xf]
        %v980 = vld [vmem:[#allocation6 + $0x1fc] sm:$0xf]
        %v981 = vld [vmem:[#allocation6 + $0x200] sm:$0xf]
        %v982 = vld [vmem:[#allocation6 + $0x204] sm:$0xf]
        %v983 = vld [vmem:[#allocation6 + $0x208] sm:$0xf]
        %v984 = vld [vmem:[#allocation6 + $0x20c] sm:$0xf]
        %v985 = vld [vmem:[#allocation6 + $0x210] sm:$0xf]
        %v986 = vld [vmem:[#allocation6 + $0x214] sm:$0xf]
        %v987 = vld [vmem:[#allocation6 + $0x218] sm:$0xf]
        %v988 = vld [vmem:[#allocation6 + $0x21c] sm:$0xf]
        %v989 = vld [vmem:[#allocation6 + $0x220] sm:$0xf]
        %v990 = vld [vmem:[#allocation6 + $0x224] sm:$0xf]
        %v991 = vld [vmem:[#allocation6 + $0x228] sm:$0xf]
        %v992 = vld [vmem:[#allocation6 + $0x22c] sm:$0xf]
        %v993 = vld [vmem:[#allocation6 + $0x230] sm:$0xf]
        %v994 = vld [vmem:[#allocation6 + $0x234] sm:$0xf]
        %v995 = vld [vmem:[#allocation6 + $0x238] sm:$0xf]
        %v996 = vld [vmem:[#allocation6 + $0x23c] sm:$0xf]
        %v1141 = vunpack.c.l.b16 %v853
        %v1142 = vunpack.c.l.b16 %v854
        %v1143 = vunpack.c.l.b16 %v855
        %v1144 = vunpack.c.l.b16 %v856
        %v1145 = vunpack.c.l.b16 %v857
        %v1146 = vunpack.c.l.b16 %v858
        %v1147 = vunpack.c.l.b16 %v859
        %v1148 = vunpack.c.l.b16 %v860
        %v1149 = vunpack.c.l.b16 %v861
        %v1150 = vunpack.c.l.b16 %v862
        %v1151 = vunpack.c.l.b16 %v863
        %v1152 = vunpack.c.l.b16 %v864
        %v1153 = vunpack.c.l.b16 %v865
        %v1154 = vunpack.c.l.b16 %v866
        %v1155 = vunpack.c.l.b16 %v867
        %v1156 = vunpack.c.l.b16 %v868
        %v1157 = vunpack.c.l.b16 %v869
        %v1158 = vunpack.c.l.b16 %v870
        %v1159 = vunpack.c.l.b16 %v871
        %v1160 = vunpack.c.l.b16 %v872
        %v1161 = vunpack.c.l.b16 %v873
        %v1162 = vunpack.c.l.b16 %v874
        %v1163 = vunpack.c.l.b16 %v875
        %v1164 = vunpack.c.l.b16 %v876
        %v1165 = vunpack.c.l.b16 %v877
        %v1166 = vunpack.c.l.b16 %v878
        %v1167 = vunpack.c.l.b16 %v879
        %v1168 = vunpack.c.l.b16 %v880
        %v1169 = vunpack.c.l.b16 %v881
        %v1170 = vunpack.c.l.b16 %v882
        %v1171 = vunpack.c.l.b16 %v883
        %v1172 = vunpack.c.l.b16 %v884
        %v1173 = vunpack.c.l.b16 %v885
        %v1174 = vunpack.c.l.b16 %v886
        %v1175 = vunpack.c.l.b16 %v887
        %v1176 = vunpack.c.l.b16 %v888
        %v1177 = vunpack.c.l.b16 %v889
        %v1178 = vunpack.c.l.b16 %v890
        %v1179 = vunpack.c.l.b16 %v891
        %v1180 = vunpack.c.l.b16 %v892
        %v1181 = vunpack.c.l.b16 %v893
        %v1182 = vunpack.c.l.b16 %v894
        %v1183 = vunpack.c.l.b16 %v895
        %v1184 = vunpack.c.l.b16 %v896
        %v1185 = vunpack.c.l.b16 %v897
        %v1186 = vunpack.c.l.b16 %v898
        %v1187 = vunpack.c.l.b16 %v899
        %v1188 = vunpack.c.l.b16 %v900
        %v1189 = vunpack.c.l.b16 %v901
        %v1190 = vunpack.c.l.b16 %v902
        %v1191 = vunpack.c.l.b16 %v903
        %v1192 = vunpack.c.l.b16 %v904
        %v1193 = vunpack.c.l.b16 %v905
        %v1194 = vunpack.c.l.b16 %v906
        %v1195 = vunpack.c.l.b16 %v907
        %v1196 = vunpack.c.l.b16 %v908
        %v1197 = vunpack.c.l.b16 %v909
        %v1198 = vunpack.c.l.b16 %v910
        %v1199 = vunpack.c.l.b16 %v911
        %v1200 = vunpack.c.l.b16 %v912
        %v1201 = vunpack.c.l.b16 %v913
        %v1202 = vunpack.c.l.b16 %v914
        %v1203 = vunpack.c.l.b16 %v915
        %v1204 = vunpack.c.l.b16 %v916
        %v1205 = vunpack.c.l.b16 %v917
        %v1206 = vunpack.c.l.b16 %v918
        %v1207 = vunpack.c.l.b16 %v919
        %v1208 = vunpack.c.l.b16 %v920
        %v1209 = vunpack.c.l.b16 %v921
        %v1210 = vunpack.c.l.b16 %v922
        %v1211 = vunpack.c.l.b16 %v923
        %v1212 = vunpack.c.l.b16 %v924
        %v1213 = vunpack.c.l.b16 %v925
        %v1214 = vunpack.c.l.b16 %v926
        %v1215 = vunpack.c.l.b16 %v927
        %v1216 = vunpack.c.l.b16 %v928
        %v1217 = vunpack.c.l.b16 %v929
        %v1218 = vunpack.c.l.b16 %v930
        %v1219 = vunpack.c.l.b16 %v931
        %v1220 = vunpack.c.l.b16 %v932
        %v1221 = vunpack.c.l.b16 %v933
        %v1222 = vunpack.c.l.b16 %v934
        %v1223 = vunpack.c.l.b16 %v935
        %v1224 = vunpack.c.l.b16 %v936
        %v1225 = vunpack.c.l.b16 %v937
        %v1226 = vunpack.c.l.b16 %v938
        %v1227 = vunpack.c.l.b16 %v939
        %v1228 = vunpack.c.l.b16 %v940
        %v1229 = vunpack.c.l.b16 %v941
        %v1230 = vunpack.c.l.b16 %v942
        %v1231 = vunpack.c.l.b16 %v943
        %v1232 = vunpack.c.l.b16 %v944
        %v1233 = vunpack.c.l.b16 %v945
        %v1234 = vunpack.c.l.b16 %v946
        %v1235 = vunpack.c.l.b16 %v947
        %v1236 = vunpack.c.l.b16 %v948
        %v1237 = vunpack.c.l.b16 %v949
        %v1238 = vunpack.c.l.b16 %v950
        %v1239 = vunpack.c.l.b16 %v951
        %v1240 = vunpack.c.l.b16 %v952
        %v1241 = vunpack.c.l.b16 %v953
        %v1242 = vunpack.c.l.b16 %v954
        %v1243 = vunpack.c.l.b16 %v955
        %v1244 = vunpack.c.l.b16 %v956
        %v1245 = vunpack.c.l.b16 %v957
        %v1246 = vunpack.c.l.b16 %v958
        %v1247 = vunpack.c.l.b16 %v959
        %v1248 = vunpack.c.l.b16 %v960
        %v1249 = vunpack.c.l.b16 %v961
        %v1250 = vunpack.c.l.b16 %v962
        %v1251 = vunpack.c.l.b16 %v963
        %v1252 = vunpack.c.l.b16 %v964
        %v1253 = vunpack.c.l.b16 %v965
        %v1254 = vunpack.c.l.b16 %v966
        %v1255 = vunpack.c.l.b16 %v967
        %v1256 = vunpack.c.l.b16 %v968
        %v1257 = vunpack.c.l.b16 %v969
        %v1258 = vunpack.c.l.b16 %v970
        %v1259 = vunpack.c.l.b16 %v971
        %v1260 = vunpack.c.l.b16 %v972
        %v1261 = vunpack.c.l.b16 %v973
        %v1262 = vunpack.c.l.b16 %v974
        %v1263 = vunpack.c.l.b16 %v975
        %v1264 = vunpack.c.l.b16 %v976
        %v1265 = vunpack.c.l.b16 %v977
        %v1266 = vunpack.c.l.b16 %v978
        %v1267 = vunpack.c.l.b16 %v979
        %v1268 = vunpack.c.l.b16 %v980
        %v1269 = vunpack.c.l.b16 %v981
        %v1270 = vunpack.c.l.b16 %v982
        %v1271 = vunpack.c.l.b16 %v983
        %v1272 = vunpack.c.l.b16 %v984
        %v1273 = vunpack.c.l.b16 %v985
        %v1274 = vunpack.c.l.b16 %v986
        %v1275 = vunpack.c.l.b16 %v987
        %v1276 = vunpack.c.l.b16 %v988
        %v1277 = vunpack.c.l.b16 %v989
        %v1278 = vunpack.c.l.b16 %v990
        %v1279 = vunpack.c.l.b16 %v991
        %v1280 = vunpack.c.l.b16 %v992
        %v1281 = vunpack.c.l.b16 %v993
        %v1282 = vunpack.c.l.b16 %v994
        %v1283 = vunpack.c.l.b16 %v995
        %v1284 = vunpack.c.l.b16 %v996
        %v1285 = vpack.c.b16 %v1142, %v1141
        %v1286 = vpack.c.b16 %v1144, %v1143
        %v1287 = vpack.c.b16 %v1146, %v1145
        %v1288 = vpack.c.b16 %v1148, %v1147
        %v1289 = vpack.c.b16 %v1150, %v1149
        %v1290 = vpack.c.b16 %v1152, %v1151
        %v1291 = vpack.c.b16 %v1154, %v1153
        %v1292 = vpack.c.b16 %v1156, %v1155
        %v1293 = vpack.c.b16 %v1158, %v1157
        %v1294 = vpack.c.b16 %v1160, %v1159
        %v1295 = vpack.c.b16 %v1162, %v1161
        %v1296 = vpack.c.b16 %v1164, %v1163
        %v1297 = vpack.c.b16 %v1166, %v1165
        %v1298 = vpack.c.b16 %v1168, %v1167
        %v1299 = vpack.c.b16 %v1170, %v1169
        %v1300 = vpack.c.b16 %v1172, %v1171
        %v1301 = vpack.c.b16 %v1174, %v1173
        %v1302 = vpack.c.b16 %v1176, %v1175
        %v1303 = vpack.c.b16 %v1178, %v1177
        %v1304 = vpack.c.b16 %v1180, %v1179
        %v1305 = vpack.c.b16 %v1182, %v1181
        %v1306 = vpack.c.b16 %v1184, %v1183
        %v1307 = vpack.c.b16 %v1186, %v1185
        %v1308 = vpack.c.b16 %v1188, %v1187
        %v1309 = vpack.c.b16 %v1190, %v1189
        %v1310 = vpack.c.b16 %v1192, %v1191
        %v1311 = vpack.c.b16 %v1194, %v1193
        %v1312 = vpack.c.b16 %v1196, %v1195
        %v1313 = vpack.c.b16 %v1198, %v1197
        %v1314 = vpack.c.b16 %v1200, %v1199
        %v1315 = vpack.c.b16 %v1202, %v1201
        %v1316 = vpack.c.b16 %v1204, %v1203
        %v1317 = vpack.c.b16 %v1206, %v1205
        %v1318 = vpack.c.b16 %v1208, %v1207
        %v1319 = vpack.c.b16 %v1210, %v1209
        %v1320 = vpack.c.b16 %v1212, %v1211
        %v1321 = vpack.c.b16 %v1214, %v1213
        %v1322 = vpack.c.b16 %v1216, %v1215
        %v1323 = vpack.c.b16 %v1218, %v1217
        %v1324 = vpack.c.b16 %v1220, %v1219
        %v1325 = vpack.c.b16 %v1222, %v1221
        %v1326 = vpack.c.b16 %v1224, %v1223
        %v1327 = vpack.c.b16 %v1226, %v1225
        %v1328 = vpack.c.b16 %v1228, %v1227
        %v1329 = vpack.c.b16 %v1230, %v1229
        %v1330 = vpack.c.b16 %v1232, %v1231
        %v1331 = vpack.c.b16 %v1234, %v1233
        %v1332 = vpack.c.b16 %v1236, %v1235
        %v1333 = vpack.c.b16 %v1238, %v1237
        %v1334 = vpack.c.b16 %v1240, %v1239
        %v1335 = vpack.c.b16 %v1242, %v1241
        %v1336 = vpack.c.b16 %v1244, %v1243
        %v1337 = vpack.c.b16 %v1246, %v1245
        %v1338 = vpack.c.b16 %v1248, %v1247
        %v1339 = vpack.c.b16 %v1250, %v1249
        %v1340 = vpack.c.b16 %v1252, %v1251
        %v1341 = vpack.c.b16 %v1254, %v1253
        %v1342 = vpack.c.b16 %v1256, %v1255
        %v1343 = vpack.c.b16 %v1258, %v1257
        %v1344 = vpack.c.b16 %v1260, %v1259
        %v1345 = vpack.c.b16 %v1262, %v1261
        %v1346 = vpack.c.b16 %v1264, %v1263
        %v1347 = vpack.c.b16 %v1266, %v1265
        %v1348 = vpack.c.b16 %v1268, %v1267
        %v1349 = vpack.c.b16 %v1270, %v1269
        %v1350 = vpack.c.b16 %v1272, %v1271
        %v1351 = vpack.c.b16 %v1274, %v1273
        %v1352 = vpack.c.b16 %v1276, %v1275
        %v1353 = vpack.c.b16 %v1278, %v1277
        %v1354 = vpack.c.b16 %v1280, %v1279
        %v1355 = vpack.c.b16 %v1282, %v1281
        %v1356 = vpack.c.b16 %v1284, %v1283
        %1429 = vmatpush.bf16.msra.mxu0 %v1292
        %1430 = vmatpush.bf16.msra.mxu0 %v1291
        %1431 = vmatpush.bf16.msra.mxu0 %v1290
        %1432 = vmatpush.bf16.msra.mxu0 %v1289
        %1433 = vmatpush.bf16.msra.mxu0 %v1288
        %1434 = vmatpush.bf16.msra.mxu0 %v1287
        %1435 = vmatpush.bf16.msra.mxu0 %v1286
        %1436 = vmatpush.bf16.msra.mxu0 %v1285
        %1437 = vmatmul.bf16.gmra.mxu0 %v709
        %v1438 = vpop.f32.mrf.mxu0
        %v1439 = vadd.f32 0.0, %v1438
        %v1440 = vpop.f32.mrf.mxu0
        %v1441 = vadd.f32 0.0, %v1440
        %1442 = vmatmul.bf16.gmra.mxu0 %v718
        %v1443 = vpop.f32.mrf.mxu0
        %v1444 = vadd.f32 0.0, %v1443
        %v1445 = vpop.f32.mrf.mxu0
        %v1446 = vadd.f32 0.0, %v1445
        %1447 = vmatmul.bf16.gmra.mxu0 %v727
        %v1448 = vpop.f32.mrf.mxu0
        %v1449 = vadd.f32 0.0, %v1448
        %v1450 = vpop.f32.mrf.mxu0
        %v1451 = vadd.f32 0.0, %v1450
        %1452 = vmatmul.bf16.gmra.mxu0 %v736
        %v1453 = vpop.f32.mrf.mxu0
        %v1454 = vadd.f32 0.0, %v1453
        %v1455 = vpop.f32.mrf.mxu0
        %v1456 = vadd.f32 0.0, %v1455
        %1457 = vmatmul.bf16.gmra.mxu0 %v745
        %v1458 = vpop.f32.mrf.mxu0
        %v1459 = vadd.f32 0.0, %v1458
        %v1460 = vpop.f32.mrf.mxu0
        %v1461 = vadd.f32 0.0, %v1460
        %1462 = vmatmul.bf16.gmra.mxu0 %v754
        %v1463 = vpop.f32.mrf.mxu0
        %v1464 = vadd.f32 0.0, %v1463
        %v1465 = vpop.f32.mrf.mxu0
        %v1466 = vadd.f32 0.0, %v1465
        %1467 = vmatmul.bf16.gmra.mxu0 %v763
        %v1468 = vpop.f32.mrf.mxu0
        %v1469 = vadd.f32 0.0, %v1468
        %v1470 = vpop.f32.mrf.mxu0
        %v1471 = vadd.f32 0.0, %v1470
        %1472 = vmatmul.bf16.gmra.mxu0 %v772
        %v1473 = vpop.f32.mrf.mxu0
        %v1474 = vadd.f32 0.0, %v1473
        %v1475 = vpop.f32.mrf.mxu0
        %v1476 = vadd.f32 0.0, %v1475
        %1477 = vmatmul.bf16.gmra.mxu0 %v781
        %v1478 = vpop.f32.mrf.mxu0
        %v1479 = vadd.f32 0.0, %v1478
        %v1480 = vpop.f32.mrf.mxu0
        %v1481 = vadd.f32 0.0, %v1480
        %1482 = vmatmul.bf16.gmra.mxu0 %v790
        %v1483 = vpop.f32.mrf.mxu0
        %v1484 = vadd.f32 0.0, %v1483
        %v1485 = vpop.f32.mrf.mxu0
        %v1486 = vadd.f32 0.0, %v1485
        %1487 = vmatmul.bf16.gmra.mxu0 %v799
        %v1488 = vpop.f32.mrf.mxu0
        %v1489 = vadd.f32 0.0, %v1488
        %v1490 = vpop.f32.mrf.mxu0
        %v1491 = vadd.f32 0.0, %v1490
        %1492 = vmatmul.bf16.gmra.mxu0 %v808
        %v1493 = vpop.f32.mrf.mxu0
        %v1494 = vadd.f32 0.0, %v1493
        %v1495 = vpop.f32.mrf.mxu0
        %v1496 = vadd.f32 0.0, %v1495
        %1497 = vmatmul.bf16.gmra.mxu0 %v817
        %v1498 = vpop.f32.mrf.mxu0
        %v1499 = vadd.f32 0.0, %v1498
        %v1500 = vpop.f32.mrf.mxu0
        %v1501 = vadd.f32 0.0, %v1500
        %1502 = vmatmul.bf16.gmra.mxu0 %v826
        %v1503 = vpop.f32.mrf.mxu0
        %v1504 = vadd.f32 0.0, %v1503
        %v1505 = vpop.f32.mrf.mxu0
        %v1506 = vadd.f32 0.0, %v1505
        %1507 = vmatmul.bf16.gmra.mxu0 %v835
        %v1508 = vpop.f32.mrf.mxu0
        %v1509 = vadd.f32 0.0, %v1508
        %v1510 = vpop.f32.mrf.mxu0
        %v1511 = vadd.f32 0.0, %v1510
        %1512 = vmatmul.bf16.gmra.mxu0 %v844
        %v1513 = vpop.f32.mrf.mxu0
        %v1514 = vadd.f32 0.0, %v1513
        %v1515 = vpop.f32.mrf.mxu0
        %v1516 = vadd.f32 0.0, %v1515
        %1517 = vdwg.mxu0
        %1518 = vmatpush.bf16.msra.mxu0 %v1300
        %1519 = vmatpush.bf16.msra.mxu0 %v1299
        %1520 = vmatpush.bf16.msra.mxu0 %v1298
        %1521 = vmatpush.bf16.msra.mxu0 %v1297
        %1522 = vmatpush.bf16.msra.mxu0 %v1296
        %1523 = vmatpush.bf16.msra.mxu0 %v1295
        %1524 = vmatpush.bf16.msra.mxu0 %v1294
        %1525 = vmatpush.bf16.msra.mxu0 %v1293
        %1526 = vmatmul.bf16.gmra.mxu0 %v710
        %v1527 = vpop.f32.mrf.mxu0
        %v1528 = vadd.f32 %v1439, %v1527
        %v1529 = vpop.f32.mrf.mxu0
        %v1530 = vadd.f32 %v1441, %v1529
        %1531 = vmatmul.bf16.gmra.mxu0 %v719
        %v1532 = vpop.f32.mrf.mxu0
        %v1533 = vadd.f32 %v1444, %v1532
        %v1534 = vpop.f32.mrf.mxu0
        %v1535 = vadd.f32 %v1446, %v1534
        %1536 = vmatmul.bf16.gmra.mxu0 %v728
        %v1537 = vpop.f32.mrf.mxu0
        %v1538 = vadd.f32 %v1449, %v1537
        %v1539 = vpop.f32.mrf.mxu0
        %v1540 = vadd.f32 %v1451, %v1539
        %1541 = vmatmul.bf16.gmra.mxu0 %v737
        %v1542 = vpop.f32.mrf.mxu0
        %v1543 = vadd.f32 %v1454, %v1542
        %v1544 = vpop.f32.mrf.mxu0
        %v1545 = vadd.f32 %v1456, %v1544
        %1546 = vmatmul.bf16.gmra.mxu0 %v746
        %v1547 = vpop.f32.mrf.mxu0
        %v1548 = vadd.f32 %v1459, %v1547
        %v1549 = vpop.f32.mrf.mxu0
        %v1550 = vadd.f32 %v1461, %v1549
        %1551 = vmatmul.bf16.gmra.mxu0 %v755
        %v1552 = vpop.f32.mrf.mxu0
        %v1553 = vadd.f32 %v1464, %v1552
        %v1554 = vpop.f32.mrf.mxu0
        %v1555 = vadd.f32 %v1466, %v1554
        %1556 = vmatmul.bf16.gmra.mxu0 %v764
        %v1557 = vpop.f32.mrf.mxu0
        %v1558 = vadd.f32 %v1469, %v1557
        %v1559 = vpop.f32.mrf.mxu0
        %v1560 = vadd.f32 %v1471, %v1559
        %1561 = vmatmul.bf16.gmra.mxu0 %v773
        %v1562 = vpop.f32.mrf.mxu0
        %v1563 = vadd.f32 %v1474, %v1562
        %v1564 = vpop.f32.mrf.mxu0
        %v1565 = vadd.f32 %v1476, %v1564
        %1566 = vmatmul.bf16.gmra.mxu0 %v782
        %v1567 = vpop.f32.mrf.mxu0
        %v1568 = vadd.f32 %v1479, %v1567
        %v1569 = vpop.f32.mrf.mxu0
        %v1570 = vadd.f32 %v1481, %v1569
        %1571 = vmatmul.bf16.gmra.mxu0 %v791
        %v1572 = vpop.f32.mrf.mxu0
        %v1573 = vadd.f32 %v1484, %v1572
        %v1574 = vpop.f32.mrf.mxu0
        %v1575 = vadd.f32 %v1486, %v1574
        %1576 = vmatmul.bf16.gmra.mxu0 %v800
        %v1577 = vpop.f32.mrf.mxu0
        %v1578 = vadd.f32 %v1489, %v1577
        %v1579 = vpop.f32.mrf.mxu0
        %v1580 = vadd.f32 %v1491, %v1579
        %1581 = vmatmul.bf16.gmra.mxu0 %v809
        %v1582 = vpop.f32.mrf.mxu0
        %v1583 = vadd.f32 %v1494, %v1582
        %v1584 = vpop.f32.mrf.mxu0
        %v1585 = vadd.f32 %v1496, %v1584
        %1586 = vmatmul.bf16.gmra.mxu0 %v818
        %v1587 = vpop.f32.mrf.mxu0
        %v1588 = vadd.f32 %v1499, %v1587
        %v1589 = vpop.f32.mrf.mxu0
        %v1590 = vadd.f32 %v1501, %v1589
        %1591 = vmatmul.bf16.gmra.mxu0 %v827
        %v1592 = vpop.f32.mrf.mxu0
        %v1593 = vadd.f32 %v1504, %v1592
        %v1594 = vpop.f32.mrf.mxu0
        %v1595 = vadd.f32 %v1506, %v1594
        %1596 = vmatmul.bf16.gmra.mxu0 %v836
        %v1597 = vpop.f32.mrf.mxu0
        %v1598 = vadd.f32 %v1509, %v1597
        %v1599 = vpop.f32.mrf.mxu0
        %v1600 = vadd.f32 %v1511, %v1599
        %1601 = vmatmul.bf16.gmra.mxu0 %v845
        %v1602 = vpop.f32.mrf.mxu0
        %v1603 = vadd.f32 %v1514, %v1602
        %v1604 = vpop.f32.mrf.mxu0
        %v1605 = vadd.f32 %v1516, %v1604
        %1606 = vdwg.mxu0
        %1607 = vmatpush.bf16.msra.mxu0 %v1308
        %1608 = vmatpush.bf16.msra.mxu0 %v1307
        %1609 = vmatpush.bf16.msra.mxu0 %v1306
        %1610 = vmatpush.bf16.msra.mxu0 %v1305
        %1611 = vmatpush.bf16.msra.mxu0 %v1304
        %1612 = vmatpush.bf16.msra.mxu0 %v1303
        %1613 = vmatpush.bf16.msra.mxu0 %v1302
        %1614 = vmatpush.bf16.msra.mxu0 %v1301
        %1615 = vmatmul.bf16.gmra.mxu0 %v711
        %v1616 = vpop.f32.mrf.mxu0
        %v1617 = vadd.f32 %v1528, %v1616
        %v1618 = vpop.f32.mrf.mxu0
        %v1619 = vadd.f32 %v1530, %v1618
        %1620 = vmatmul.bf16.gmra.mxu0 %v720
        %v1621 = vpop.f32.mrf.mxu0
        %v1622 = vadd.f32 %v1533, %v1621
        %v1623 = vpop.f32.mrf.mxu0
        %v1624 = vadd.f32 %v1535, %v1623
        %1625 = vmatmul.bf16.gmra.mxu0 %v729
        %v1626 = vpop.f32.mrf.mxu0
        %v1627 = vadd.f32 %v1538, %v1626
        %v1628 = vpop.f32.mrf.mxu0
        %v1629 = vadd.f32 %v1540, %v1628
        %1630 = vmatmul.bf16.gmra.mxu0 %v738
        %v1631 = vpop.f32.mrf.mxu0
        %v1632 = vadd.f32 %v1543, %v1631
        %v1633 = vpop.f32.mrf.mxu0
        %v1634 = vadd.f32 %v1545, %v1633
        %1635 = vmatmul.bf16.gmra.mxu0 %v747
        %v1636 = vpop.f32.mrf.mxu0
        %v1637 = vadd.f32 %v1548, %v1636
        %v1638 = vpop.f32.mrf.mxu0
        %v1639 = vadd.f32 %v1550, %v1638
        %1640 = vmatmul.bf16.gmra.mxu0 %v756
        %v1641 = vpop.f32.mrf.mxu0
        %v1642 = vadd.f32 %v1553, %v1641
        %v1643 = vpop.f32.mrf.mxu0
        %v1644 = vadd.f32 %v1555, %v1643
        %1645 = vmatmul.bf16.gmra.mxu0 %v765
        %v1646 = vpop.f32.mrf.mxu0
        %v1647 = vadd.f32 %v1558, %v1646
        %v1648 = vpop.f32.mrf.mxu0
        %v1649 = vadd.f32 %v1560, %v1648
        %1650 = vmatmul.bf16.gmra.mxu0 %v774
        %v1651 = vpop.f32.mrf.mxu0
        %v1652 = vadd.f32 %v1563, %v1651
        %v1653 = vpop.f32.mrf.mxu0
        %v1654 = vadd.f32 %v1565, %v1653
        %1655 = vmatmul.bf16.gmra.mxu0 %v783
        %v1656 = vpop.f32.mrf.mxu0
        %v1657 = vadd.f32 %v1568, %v1656
        %v1658 = vpop.f32.mrf.mxu0
        %v1659 = vadd.f32 %v1570, %v1658
        %1660 = vmatmul.bf16.gmra.mxu0 %v792
        %v1661 = vpop.f32.mrf.mxu0
        %v1662 = vadd.f32 %v1573, %v1661
        %v1663 = vpop.f32.mrf.mxu0
        %v1664 = vadd.f32 %v1575, %v1663
        %1665 = vmatmul.bf16.gmra.mxu0 %v801
        %v1666 = vpop.f32.mrf.mxu0
        %v1667 = vadd.f32 %v1578, %v1666
        %v1668 = vpop.f32.mrf.mxu0
        %v1669 = vadd.f32 %v1580, %v1668
        %1670 = vmatmul.bf16.gmra.mxu0 %v810
        %v1671 = vpop.f32.mrf.mxu0
        %v1672 = vadd.f32 %v1583, %v1671
        %v1673 = vpop.f32.mrf.mxu0
        %v1674 = vadd.f32 %v1585, %v1673
        %1675 = vmatmul.bf16.gmra.mxu0 %v819
        %v1676 = vpop.f32.mrf.mxu0
        %v1677 = vadd.f32 %v1588, %v1676
        %v1678 = vpop.f32.mrf.mxu0
        %v1679 = vadd.f32 %v1590, %v1678
        %1680 = vmatmul.bf16.gmra.mxu0 %v828
        %v1681 = vpop.f32.mrf.mxu0
        %v1682 = vadd.f32 %v1593, %v1681
        %v1683 = vpop.f32.mrf.mxu0
        %v1684 = vadd.f32 %v1595, %v1683
        %1685 = vmatmul.bf16.gmra.mxu0 %v837
        %v1686 = vpop.f32.mrf.mxu0
        %v1687 = vadd.f32 %v1598, %v1686
        %v1688 = vpop.f32.mrf.mxu0
        %v1689 = vadd.f32 %v1600, %v1688
        %1690 = vmatmul.bf16.gmra.mxu0 %v846
        %v1691 = vpop.f32.mrf.mxu0
        %v1692 = vadd.f32 %v1603, %v1691
        %v1693 = vpop.f32.mrf.mxu0
        %v1694 = vadd.f32 %v1605, %v1693
        %1695 = vdwg.mxu0
        %1696 = vmatpush.bf16.msra.mxu0 %v1316
        %1697 = vmatpush.bf16.msra.mxu0 %v1315
        %1698 = vmatpush.bf16.msra.mxu0 %v1314
        %1699 = vmatpush.bf16.msra.mxu0 %v1313
        %1700 = vmatpush.bf16.msra.mxu0 %v1312
        %1701 = vmatpush.bf16.msra.mxu0 %v1311
        %1702 = vmatpush.bf16.msra.mxu0 %v1310
        %1703 = vmatpush.bf16.msra.mxu0 %v1309
        %1704 = vmatmul.bf16.gmra.mxu0 %v712
        %v1705 = vpop.f32.mrf.mxu0
        %v1706 = vadd.f32 %v1617, %v1705
        %v1707 = vpop.f32.mrf.mxu0
        %v1708 = vadd.f32 %v1619, %v1707
        %1709 = vmatmul.bf16.gmra.mxu0 %v721
        %v1710 = vpop.f32.mrf.mxu0
        %v1711 = vadd.f32 %v1622, %v1710
        %v1712 = vpop.f32.mrf.mxu0
        %v1713 = vadd.f32 %v1624, %v1712
        %1714 = vmatmul.bf16.gmra.mxu0 %v730
        %v1715 = vpop.f32.mrf.mxu0
        %v1716 = vadd.f32 %v1627, %v1715
        %v1717 = vpop.f32.mrf.mxu0
        %v1718 = vadd.f32 %v1629, %v1717
        %1719 = vmatmul.bf16.gmra.mxu0 %v739
        %v1720 = vpop.f32.mrf.mxu0
        %v1721 = vadd.f32 %v1632, %v1720
        %v1722 = vpop.f32.mrf.mxu0
        %v1723 = vadd.f32 %v1634, %v1722
        %1724 = vmatmul.bf16.gmra.mxu0 %v748
        %v1725 = vpop.f32.mrf.mxu0
        %v1726 = vadd.f32 %v1637, %v1725
        %v1727 = vpop.f32.mrf.mxu0
        %v1728 = vadd.f32 %v1639, %v1727
        %1729 = vmatmul.bf16.gmra.mxu0 %v757
        %v1730 = vpop.f32.mrf.mxu0
        %v1731 = vadd.f32 %v1642, %v1730
        %v1732 = vpop.f32.mrf.mxu0
        %v1733 = vadd.f32 %v1644, %v1732
        %1734 = vmatmul.bf16.gmra.mxu0 %v766
        %v1735 = vpop.f32.mrf.mxu0
        %v1736 = vadd.f32 %v1647, %v1735
        %v1737 = vpop.f32.mrf.mxu0
        %v1738 = vadd.f32 %v1649, %v1737
        %1739 = vmatmul.bf16.gmra.mxu0 %v775
        %v1740 = vpop.f32.mrf.mxu0
        %v1741 = vadd.f32 %v1652, %v1740
        %v1742 = vpop.f32.mrf.mxu0
        %v1743 = vadd.f32 %v1654, %v1742
        %1744 = vmatmul.bf16.gmra.mxu0 %v784
        %v1745 = vpop.f32.mrf.mxu0
        %v1746 = vadd.f32 %v1657, %v1745
        %v1747 = vpop.f32.mrf.mxu0
        %v1748 = vadd.f32 %v1659, %v1747
        %1749 = vmatmul.bf16.gmra.mxu0 %v793
        %v1750 = vpop.f32.mrf.mxu0
        %v1751 = vadd.f32 %v1662, %v1750
        %v1752 = vpop.f32.mrf.mxu0
        %v1753 = vadd.f32 %v1664, %v1752
        %1754 = vmatmul.bf16.gmra.mxu0 %v802
        %v1755 = vpop.f32.mrf.mxu0
        %v1756 = vadd.f32 %v1667, %v1755
        %v1757 = vpop.f32.mrf.mxu0
        %v1758 = vadd.f32 %v1669, %v1757
        %1759 = vmatmul.bf16.gmra.mxu0 %v811
        %v1760 = vpop.f32.mrf.mxu0
        %v1761 = vadd.f32 %v1672, %v1760
        %v1762 = vpop.f32.mrf.mxu0
        %v1763 = vadd.f32 %v1674, %v1762
        %1764 = vmatmul.bf16.gmra.mxu0 %v820
        %v1765 = vpop.f32.mrf.mxu0
        %v1766 = vadd.f32 %v1677, %v1765
        %v1767 = vpop.f32.mrf.mxu0
        %v1768 = vadd.f32 %v1679, %v1767
        %1769 = vmatmul.bf16.gmra.mxu0 %v829
        %v1770 = vpop.f32.mrf.mxu0
        %v1771 = vadd.f32 %v1682, %v1770
        %v1772 = vpop.f32.mrf.mxu0
        %v1773 = vadd.f32 %v1684, %v1772
        %1774 = vmatmul.bf16.gmra.mxu0 %v838
        %v1775 = vpop.f32.mrf.mxu0
        %v1776 = vadd.f32 %v1687, %v1775
        %v1777 = vpop.f32.mrf.mxu0
        %v1778 = vadd.f32 %v1689, %v1777
        %1779 = vmatmul.bf16.gmra.mxu0 %v847
        %v1780 = vpop.f32.mrf.mxu0
        %v1781 = vadd.f32 %v1692, %v1780
        %v1782 = vpop.f32.mrf.mxu0
        %v1783 = vadd.f32 %v1694, %v1782
        %1784 = vdwg.mxu0
        %1785 = vmatpush.bf16.msra.mxu0 %v1324
        %1786 = vmatpush.bf16.msra.mxu0 %v1323
        %1787 = vmatpush.bf16.msra.mxu0 %v1322
        %1788 = vmatpush.bf16.msra.mxu0 %v1321
        %1789 = vmatpush.bf16.msra.mxu0 %v1320
        %1790 = vmatpush.bf16.msra.mxu0 %v1319
        %1791 = vmatpush.bf16.msra.mxu0 %v1318
        %1792 = vmatpush.bf16.msra.mxu0 %v1317
        %1793 = vmatmul.bf16.gmra.mxu0 %v713
        %v1794 = vpop.f32.mrf.mxu0
        %v1795 = vadd.f32 %v1706, %v1794
        %v1796 = vpop.f32.mrf.mxu0
        %v1797 = vadd.f32 %v1708, %v1796
        %1798 = vmatmul.bf16.gmra.mxu0 %v722
        %v1799 = vpop.f32.mrf.mxu0
        %v1800 = vadd.f32 %v1711, %v1799
        %v1801 = vpop.f32.mrf.mxu0
        %v1802 = vadd.f32 %v1713, %v1801
        %1803 = vmatmul.bf16.gmra.mxu0 %v731
        %v1804 = vpop.f32.mrf.mxu0
        %v1805 = vadd.f32 %v1716, %v1804
        %v1806 = vpop.f32.mrf.mxu0
        %v1807 = vadd.f32 %v1718, %v1806
        %1808 = vmatmul.bf16.gmra.mxu0 %v740
        %v1809 = vpop.f32.mrf.mxu0
        %v1810 = vadd.f32 %v1721, %v1809
        %v1811 = vpop.f32.mrf.mxu0
        %v1812 = vadd.f32 %v1723, %v1811
        %1813 = vmatmul.bf16.gmra.mxu0 %v749
        %v1814 = vpop.f32.mrf.mxu0
        %v1815 = vadd.f32 %v1726, %v1814
        %v1816 = vpop.f32.mrf.mxu0
        %v1817 = vadd.f32 %v1728, %v1816
        %1818 = vmatmul.bf16.gmra.mxu0 %v758
        %v1819 = vpop.f32.mrf.mxu0
        %v1820 = vadd.f32 %v1731, %v1819
        %v1821 = vpop.f32.mrf.mxu0
        %v1822 = vadd.f32 %v1733, %v1821
        %1823 = vmatmul.bf16.gmra.mxu0 %v767
        %v1824 = vpop.f32.mrf.mxu0
        %v1825 = vadd.f32 %v1736, %v1824
        %v1826 = vpop.f32.mrf.mxu0
        %v1827 = vadd.f32 %v1738, %v1826
        %1828 = vmatmul.bf16.gmra.mxu0 %v776
        %v1829 = vpop.f32.mrf.mxu0
        %v1830 = vadd.f32 %v1741, %v1829
        %v1831 = vpop.f32.mrf.mxu0
        %v1832 = vadd.f32 %v1743, %v1831
        %1833 = vmatmul.bf16.gmra.mxu0 %v785
        %v1834 = vpop.f32.mrf.mxu0
        %v1835 = vadd.f32 %v1746, %v1834
        %v1836 = vpop.f32.mrf.mxu0
        %v1837 = vadd.f32 %v1748, %v1836
        %1838 = vmatmul.bf16.gmra.mxu0 %v794
        %v1839 = vpop.f32.mrf.mxu0
        %v1840 = vadd.f32 %v1751, %v1839
        %v1841 = vpop.f32.mrf.mxu0
        %v1842 = vadd.f32 %v1753, %v1841
        %1843 = vmatmul.bf16.gmra.mxu0 %v803
        %v1844 = vpop.f32.mrf.mxu0
        %v1845 = vadd.f32 %v1756, %v1844
        %v1846 = vpop.f32.mrf.mxu0
        %v1847 = vadd.f32 %v1758, %v1846
        %1848 = vmatmul.bf16.gmra.mxu0 %v812
        %v1849 = vpop.f32.mrf.mxu0
        %v1850 = vadd.f32 %v1761, %v1849
        %v1851 = vpop.f32.mrf.mxu0
        %v1852 = vadd.f32 %v1763, %v1851
        %1853 = vmatmul.bf16.gmra.mxu0 %v821
        %v1854 = vpop.f32.mrf.mxu0
        %v1855 = vadd.f32 %v1766, %v1854
        %v1856 = vpop.f32.mrf.mxu0
        %v1857 = vadd.f32 %v1768, %v1856
        %1858 = vmatmul.bf16.gmra.mxu0 %v830
        %v1859 = vpop.f32.mrf.mxu0
        %v1860 = vadd.f32 %v1771, %v1859
        %v1861 = vpop.f32.mrf.mxu0
        %v1862 = vadd.f32 %v1773, %v1861
        %1863 = vmatmul.bf16.gmra.mxu0 %v839
        %v1864 = vpop.f32.mrf.mxu0
        %v1865 = vadd.f32 %v1776, %v1864
        %v1866 = vpop.f32.mrf.mxu0
        %v1867 = vadd.f32 %v1778, %v1866
        %1868 = vmatmul.bf16.gmra.mxu0 %v848
        %v1869 = vpop.f32.mrf.mxu0
        %v1870 = vadd.f32 %v1781, %v1869
        %v1871 = vpop.f32.mrf.mxu0
        %v1872 = vadd.f32 %v1783, %v1871
        %1873 = vdwg.mxu0
        %1874 = vmatpush.bf16.msra.mxu0 %v1332
        %1875 = vmatpush.bf16.msra.mxu0 %v1331
        %1876 = vmatpush.bf16.msra.mxu0 %v1330
        %1877 = vmatpush.bf16.msra.mxu0 %v1329
        %1878 = vmatpush.bf16.msra.mxu0 %v1328
        %1879 = vmatpush.bf16.msra.mxu0 %v1327
        %1880 = vmatpush.bf16.msra.mxu0 %v1326
        %1881 = vmatpush.bf16.msra.mxu0 %v1325
        %1882 = vmatmul.bf16.gmra.mxu0 %v714
        %v1883 = vpop.f32.mrf.mxu0
        %v1884 = vadd.f32 %v1795, %v1883
        %v1885 = vpop.f32.mrf.mxu0
        %v1886 = vadd.f32 %v1797, %v1885
        %1887 = vmatmul.bf16.gmra.mxu0 %v723
        %v1888 = vpop.f32.mrf.mxu0
        %v1889 = vadd.f32 %v1800, %v1888
        %v1890 = vpop.f32.mrf.mxu0
        %v1891 = vadd.f32 %v1802, %v1890
        %1892 = vmatmul.bf16.gmra.mxu0 %v732
        %v1893 = vpop.f32.mrf.mxu0
        %v1894 = vadd.f32 %v1805, %v1893
        %v1895 = vpop.f32.mrf.mxu0
        %v1896 = vadd.f32 %v1807, %v1895
        %1897 = vmatmul.bf16.gmra.mxu0 %v741
        %v1898 = vpop.f32.mrf.mxu0
        %v1899 = vadd.f32 %v1810, %v1898
        %v1900 = vpop.f32.mrf.mxu0
        %v1901 = vadd.f32 %v1812, %v1900
        %1902 = vmatmul.bf16.gmra.mxu0 %v750
        %v1903 = vpop.f32.mrf.mxu0
        %v1904 = vadd.f32 %v1815, %v1903
        %v1905 = vpop.f32.mrf.mxu0
        %v1906 = vadd.f32 %v1817, %v1905
        %1907 = vmatmul.bf16.gmra.mxu0 %v759
        %v1908 = vpop.f32.mrf.mxu0
        %v1909 = vadd.f32 %v1820, %v1908
        %v1910 = vpop.f32.mrf.mxu0
        %v1911 = vadd.f32 %v1822, %v1910
        %1912 = vmatmul.bf16.gmra.mxu0 %v768
        %v1913 = vpop.f32.mrf.mxu0
        %v1914 = vadd.f32 %v1825, %v1913
        %v1915 = vpop.f32.mrf.mxu0
        %v1916 = vadd.f32 %v1827, %v1915
        %1917 = vmatmul.bf16.gmra.mxu0 %v777
        %v1918 = vpop.f32.mrf.mxu0
        %v1919 = vadd.f32 %v1830, %v1918
        %v1920 = vpop.f32.mrf.mxu0
        %v1921 = vadd.f32 %v1832, %v1920
        %1922 = vmatmul.bf16.gmra.mxu0 %v786
        %v1923 = vpop.f32.mrf.mxu0
        %v1924 = vadd.f32 %v1835, %v1923
        %v1925 = vpop.f32.mrf.mxu0
        %v1926 = vadd.f32 %v1837, %v1925
        %1927 = vmatmul.bf16.gmra.mxu0 %v795
        %v1928 = vpop.f32.mrf.mxu0
        %v1929 = vadd.f32 %v1840, %v1928
        %v1930 = vpop.f32.mrf.mxu0
        %v1931 = vadd.f32 %v1842, %v1930
        %1932 = vmatmul.bf16.gmra.mxu0 %v804
        %v1933 = vpop.f32.mrf.mxu0
        %v1934 = vadd.f32 %v1845, %v1933
        %v1935 = vpop.f32.mrf.mxu0
        %v1936 = vadd.f32 %v1847, %v1935
        %1937 = vmatmul.bf16.gmra.mxu0 %v813
        %v1938 = vpop.f32.mrf.mxu0
        %v1939 = vadd.f32 %v1850, %v1938
        %v1940 = vpop.f32.mrf.mxu0
        %v1941 = vadd.f32 %v1852, %v1940
        %1942 = vmatmul.bf16.gmra.mxu0 %v822
        %v1943 = vpop.f32.mrf.mxu0
        %v1944 = vadd.f32 %v1855, %v1943
        %v1945 = vpop.f32.mrf.mxu0
        %v1946 = vadd.f32 %v1857, %v1945
        %1947 = vmatmul.bf16.gmra.mxu0 %v831
        %v1948 = vpop.f32.mrf.mxu0
        %v1949 = vadd.f32 %v1860, %v1948
        %v1950 = vpop.f32.mrf.mxu0
        %v1951 = vadd.f32 %v1862, %v1950
        %1952 = vmatmul.bf16.gmra.mxu0 %v840
        %v1953 = vpop.f32.mrf.mxu0
        %v1954 = vadd.f32 %v1865, %v1953
        %v1955 = vpop.f32.mrf.mxu0
        %v1956 = vadd.f32 %v1867, %v1955
        %1957 = vmatmul.bf16.gmra.mxu0 %v849
        %v1958 = vpop.f32.mrf.mxu0
        %v1959 = vadd.f32 %v1870, %v1958
        %v1960 = vpop.f32.mrf.mxu0
        %v1961 = vadd.f32 %v1872, %v1960
        %1962 = vdwg.mxu0
        %1963 = vmatpush.bf16.msra.mxu0 %v1340
        %1964 = vmatpush.bf16.msra.mxu0 %v1339
        %1965 = vmatpush.bf16.msra.mxu0 %v1338
        %1966 = vmatpush.bf16.msra.mxu0 %v1337
        %1967 = vmatpush.bf16.msra.mxu0 %v1336
        %1968 = vmatpush.bf16.msra.mxu0 %v1335
        %1969 = vmatpush.bf16.msra.mxu0 %v1334
        %1970 = vmatpush.bf16.msra.mxu0 %v1333
        %1971 = vmatmul.bf16.gmra.mxu0 %v715
        %v1972 = vpop.f32.mrf.mxu0
        %v1973 = vadd.f32 %v1884, %v1972
        %v1974 = vpop.f32.mrf.mxu0
        %v1975 = vadd.f32 %v1886, %v1974
        %1976 = vmatmul.bf16.gmra.mxu0 %v724
        %v1977 = vpop.f32.mrf.mxu0
        %v1978 = vadd.f32 %v1889, %v1977
        %v1979 = vpop.f32.mrf.mxu0
        %v1980 = vadd.f32 %v1891, %v1979
        %1981 = vmatmul.bf16.gmra.mxu0 %v733
        %v1982 = vpop.f32.mrf.mxu0
        %v1983 = vadd.f32 %v1894, %v1982
        %v1984 = vpop.f32.mrf.mxu0
        %v1985 = vadd.f32 %v1896, %v1984
        %1986 = vmatmul.bf16.gmra.mxu0 %v742
        %v1987 = vpop.f32.mrf.mxu0
        %v1988 = vadd.f32 %v1899, %v1987
        %v1989 = vpop.f32.mrf.mxu0
        %v1990 = vadd.f32 %v1901, %v1989
        %1991 = vmatmul.bf16.gmra.mxu0 %v751
        %v1992 = vpop.f32.mrf.mxu0
        %v1993 = vadd.f32 %v1904, %v1992
        %v1994 = vpop.f32.mrf.mxu0
        %v1995 = vadd.f32 %v1906, %v1994
        %1996 = vmatmul.bf16.gmra.mxu0 %v760
        %v1997 = vpop.f32.mrf.mxu0
        %v1998 = vadd.f32 %v1909, %v1997
        %v1999 = vpop.f32.mrf.mxu0
        %v2000 = vadd.f32 %v1911, %v1999
        %2001 = vmatmul.bf16.gmra.mxu0 %v769
        %v2002 = vpop.f32.mrf.mxu0
        %v2003 = vadd.f32 %v1914, %v2002
        %v2004 = vpop.f32.mrf.mxu0
        %v2005 = vadd.f32 %v1916, %v2004
        %2006 = vmatmul.bf16.gmra.mxu0 %v778
        %v2007 = vpop.f32.mrf.mxu0
        %v2008 = vadd.f32 %v1919, %v2007
        %v2009 = vpop.f32.mrf.mxu0
        %v2010 = vadd.f32 %v1921, %v2009
        %2011 = vmatmul.bf16.gmra.mxu0 %v787
        %v2012 = vpop.f32.mrf.mxu0
        %v2013 = vadd.f32 %v1924, %v2012
        %v2014 = vpop.f32.mrf.mxu0
        %v2015 = vadd.f32 %v1926, %v2014
        %2016 = vmatmul.bf16.gmra.mxu0 %v796
        %v2017 = vpop.f32.mrf.mxu0
        %v2018 = vadd.f32 %v1929, %v2017
        %v2019 = vpop.f32.mrf.mxu0
        %v2020 = vadd.f32 %v1931, %v2019
        %2021 = vmatmul.bf16.gmra.mxu0 %v805
        %v2022 = vpop.f32.mrf.mxu0
        %v2023 = vadd.f32 %v1934, %v2022
        %v2024 = vpop.f32.mrf.mxu0
        %v2025 = vadd.f32 %v1936, %v2024
        %2026 = vmatmul.bf16.gmra.mxu0 %v814
        %v2027 = vpop.f32.mrf.mxu0
        %v2028 = vadd.f32 %v1939, %v2027
        %v2029 = vpop.f32.mrf.mxu0
        %v2030 = vadd.f32 %v1941, %v2029
        %2031 = vmatmul.bf16.gmra.mxu0 %v823
        %v2032 = vpop.f32.mrf.mxu0
        %v2033 = vadd.f32 %v1944, %v2032
        %v2034 = vpop.f32.mrf.mxu0
        %v2035 = vadd.f32 %v1946, %v2034
        %2036 = vmatmul.bf16.gmra.mxu0 %v832
        %v2037 = vpop.f32.mrf.mxu0
        %v2038 = vadd.f32 %v1949, %v2037
        %v2039 = vpop.f32.mrf.mxu0
        %v2040 = vadd.f32 %v1951, %v2039
        %2041 = vmatmul.bf16.gmra.mxu0 %v841
        %v2042 = vpop.f32.mrf.mxu0
        %v2043 = vadd.f32 %v1954, %v2042
        %v2044 = vpop.f32.mrf.mxu0
        %v2045 = vadd.f32 %v1956, %v2044
        %2046 = vmatmul.bf16.gmra.mxu0 %v850
        %v2047 = vpop.f32.mrf.mxu0
        %v2048 = vadd.f32 %v1959, %v2047
        %v2049 = vpop.f32.mrf.mxu0
        %v2050 = vadd.f32 %v1961, %v2049
        %2051 = vdwg.mxu0
        %2052 = vmatpush.bf16.msra.mxu0 %v1348
        %2053 = vmatpush.bf16.msra.mxu0 %v1347
        %2054 = vmatpush.bf16.msra.mxu0 %v1346
        %2055 = vmatpush.bf16.msra.mxu0 %v1345
        %2056 = vmatpush.bf16.msra.mxu0 %v1344
        %2057 = vmatpush.bf16.msra.mxu0 %v1343
        %2058 = vmatpush.bf16.msra.mxu0 %v1342
        %2059 = vmatpush.bf16.msra.mxu0 %v1341
        %2060 = vmatmul.bf16.gmra.mxu0 %v716
        %v2061 = vpop.f32.mrf.mxu0
        %v2062 = vadd.f32 %v1973, %v2061
        %v2063 = vpop.f32.mrf.mxu0
        %v2064 = vadd.f32 %v1975, %v2063
        %2065 = vmatmul.bf16.gmra.mxu0 %v725
        %v2066 = vpop.f32.mrf.mxu0
        %v2067 = vadd.f32 %v1978, %v2066
        %v2068 = vpop.f32.mrf.mxu0
        %v2069 = vadd.f32 %v1980, %v2068
        %2070 = vmatmul.bf16.gmra.mxu0 %v734
        %v2071 = vpop.f32.mrf.mxu0
        %v2072 = vadd.f32 %v1983, %v2071
        %v2073 = vpop.f32.mrf.mxu0
        %v2074 = vadd.f32 %v1985, %v2073
        %2075 = vmatmul.bf16.gmra.mxu0 %v743
        %v2076 = vpop.f32.mrf.mxu0
        %v2077 = vadd.f32 %v1988, %v2076
        %v2078 = vpop.f32.mrf.mxu0
        %v2079 = vadd.f32 %v1990, %v2078
        %2080 = vmatmul.bf16.gmra.mxu0 %v752
        %v2081 = vpop.f32.mrf.mxu0
        %v2082 = vadd.f32 %v1993, %v2081
        %v2083 = vpop.f32.mrf.mxu0
        %v2084 = vadd.f32 %v1995, %v2083
        %2085 = vmatmul.bf16.gmra.mxu0 %v761
        %v2086 = vpop.f32.mrf.mxu0
        %v2087 = vadd.f32 %v1998, %v2086
        %v2088 = vpop.f32.mrf.mxu0
        %v2089 = vadd.f32 %v2000, %v2088
        %2090 = vmatmul.bf16.gmra.mxu0 %v770
        %v2091 = vpop.f32.mrf.mxu0
        %v2092 = vadd.f32 %v2003, %v2091
        %v2093 = vpop.f32.mrf.mxu0
        %v2094 = vadd.f32 %v2005, %v2093
        %2095 = vmatmul.bf16.gmra.mxu0 %v779
        %v2096 = vpop.f32.mrf.mxu0
        %v2097 = vadd.f32 %v2008, %v2096
        %v2098 = vpop.f32.mrf.mxu0
        %v2099 = vadd.f32 %v2010, %v2098
        %2100 = vmatmul.bf16.gmra.mxu0 %v788
        %v2101 = vpop.f32.mrf.mxu0
        %v2102 = vadd.f32 %v2013, %v2101
        %v2103 = vpop.f32.mrf.mxu0
        %v2104 = vadd.f32 %v2015, %v2103
        %2105 = vmatmul.bf16.gmra.mxu0 %v797
        %v2106 = vpop.f32.mrf.mxu0
        %v2107 = vadd.f32 %v2018, %v2106
        %v2108 = vpop.f32.mrf.mxu0
        %v2109 = vadd.f32 %v2020, %v2108
        %2110 = vmatmul.bf16.gmra.mxu0 %v806
        %v2111 = vpop.f32.mrf.mxu0
        %v2112 = vadd.f32 %v2023, %v2111
        %v2113 = vpop.f32.mrf.mxu0
        %v2114 = vadd.f32 %v2025, %v2113
        %2115 = vmatmul.bf16.gmra.mxu0 %v815
        %v2116 = vpop.f32.mrf.mxu0
        %v2117 = vadd.f32 %v2028, %v2116
        %v2118 = vpop.f32.mrf.mxu0
        %v2119 = vadd.f32 %v2030, %v2118
        %2120 = vmatmul.bf16.gmra.mxu0 %v824
        %v2121 = vpop.f32.mrf.mxu0
        %v2122 = vadd.f32 %v2033, %v2121
        %v2123 = vpop.f32.mrf.mxu0
        %v2124 = vadd.f32 %v2035, %v2123
        %2125 = vmatmul.bf16.gmra.mxu0 %v833
        %v2126 = vpop.f32.mrf.mxu0
        %v2127 = vadd.f32 %v2038, %v2126
        %v2128 = vpop.f32.mrf.mxu0
        %v2129 = vadd.f32 %v2040, %v2128
        %2130 = vmatmul.bf16.gmra.mxu0 %v842
        %v2131 = vpop.f32.mrf.mxu0
        %v2132 = vadd.f32 %v2043, %v2131
        %v2133 = vpop.f32.mrf.mxu0
        %v2134 = vadd.f32 %v2045, %v2133
        %2135 = vmatmul.bf16.gmra.mxu0 %v851
        %v2136 = vpop.f32.mrf.mxu0
        %v2137 = vadd.f32 %v2048, %v2136
        %v2138 = vpop.f32.mrf.mxu0
        %v2139 = vadd.f32 %v2050, %v2138
        %2140 = vdwg.mxu0
        %2141 = vmatpush.bf16.msra.mxu0 %v1356
        %2142 = vmatpush.bf16.msra.mxu0 %v1355
        %2143 = vmatpush.bf16.msra.mxu0 %v1354
        %2144 = vmatpush.bf16.msra.mxu0 %v1353
        %2145 = vmatpush.bf16.msra.mxu0 %v1352
        %2146 = vmatpush.bf16.msra.mxu0 %v1351
        %2147 = vmatpush.bf16.msra.mxu0 %v1350
        %2148 = vmatpush.bf16.msra.mxu0 %v1349
        %2149 = vmatmul.bf16.gmra.mxu0 %v717
        %v2150 = vpop.f32.mrf.mxu0
        %v2151 = vadd.f32 %v2062, %v2150
        %v2152 = vpop.f32.mrf.mxu0
        %v2153 = vadd.f32 %v2064, %v2152
        %2154 = vmatmul.bf16.gmra.mxu0 %v726
        %v2155 = vpop.f32.mrf.mxu0
        %v2156 = vadd.f32 %v2067, %v2155
        %v2157 = vpop.f32.mrf.mxu0
        %v2158 = vadd.f32 %v2069, %v2157
        %2159 = vmatmul.bf16.gmra.mxu0 %v735
        %v2160 = vpop.f32.mrf.mxu0
        %v2161 = vadd.f32 %v2072, %v2160
        %v2162 = vpop.f32.mrf.mxu0
        %v2163 = vadd.f32 %v2074, %v2162
        %2164 = vmatmul.bf16.gmra.mxu0 %v744
        %v2165 = vpop.f32.mrf.mxu0
        %v2166 = vadd.f32 %v2077, %v2165
        %v2167 = vpop.f32.mrf.mxu0
        %v2168 = vadd.f32 %v2079, %v2167
        %2169 = vmatmul.bf16.gmra.mxu0 %v753
        %v2170 = vpop.f32.mrf.mxu0
        %v2171 = vadd.f32 %v2082, %v2170
        %v2172 = vpop.f32.mrf.mxu0
        %v2173 = vadd.f32 %v2084, %v2172
        %2174 = vmatmul.bf16.gmra.mxu0 %v762
        %v2175 = vpop.f32.mrf.mxu0
        %v2176 = vadd.f32 %v2087, %v2175
        %v2177 = vpop.f32.mrf.mxu0
        %v2178 = vadd.f32 %v2089, %v2177
        %2179 = vmatmul.bf16.gmra.mxu0 %v771
        %v2180 = vpop.f32.mrf.mxu0
        %v2181 = vadd.f32 %v2092, %v2180
        %v2182 = vpop.f32.mrf.mxu0
        %v2183 = vadd.f32 %v2094, %v2182
        %2184 = vmatmul.bf16.gmra.mxu0 %v780
        %v2185 = vpop.f32.mrf.mxu0
        %v2186 = vadd.f32 %v2097, %v2185
        %v2187 = vpop.f32.mrf.mxu0
        %v2188 = vadd.f32 %v2099, %v2187
        %2189 = vmatmul.bf16.gmra.mxu0 %v789
        %v2190 = vpop.f32.mrf.mxu0
        %v2191 = vadd.f32 %v2102, %v2190
        %v2192 = vpop.f32.mrf.mxu0
        %v2193 = vadd.f32 %v2104, %v2192
        %2194 = vmatmul.bf16.gmra.mxu0 %v798
        %v2195 = vpop.f32.mrf.mxu0
        %v2196 = vadd.f32 %v2107, %v2195
        %v2197 = vpop.f32.mrf.mxu0
        %v2198 = vadd.f32 %v2109, %v2197
        %2199 = vmatmul.bf16.gmra.mxu0 %v807
        %v2200 = vpop.f32.mrf.mxu0
        %v2201 = vadd.f32 %v2112, %v2200
        %v2202 = vpop.f32.mrf.mxu0
        %v2203 = vadd.f32 %v2114, %v2202
        %2204 = vmatmul.bf16.gmra.mxu0 %v816
        %v2205 = vpop.f32.mrf.mxu0
        %v2206 = vadd.f32 %v2117, %v2205
        %v2207 = vpop.f32.mrf.mxu0
        %v2208 = vadd.f32 %v2119, %v2207
        %2209 = vmatmul.bf16.gmra.mxu0 %v825
        %v2210 = vpop.f32.mrf.mxu0
        %v2211 = vadd.f32 %v2122, %v2210
        %v2212 = vpop.f32.mrf.mxu0
        %v2213 = vadd.f32 %v2124, %v2212
        %2214 = vmatmul.bf16.gmra.mxu0 %v834
        %v2215 = vpop.f32.mrf.mxu0
        %v2216 = vadd.f32 %v2127, %v2215
        %v2217 = vpop.f32.mrf.mxu0
        %v2218 = vadd.f32 %v2129, %v2217
        %2219 = vmatmul.bf16.gmra.mxu0 %v843
        %v2220 = vpop.f32.mrf.mxu0
        %v2221 = vadd.f32 %v2132, %v2220
        %v2222 = vpop.f32.mrf.mxu0
        %v2223 = vadd.f32 %v2134, %v2222
        %2224 = vmatmul.bf16.gmra.mxu0 %v852
        %v2225 = vpop.f32.mrf.mxu0
        %v2226 = vadd.f32 %v2137, %v2225
        %v2227 = vpop.f32.mrf.mxu0
        %v2228 = vadd.f32 %v2139, %v2227
        %2229 = vdwg.mxu0
        %v2230 = vld [vmem:[%s2] sm:$0x3]
        %v2231 = vperm.slane %v2230, 0
        %v2232 = vmul.f32 %v2151, %v2231
        %v2233 = vmul.f32 %v2153, %v2231
        %v2234 = vmul.f32 %v2156, %v2231
        %v2235 = vmul.f32 %v2158, %v2231
        %v2236 = vmul.f32 %v2161, %v2231
        %v2237 = vmul.f32 %v2163, %v2231
        %v2238 = vmul.f32 %v2166, %v2231
        %v2239 = vmul.f32 %v2168, %v2231
        %v2240 = vmul.f32 %v2171, %v2231
        %v2241 = vmul.f32 %v2173, %v2231
        %v2242 = vmul.f32 %v2176, %v2231
        %v2243 = vmul.f32 %v2178, %v2231
        %v2244 = vmul.f32 %v2181, %v2231
        %v2245 = vmul.f32 %v2183, %v2231
        %v2246 = vmul.f32 %v2186, %v2231
        %v2247 = vmul.f32 %v2188, %v2231
        %v2248 = vmul.f32 %v2191, %v2231
        %v2249 = vmul.f32 %v2193, %v2231
        %v2250 = vmul.f32 %v2196, %v2231
        %v2251 = vmul.f32 %v2198, %v2231
        %v2252 = vmul.f32 %v2201, %v2231
        %v2253 = vmul.f32 %v2203, %v2231
        %v2254 = vmul.f32 %v2206, %v2231
        %v2255 = vmul.f32 %v2208, %v2231
        %v2256 = vmul.f32 %v2211, %v2231
        %v2257 = vmul.f32 %v2213, %v2231
        %v2258 = vmul.f32 %v2216, %v2231
        %v2259 = vmul.f32 %v2218, %v2231
        %v2260 = vmul.f32 %v2221, %v2231
        %v2261 = vmul.f32 %v2223, %v2231
        %v2262 = vmul.f32 %v2226, %v2231
        %v2263 = vmul.f32 %v2228, %v2231
        %v2264 = vperm.slane %v2230, 1
        %v2265 = vadd.f32 %v2232, %v2264
        %v2266 = vadd.f32 %v2233, %v2264
        %v2267 = vadd.f32 %v2234, %v2264
        %v2268 = vadd.f32 %v2235, %v2264
        %v2269 = vadd.f32 %v2236, %v2264
        %v2270 = vadd.f32 %v2237, %v2264
        %v2271 = vadd.f32 %v2238, %v2264
        %v2272 = vadd.f32 %v2239, %v2264
        %v2273 = vadd.f32 %v2240, %v2264
        %v2274 = vadd.f32 %v2241, %v2264
        %v2275 = vadd.f32 %v2242, %v2264
        %v2276 = vadd.f32 %v2243, %v2264
        %v2277 = vadd.f32 %v2244, %v2264
        %v2278 = vadd.f32 %v2245, %v2264
        %v2279 = vadd.f32 %v2246, %v2264
        %v2280 = vadd.f32 %v2247, %v2264
        %v2281 = vadd.f32 %v2248, %v2264
        %v2282 = vadd.f32 %v2249, %v2264
        %v2283 = vadd.f32 %v2250, %v2264
        %v2284 = vadd.f32 %v2251, %v2264
        %v2285 = vadd.f32 %v2252, %v2264
        %v2286 = vadd.f32 %v2253, %v2264
        %v2287 = vadd.f32 %v2254, %v2264
        %v2288 = vadd.f32 %v2255, %v2264
        %v2289 = vadd.f32 %v2256, %v2264
        %v2290 = vadd.f32 %v2257, %v2264
        %v2291 = vadd.f32 %v2258, %v2264
        %v2292 = vadd.f32 %v2259, %v2264
        %v2293 = vadd.f32 %v2260, %v2264
        %v2294 = vadd.f32 %v2261, %v2264
        %v2295 = vadd.f32 %v2262, %v2264
        %v2296 = vadd.f32 %v2263, %v2264
        %v2297 = vmax.f32 %v2265, 0.0
        %v2298 = vmax.f32 %v2266, 0.0
        %v2299 = vmax.f32 %v2267, 0.0
        %v2300 = vmax.f32 %v2268, 0.0
        %v2301 = vmax.f32 %v2269, 0.0
        %v2302 = vmax.f32 %v2270, 0.0
        %v2303 = vmax.f32 %v2271, 0.0
        %v2304 = vmax.f32 %v2272, 0.0
        %v2305 = vmax.f32 %v2273, 0.0
        %v2306 = vmax.f32 %v2274, 0.0
        %v2307 = vmax.f32 %v2275, 0.0
        %v2308 = vmax.f32 %v2276, 0.0
        %v2309 = vmax.f32 %v2277, 0.0
        %v2310 = vmax.f32 %v2278, 0.0
        %v2311 = vmax.f32 %v2279, 0.0
        %v2312 = vmax.f32 %v2280, 0.0
        %v2313 = vmax.f32 %v2281, 0.0
        %v2314 = vmax.f32 %v2282, 0.0
        %v2315 = vmax.f32 %v2283, 0.0
        %v2316 = vmax.f32 %v2284, 0.0
        %v2317 = vmax.f32 %v2285, 0.0
        %v2318 = vmax.f32 %v2286, 0.0
        %v2319 = vmax.f32 %v2287, 0.0
        %v2320 = vmax.f32 %v2288, 0.0
        %v2321 = vmax.f32 %v2289, 0.0
        %v2322 = vmax.f32 %v2290, 0.0
        %v2323 = vmax.f32 %v2291, 0.0
        %v2324 = vmax.f32 %v2292, 0.0
        %v2325 = vmax.f32 %v2293, 0.0
        %v2326 = vmax.f32 %v2294, 0.0
        %v2327 = vmax.f32 %v2295, 0.0
        %v2328 = vmax.f32 %v2296, 0.0
        %2329 = vst [vmem:[%s310 + $0x1] sm:$0xff] %v2297
        %2330 = vst [vmem:[%s310 + $0x9] sm:$0xff] %v2298
        %2331 = vst [vmem:[%s310 + $0x19] sm:$0xff] %v2299
        %2332 = vst [vmem:[%s310 + $0x21] sm:$0xff] %v2300
        %2333 = vst [vmem:[%s310 + $0x31] sm:$0xff] %v2301
        %2334 = vst [vmem:[%s310 + $0x39] sm:$0xff] %v2302
        %2335 = vst [vmem:[%s310 + $0x49] sm:$0xff] %v2303
        %2336 = vst [vmem:[%s310 + $0x51] sm:$0xff] %v2304
        %2337 = vst [vmem:[%s310 + $0x61] sm:$0xff] %v2305
        %2338 = vst [vmem:[%s310 + $0x69] sm:$0xff] %v2306
        %2339 = vst [vmem:[%s310 + $0x79] sm:$0xff] %v2307
        %2340 = vst [vmem:[%s310 + $0x81] sm:$0xff] %v2308
        %2341 = vst [vmem:[%s310 + $0x91] sm:$0xff] %v2309
        %2342 = vst [vmem:[%s310 + $0x99] sm:$0xff] %v2310
        %2343 = vst [vmem:[%s310 + $0xa9] sm:$0xff] %v2311
        %2344 = vst [vmem:[%s310 + $0xb1] sm:$0xff] %v2312
        %2345 = vst [vmem:[%s310 + $0xc1] sm:$0xff] %v2313
        %2346 = vst [vmem:[%s310 + $0xc9] sm:$0xff] %v2314
        %2347 = vst [vmem:[%s310 + $0xd9] sm:$0xff] %v2315
        %2348 = vst [vmem:[%s310 + $0xe1] sm:$0xff] %v2316
        %2349 = vst [vmem:[%s310 + $0xf1] sm:$0xff] %v2317
        %2350 = vst [vmem:[%s310 + $0xf9] sm:$0xff] %v2318
        %2351 = vst [vmem:[%s310 + $0x109] sm:$0xff] %v2319
        %2352 = vst [vmem:[%s310 + $0x111] sm:$0xff] %v2320
        %2353 = vst [vmem:[%s310 + $0x121] sm:$0xff] %v2321
        %2354 = vst [vmem:[%s310 + $0x129] sm:$0xff] %v2322
        %2355 = vst [vmem:[%s310 + $0x139] sm:$0xff] %v2323
        %2356 = vst [vmem:[%s310 + $0x141] sm:$0xff] %v2324
        %2357 = vst [vmem:[%s310 + $0x151] sm:$0xff] %v2325
        %2358 = vst [vmem:[%s310 + $0x159] sm:$0xff] %v2326
        %2359 = vst [vmem:[%s310 + $0x169] sm:$0xff] %v2327
        %2360 = vst [vmem:[%s310 + $0x171] sm:$0xff] %v2328
        %2361 = vst [vmem:[#allocation2 + $0x1] sm:$0xff] %v2299
        %2362 = vst [vmem:[#allocation2 + $0x9] sm:$0xff] %v2300
        %2363 = vst [vmem:[%s345 + $0x1] sm:$0xff] %v2325
        %2364 = vst [vmem:[%s345 + $0x9] sm:$0xff] %v2326
        %v2365 = vld [vmem:[#allocation2 + $0x2] sm:$0x1]
        %v2366 = vld [vmem:[#allocation2 + $0x1a] sm:$0x1]
        %v2367 = vld [vmem:[#allocation2 + $0x32] sm:$0x1]
        %v2368 = vld [vmem:[#allocation2 + $0x4a] sm:$0x1]
        %v2369 = vld [vmem:[#allocation2 + $0x62] sm:$0x1]
        %v2370 = vld [vmem:[#allocation2 + $0x7a] sm:$0x1]
        %v2371 = vld [vmem:[#allocation2 + $0x92] sm:$0x1]
        %v2372 = vld [vmem:[#allocation2 + $0xaa] sm:$0x1]
        %v2373 = vld [vmem:[#allocation2 + $0xc2] sm:$0x1]
        %v2374 = vld [vmem:[#allocation2 + $0xda] sm:$0x1]
        %v2375 = vld [vmem:[#allocation2 + $0xf2] sm:$0x1]
        %v2376 = vld [vmem:[#allocation2 + $0x10a] sm:$0x1]
        %v2377 = vld [vmem:[#allocation2 + $0x122] sm:$0x1]
        %v2378 = vld [vmem:[#allocation2 + $0x13a] sm:$0x1]
        %v2379 = vld [vmem:[#allocation2 + $0x152] sm:$0x1]
        %v2380 = vld [vmem:[#allocation2 + $0x16a] sm:$0x1]
        %v2381 = vld [vmem:[#allocation2 + $0x182] sm:$0x1]
        %v2382 = vld [vmem:[#allocation2 + $0x19a] sm:$0x1]
        %2383 = vst [vmem:[#allocation2] sm:$0x1] %v2365
        %2384 = vst [vmem:[#allocation2 + $0x18] sm:$0x1] %v2366
        %2385 = vst [vmem:[#allocation2 + $0x30] sm:$0x1] %v2367
        %2386 = vst [vmem:[#allocation2 + $0x48] sm:$0x1] %v2368
        %2387 = vst [vmem:[#allocation2 + $0x60] sm:$0x1] %v2369
        %2388 = vst [vmem:[#allocation2 + $0x78] sm:$0x1] %v2370
        %2389 = vst [vmem:[#allocation2 + $0x90] sm:$0x1] %v2371
        %2390 = vst [vmem:[#allocation2 + $0xa8] sm:$0x1] %v2372
        %2391 = vst [vmem:[#allocation2 + $0xc0] sm:$0x1] %v2373
        %2392 = vst [vmem:[#allocation2 + $0xd8] sm:$0x1] %v2374
        %2393 = vst [vmem:[#allocation2 + $0xf0] sm:$0x1] %v2375
        %2394 = vst [vmem:[#allocation2 + $0x108] sm:$0x1] %v2376
        %2395 = vst [vmem:[#allocation2 + $0x120] sm:$0x1] %v2377
        %2396 = vst [vmem:[#allocation2 + $0x138] sm:$0x1] %v2378
        %2397 = vst [vmem:[#allocation2 + $0x150] sm:$0x1] %v2379
        %2398 = vst [vmem:[#allocation2 + $0x168] sm:$0x1] %v2380
        %2399 = vst [vmem:[#allocation2 + $0x180] sm:$0x1] %v2381
        %2400 = vst [vmem:[#allocation2 + $0x198] sm:$0x1] %v2382
        %v2401 = vld [vmem:[#allocation2 + $0xf] sm:$0x1]
        %v2402 = vld [vmem:[#allocation2 + $0x27] sm:$0x1]
        %v2403 = vld [vmem:[#allocation2 + $0x3f] sm:$0x1]
        %v2404 = vld [vmem:[#allocation2 + $0x57] sm:$0x1]
        %v2405 = vld [vmem:[#allocation2 + $0x6f] sm:$0x1]
        %v2406 = vld [vmem:[#allocation2 + $0x87] sm:$0x1]
        %v2407 = vld [vmem:[#allocation2 + $0x9f] sm:$0x1]
        %v2408 = vld [vmem:[#allocation2 + $0xb7] sm:$0x1]
        %v2409 = vld [vmem:[#allocation2 + $0xcf] sm:$0x1]
        %v2410 = vld [vmem:[#allocation2 + $0xe7] sm:$0x1]
        %v2411 = vld [vmem:[#allocation2 + $0xff] sm:$0x1]
        %v2412 = vld [vmem:[#allocation2 + $0x117] sm:$0x1]
        %v2413 = vld [vmem:[#allocation2 + $0x12f] sm:$0x1]
        %v2414 = vld [vmem:[#allocation2 + $0x147] sm:$0x1]
        %v2415 = vld [vmem:[#allocation2 + $0x15f] sm:$0x1]
        %v2416 = vld [vmem:[#allocation2 + $0x177] sm:$0x1]
        %v2417 = vld [vmem:[#allocation2 + $0x18f] sm:$0x1]
        %v2418 = vld [vmem:[#allocation2 + $0x1a7] sm:$0x1]
        %2419 = vst [vmem:[#allocation2 + $0x11] sm:$0x1] %v2401
        %2420 = vst [vmem:[#allocation2 + $0x29] sm:$0x1] %v2402
        %2421 = vst [vmem:[#allocation2 + $0x41] sm:$0x1] %v2403
        %2422 = vst [vmem:[#allocation2 + $0x59] sm:$0x1] %v2404
        %2423 = vst [vmem:[#allocation2 + $0x71] sm:$0x1] %v2405
        %2424 = vst [vmem:[#allocation2 + $0x89] sm:$0x1] %v2406
        %2425 = vst [vmem:[#allocation2 + $0xa1] sm:$0x1] %v2407
        %2426 = vst [vmem:[#allocation2 + $0xb9] sm:$0x1] %v2408
        %2427 = vst [vmem:[#allocation2 + $0xd1] sm:$0x1] %v2409
        %2428 = vst [vmem:[#allocation2 + $0xe9] sm:$0x1] %v2410
        %2429 = vst [vmem:[#allocation2 + $0x101] sm:$0x1] %v2411
        %2430 = vst [vmem:[#allocation2 + $0x119] sm:$0x1] %v2412
        %2431 = vst [vmem:[#allocation2 + $0x131] sm:$0x1] %v2413
        %2432 = vst [vmem:[#allocation2 + $0x149] sm:$0x1] %v2414
        %2433 = vst [vmem:[#allocation2 + $0x161] sm:$0x1] %v2415
        %2434 = vst [vmem:[#allocation2 + $0x179] sm:$0x1] %v2416
        %2435 = vst [vmem:[#allocation2 + $0x191] sm:$0x1] %v2417
        %2436 = vst [vmem:[#allocation2 + $0x1a9] sm:$0x1] %v2418
        %v2437 = vld [vmem:[#allocation2] sm:$0xff]
        %v2438 = vld [vmem:[#allocation2 + $0x8] sm:$0xff]
        %v2439 = vld [vmem:[#allocation2 + $0x18] sm:$0xff]
        %v2440 = vld [vmem:[#allocation2 + $0x20] sm:$0xff]
        %v2441 = vld [vmem:[#allocation2 + $0x30] sm:$0xff]
        %v2442 = vld [vmem:[#allocation2 + $0x38] sm:$0xff]
        %v2443 = vld [vmem:[#allocation2 + $0x48] sm:$0xff]
        %v2444 = vld [vmem:[#allocation2 + $0x50] sm:$0xff]
        %v2445 = vld [vmem:[#allocation2 + $0x60] sm:$0xff]
        %v2446 = vld [vmem:[#allocation2 + $0x68] sm:$0xff]
        %v2447 = vld [vmem:[#allocation2 + $0x78] sm:$0xff]
        %v2448 = vld [vmem:[#allocation2 + $0x80] sm:$0xff]
        %v2449 = vld [vmem:[#allocation2 + $0x90] sm:$0xff]
        %v2450 = vld [vmem:[#allocation2 + $0x98] sm:$0xff]
        %v2451 = vld [vmem:[#allocation2 + $0xa8] sm:$0xff]
        %v2452 = vld [vmem:[#allocation2 + $0xb0] sm:$0xff]
        %v2453 = vld [vmem:[#allocation2 + $0xc0] sm:$0xff]
        %v2454 = vld [vmem:[#allocation2 + $0xc8] sm:$0xff]
        %v2455 = vld [vmem:[#allocation2 + $0xd8] sm:$0xff]
        %v2456 = vld [vmem:[#allocation2 + $0xe0] sm:$0xff]
        %v2457 = vld [vmem:[#allocation2 + $0xf0] sm:$0xff]
        %v2458 = vld [vmem:[#allocation2 + $0xf8] sm:$0xff]
        %v2459 = vld [vmem:[#allocation2 + $0x108] sm:$0xff]
        %v2460 = vld [vmem:[#allocation2 + $0x110] sm:$0xff]
        %v2461 = vld [vmem:[#allocation2 + $0x120] sm:$0xff]
        %v2462 = vld [vmem:[#allocation2 + $0x128] sm:$0xff]
        %v2463 = vld [vmem:[#allocation2 + $0x138] sm:$0xff]
        %v2464 = vld [vmem:[#allocation2 + $0x140] sm:$0xff]
        %v2465 = vld [vmem:[#allocation2 + $0x150] sm:$0xff]
        %v2466 = vld [vmem:[#allocation2 + $0x158] sm:$0xff]
        %v2467 = vld [vmem:[#allocation2 + $0x168] sm:$0xff]
        %v2468 = vld [vmem:[#allocation2 + $0x170] sm:$0xff]
        %v2469 = vld [vmem:[#allocation2 + $0x1] sm:$0xff]
        %v2470 = vld [vmem:[#allocation2 + $0x9] sm:$0xff]
        %v2471 = vld [vmem:[#allocation2 + $0x19] sm:$0xff]
        %v2472 = vld [vmem:[#allocation2 + $0x21] sm:$0xff]
        %v2473 = vld [vmem:[#allocation2 + $0x31] sm:$0xff]
        %v2474 = vld [vmem:[#allocation2 + $0x39] sm:$0xff]
        %v2475 = vld [vmem:[#allocation2 + $0x49] sm:$0xff]
        %v2476 = vld [vmem:[#allocation2 + $0x51] sm:$0xff]
        %v2477 = vld [vmem:[#allocation2 + $0x61] sm:$0xff]
        %v2478 = vld [vmem:[#allocation2 + $0x69] sm:$0xff]
        %v2479 = vld [vmem:[#allocation2 + $0x79] sm:$0xff]
        %v2480 = vld [vmem:[#allocation2 + $0x81] sm:$0xff]
        %v2481 = vld [vmem:[#allocation2 + $0x91] sm:$0xff]
        %v2482 = vld [vmem:[#allocation2 + $0x99] sm:$0xff]
        %v2483 = vld [vmem:[#allocation2 + $0xa9] sm:$0xff]
        %v2484 = vld [vmem:[#allocation2 + $0xb1] sm:$0xff]
        %v2485 = vld [vmem:[#allocation2 + $0xc1] sm:$0xff]
        %v2486 = vld [vmem:[#allocation2 + $0xc9] sm:$0xff]
        %v2487 = vld [vmem:[#allocation2 + $0xd9] sm:$0xff]
        %v2488 = vld [vmem:[#allocation2 + $0xe1] sm:$0xff]
        %v2489 = vld [vmem:[#allocation2 + $0xf1] sm:$0xff]
        %v2490 = vld [vmem:[#allocation2 + $0xf9] sm:$0xff]
        %v2491 = vld [vmem:[#allocation2 + $0x109] sm:$0xff]
        %v2492 = vld [vmem:[#allocation2 + $0x111] sm:$0xff]
        %v2493 = vld [vmem:[#allocation2 + $0x121] sm:$0xff]
        %v2494 = vld [vmem:[#allocation2 + $0x129] sm:$0xff]
        %v2495 = vld [vmem:[#allocation2 + $0x139] sm:$0xff]
        %v2496 = vld [vmem:[#allocation2 + $0x141] sm:$0xff]
        %v2497 = vld [vmem:[#allocation2 + $0x151] sm:$0xff]
        %v2498 = vld [vmem:[#allocation2 + $0x159] sm:$0xff]
        %v2499 = vld [vmem:[#allocation2 + $0x169] sm:$0xff]
        %v2500 = vld [vmem:[#allocation2 + $0x171] sm:$0xff]
        %v2501 = vld [vmem:[#allocation2 + $0x2] sm:$0xff]
        %v2502 = vld [vmem:[#allocation2 + $0xa] sm:$0xff]
        %v2503 = vld [vmem:[#allocation2 + $0x1a] sm:$0xff]
        %v2504 = vld [vmem:[#allocation2 + $0x22] sm:$0xff]
        %v2505 = vld [vmem:[#allocation2 + $0x32] sm:$0xff]
        %v2506 = vld [vmem:[#allocation2 + $0x3a] sm:$0xff]
        %v2507 = vld [vmem:[#allocation2 + $0x4a] sm:$0xff]
        %v2508 = vld [vmem:[#allocation2 + $0x52] sm:$0xff]
        %v2509 = vld [vmem:[#allocation2 + $0x62] sm:$0xff]
        %v2510 = vld [vmem:[#allocation2 + $0x6a] sm:$0xff]
        %v2511 = vld [vmem:[#allocation2 + $0x7a] sm:$0xff]
        %v2512 = vld [vmem:[#allocation2 + $0x82] sm:$0xff]
        %v2513 = vld [vmem:[#allocation2 + $0x92] sm:$0xff]
        %v2514 = vld [vmem:[#allocation2 + $0x9a] sm:$0xff]
        %v2515 = vld [vmem:[#allocation2 + $0xaa] sm:$0xff]
        %v2516 = vld [vmem:[#allocation2 + $0xb2] sm:$0xff]
        %v2517 = vld [vmem:[#allocation2 + $0xc2] sm:$0xff]
        %v2518 = vld [vmem:[#allocation2 + $0xca] sm:$0xff]
        %v2519 = vld [vmem:[#allocation2 + $0xda] sm:$0xff]
        %v2520 = vld [vmem:[#allocation2 + $0xe2] sm:$0xff]
        %v2521 = vld [vmem:[#allocation2 + $0xf2] sm:$0xff]
        %v2522 = vld [vmem:[#allocation2 + $0xfa] sm:$0xff]
        %v2523 = vld [vmem:[#allocation2 + $0x10a] sm:$0xff]
        %v2524 = vld [vmem:[#allocation2 + $0x112] sm:$0xff]
        %v2525 = vld [vmem:[#allocation2 + $0x122] sm:$0xff]
        %v2526 = vld [vmem:[#allocation2 + $0x12a] sm:$0xff]
        %v2527 = vld [vmem:[#allocation2 + $0x13a] sm:$0xff]
        %v2528 = vld [vmem:[#allocation2 + $0x142] sm:$0xff]
        %v2529 = vld [vmem:[#allocation2 + $0x152] sm:$0xff]
        %v2530 = vld [vmem:[#allocation2 + $0x15a] sm:$0xff]
        %v2531 = vld [vmem:[#allocation2 + $0x16a] sm:$0xff]
        %v2532 = vld [vmem:[#allocation2 + $0x172] sm:$0xff]
        %v2533 = vld [vmem:[%s310] sm:$0xff]
        %v2534 = vld [vmem:[%s310 + $0x8] sm:$0xff]
        %v2535 = vld [vmem:[%s310 + $0x18] sm:$0xff]
        %v2536 = vld [vmem:[%s310 + $0x20] sm:$0xff]
        %v2537 = vld [vmem:[%s310 + $0x30] sm:$0xff]
        %v2538 = vld [vmem:[%s310 + $0x38] sm:$0xff]
        %v2539 = vld [vmem:[%s310 + $0x48] sm:$0xff]
        %v2540 = vld [vmem:[%s310 + $0x50] sm:$0xff]
        %v2541 = vld [vmem:[%s310 + $0x60] sm:$0xff]
        %v2542 = vld [vmem:[%s310 + $0x68] sm:$0xff]
        %v2543 = vld [vmem:[%s310 + $0x78] sm:$0xff]
        %v2544 = vld [vmem:[%s310 + $0x80] sm:$0xff]
        %v2545 = vld [vmem:[%s310 + $0x90] sm:$0xff]
        %v2546 = vld [vmem:[%s310 + $0x98] sm:$0xff]
        %v2547 = vld [vmem:[%s310 + $0xa8] sm:$0xff]
        %v2548 = vld [vmem:[%s310 + $0xb0] sm:$0xff]
        %v2549 = vld [vmem:[%s310 + $0xc0] sm:$0xff]
        %v2550 = vld [vmem:[%s310 + $0xc8] sm:$0xff]
        %v2551 = vld [vmem:[%s310 + $0xd8] sm:$0xff]
        %v2552 = vld [vmem:[%s310 + $0xe0] sm:$0xff]
        %v2553 = vld [vmem:[%s310 + $0xf0] sm:$0xff]
        %v2554 = vld [vmem:[%s310 + $0xf8] sm:$0xff]
        %v2555 = vld [vmem:[%s310 + $0x108] sm:$0xff]
        %v2556 = vld [vmem:[%s310 + $0x110] sm:$0xff]
        %v2557 = vld [vmem:[%s310 + $0x120] sm:$0xff]
        %v2558 = vld [vmem:[%s310 + $0x128] sm:$0xff]
        %v2559 = vld [vmem:[%s310 + $0x138] sm:$0xff]
        %v2560 = vld [vmem:[%s310 + $0x140] sm:$0xff]
        %v2561 = vld [vmem:[%s310 + $0x150] sm:$0xff]
        %v2562 = vld [vmem:[%s310 + $0x158] sm:$0xff]
        %v2563 = vld [vmem:[%s310 + $0x168] sm:$0xff]
        %v2564 = vld [vmem:[%s310 + $0x170] sm:$0xff]
        %v2565 = vld [vmem:[%s310 + $0x1] sm:$0xff]
        %v2566 = vld [vmem:[%s310 + $0x9] sm:$0xff]
        %v2567 = vld [vmem:[%s310 + $0x19] sm:$0xff]
        %v2568 = vld [vmem:[%s310 + $0x21] sm:$0xff]
        %v2569 = vld [vmem:[%s310 + $0x31] sm:$0xff]
        %v2570 = vld [vmem:[%s310 + $0x39] sm:$0xff]
        %v2571 = vld [vmem:[%s310 + $0x49] sm:$0xff]
        %v2572 = vld [vmem:[%s310 + $0x51] sm:$0xff]
        %v2573 = vld [vmem:[%s310 + $0x61] sm:$0xff]
        %v2574 = vld [vmem:[%s310 + $0x69] sm:$0xff]
        %v2575 = vld [vmem:[%s310 + $0x79] sm:$0xff]
        %v2576 = vld [vmem:[%s310 + $0x81] sm:$0xff]
        %v2577 = vld [vmem:[%s310 + $0x91] sm:$0xff]
        %v2578 = vld [vmem:[%s310 + $0x99] sm:$0xff]
        %v2579 = vld [vmem:[%s310 + $0xa9] sm:$0xff]
        %v2580 = vld [vmem:[%s310 + $0xb1] sm:$0xff]
        %v2581 = vld [vmem:[%s310 + $0xc1] sm:$0xff]
        %v2582 = vld [vmem:[%s310 + $0xc9] sm:$0xff]
        %v2583 = vld [vmem:[%s310 + $0xd9] sm:$0xff]
        %v2584 = vld [vmem:[%s310 + $0xe1] sm:$0xff]
        %v2585 = vld [vmem:[%s310 + $0xf1] sm:$0xff]
        %v2586 = vld [vmem:[%s310 + $0xf9] sm:$0xff]
        %v2587 = vld [vmem:[%s310 + $0x109] sm:$0xff]
        %v2588 = vld [vmem:[%s310 + $0x111] sm:$0xff]
        %v2589 = vld [vmem:[%s310 + $0x121] sm:$0xff]
        %v2590 = vld [vmem:[%s310 + $0x129] sm:$0xff]
        %v2591 = vld [vmem:[%s310 + $0x139] sm:$0xff]
        %v2592 = vld [vmem:[%s310 + $0x141] sm:$0xff]
        %v2593 = vld [vmem:[%s310 + $0x151] sm:$0xff]
        %v2594 = vld [vmem:[%s310 + $0x159] sm:$0xff]
        %v2595 = vld [vmem:[%s310 + $0x169] sm:$0xff]
        %v2596 = vld [vmem:[%s310 + $0x171] sm:$0xff]
        %v2597 = vld [vmem:[%s310 + $0x2] sm:$0xff]
        %v2598 = vld [vmem:[%s310 + $0xa] sm:$0xff]
        %v2599 = vld [vmem:[%s310 + $0x1a] sm:$0xff]
        %v2600 = vld [vmem:[%s310 + $0x22] sm:$0xff]
        %v2601 = vld [vmem:[%s310 + $0x32] sm:$0xff]
        %v2602 = vld [vmem:[%s310 + $0x3a] sm:$0xff]
        %v2603 = vld [vmem:[%s310 + $0x4a] sm:$0xff]
        %v2604 = vld [vmem:[%s310 + $0x52] sm:$0xff]
        %v2605 = vld [vmem:[%s310 + $0x62] sm:$0xff]
        %v2606 = vld [vmem:[%s310 + $0x6a] sm:$0xff]
        %v2607 = vld [vmem:[%s310 + $0x7a] sm:$0xff]
        %v2608 = vld [vmem:[%s310 + $0x82] sm:$0xff]
        %v2609 = vld [vmem:[%s310 + $0x92] sm:$0xff]
        %v2610 = vld [vmem:[%s310 + $0x9a] sm:$0xff]
        %v2611 = vld [vmem:[%s310 + $0xaa] sm:$0xff]
        %v2612 = vld [vmem:[%s310 + $0xb2] sm:$0xff]
        %v2613 = vld [vmem:[%s310 + $0xc2] sm:$0xff]
        %v2614 = vld [vmem:[%s310 + $0xca] sm:$0xff]
        %v2615 = vld [vmem:[%s310 + $0xda] sm:$0xff]
        %v2616 = vld [vmem:[%s310 + $0xe2] sm:$0xff]
        %v2617 = vld [vmem:[%s310 + $0xf2] sm:$0xff]
        %v2618 = vld [vmem:[%s310 + $0xfa] sm:$0xff]
        %v2619 = vld [vmem:[%s310 + $0x10a] sm:$0xff]
        %v2620 = vld [vmem:[%s310 + $0x112] sm:$0xff]
        %v2621 = vld [vmem:[%s310 + $0x122] sm:$0xff]
        %v2622 = vld [vmem:[%s310 + $0x12a] sm:$0xff]
        %v2623 = vld [vmem:[%s310 + $0x13a] sm:$0xff]
        %v2624 = vld [vmem:[%s310 + $0x142] sm:$0xff]
        %v2625 = vld [vmem:[%s310 + $0x152] sm:$0xff]
        %v2626 = vld [vmem:[%s310 + $0x15a] sm:$0xff]
        %v2627 = vld [vmem:[%s310 + $0x16a] sm:$0xff]
        %v2628 = vld [vmem:[%s310 + $0x172] sm:$0xff]
        %v2629 = vld [vmem:[%s612] sm:$0xff]
        %v2630 = vld [vmem:[%s612 + $0x8] sm:$0xff]
        %v2631 = vld [vmem:[%s612 + $0x18] sm:$0xff]
        %v2632 = vld [vmem:[%s612 + $0x20] sm:$0xff]
        %v2633 = vld [vmem:[%s612 + $0x30] sm:$0xff]
        %v2634 = vld [vmem:[%s612 + $0x38] sm:$0xff]
        %v2635 = vld [vmem:[%s612 + $0x48] sm:$0xff]
        %v2636 = vld [vmem:[%s612 + $0x50] sm:$0xff]
        %v2637 = vld [vmem:[%s612 + $0x60] sm:$0xff]
        %v2638 = vld [vmem:[%s612 + $0x68] sm:$0xff]
        %v2639 = vld [vmem:[%s612 + $0x78] sm:$0xff]
        %v2640 = vld [vmem:[%s612 + $0x80] sm:$0xff]
        %v2641 = vld [vmem:[%s612 + $0x90] sm:$0xff]
        %v2642 = vld [vmem:[%s612 + $0x98] sm:$0xff]
        %v2643 = vld [vmem:[%s612 + $0xa8] sm:$0xff]
        %v2644 = vld [vmem:[%s612 + $0xb0] sm:$0xff]
        %v2645 = vld [vmem:[%s612 + $0xc0] sm:$0xff]
        %v2646 = vld [vmem:[%s612 + $0xc8] sm:$0xff]
        %v2647 = vld [vmem:[%s612 + $0xd8] sm:$0xff]
        %v2648 = vld [vmem:[%s612 + $0xe0] sm:$0xff]
        %v2649 = vld [vmem:[%s612 + $0xf0] sm:$0xff]
        %v2650 = vld [vmem:[%s612 + $0xf8] sm:$0xff]
        %v2651 = vld [vmem:[%s612 + $0x108] sm:$0xff]
        %v2652 = vld [vmem:[%s612 + $0x110] sm:$0xff]
        %v2653 = vld [vmem:[%s612 + $0x120] sm:$0xff]
        %v2654 = vld [vmem:[%s612 + $0x128] sm:$0xff]
        %v2655 = vld [vmem:[%s612 + $0x138] sm:$0xff]
        %v2656 = vld [vmem:[%s612 + $0x140] sm:$0xff]
        %v2657 = vld [vmem:[%s612 + $0x150] sm:$0xff]
        %v2658 = vld [vmem:[%s612 + $0x158] sm:$0xff]
        %v2659 = vld [vmem:[%s612 + $0x168] sm:$0xff]
        %v2660 = vld [vmem:[%s612 + $0x170] sm:$0xff]
        %v2661 = vld [vmem:[%s612 + $0x1] sm:$0xff]
        %v2662 = vld [vmem:[%s612 + $0x9] sm:$0xff]
        %v2663 = vld [vmem:[%s612 + $0x19] sm:$0xff]
        %v2664 = vld [vmem:[%s612 + $0x21] sm:$0xff]
        %v2665 = vld [vmem:[%s612 + $0x31] sm:$0xff]
        %v2666 = vld [vmem:[%s612 + $0x39] sm:$0xff]
        %v2667 = vld [vmem:[%s612 + $0x49] sm:$0xff]
        %v2668 = vld [vmem:[%s612 + $0x51] sm:$0xff]
        %v2669 = vld [vmem:[%s612 + $0x61] sm:$0xff]
        %v2670 = vld [vmem:[%s612 + $0x69] sm:$0xff]
        %v2671 = vld [vmem:[%s612 + $0x79] sm:$0xff]
        %v2672 = vld [vmem:[%s612 + $0x81] sm:$0xff]
        %v2673 = vld [vmem:[%s612 + $0x91] sm:$0xff]
        %v2674 = vld [vmem:[%s612 + $0x99] sm:$0xff]
        %v2675 = vld [vmem:[%s612 + $0xa9] sm:$0xff]
        %v2676 = vld [vmem:[%s612 + $0xb1] sm:$0xff]
        %v2677 = vld [vmem:[%s612 + $0xc1] sm:$0xff]
        %v2678 = vld [vmem:[%s612 + $0xc9] sm:$0xff]
        %v2679 = vld [vmem:[%s612 + $0xd9] sm:$0xff]
        %v2680 = vld [vmem:[%s612 + $0xe1] sm:$0xff]
        %v2681 = vld [vmem:[%s612 + $0xf1] sm:$0xff]
        %v2682 = vld [vmem:[%s612 + $0xf9] sm:$0xff]
        %v2683 = vld [vmem:[%s612 + $0x109] sm:$0xff]
        %v2684 = vld [vmem:[%s612 + $0x111] sm:$0xff]
        %v2685 = vld [vmem:[%s612 + $0x121] sm:$0xff]
        %v2686 = vld [vmem:[%s612 + $0x129] sm:$0xff]
        %v2687 = vld [vmem:[%s612 + $0x139] sm:$0xff]
        %v2688 = vld [vmem:[%s612 + $0x141] sm:$0xff]
        %v2689 = vld [vmem:[%s612 + $0x151] sm:$0xff]
        %v2690 = vld [vmem:[%s612 + $0x159] sm:$0xff]
        %v2691 = vld [vmem:[%s612 + $0x169] sm:$0xff]
        %v2692 = vld [vmem:[%s612 + $0x171] sm:$0xff]
        %v2693 = vld [vmem:[%s612 + $0x2] sm:$0xff]
        %v2694 = vld [vmem:[%s612 + $0xa] sm:$0xff]
        %v2695 = vld [vmem:[%s612 + $0x1a] sm:$0xff]
        %v2696 = vld [vmem:[%s612 + $0x22] sm:$0xff]
        %v2697 = vld [vmem:[%s612 + $0x32] sm:$0xff]
        %v2698 = vld [vmem:[%s612 + $0x3a] sm:$0xff]
        %v2699 = vld [vmem:[%s612 + $0x4a] sm:$0xff]
        %v2700 = vld [vmem:[%s612 + $0x52] sm:$0xff]
        %v2701 = vld [vmem:[%s612 + $0x62] sm:$0xff]
        %v2702 = vld [vmem:[%s612 + $0x6a] sm:$0xff]
        %v2703 = vld [vmem:[%s612 + $0x7a] sm:$0xff]
        %v2704 = vld [vmem:[%s612 + $0x82] sm:$0xff]
        %v2705 = vld [vmem:[%s612 + $0x92] sm:$0xff]
        %v2706 = vld [vmem:[%s612 + $0x9a] sm:$0xff]
        %v2707 = vld [vmem:[%s612 + $0xaa] sm:$0xff]
        %v2708 = vld [vmem:[%s612 + $0xb2] sm:$0xff]
        %v2709 = vld [vmem:[%s612 + $0xc2] sm:$0xff]
        %v2710 = vld [vmem:[%s612 + $0xca] sm:$0xff]
        %v2711 = vld [vmem:[%s612 + $0xda] sm:$0xff]
        %v2712 = vld [vmem:[%s612 + $0xe2] sm:$0xff]
        %v2713 = vld [vmem:[%s612 + $0xf2] sm:$0xff]
        %v2714 = vld [vmem:[%s612 + $0xfa] sm:$0xff]
        %v2715 = vld [vmem:[%s612 + $0x10a] sm:$0xff]
        %v2716 = vld [vmem:[%s612 + $0x112] sm:$0xff]
        %v2717 = vld [vmem:[%s612 + $0x122] sm:$0xff]
        %v2718 = vld [vmem:[%s612 + $0x12a] sm:$0xff]
        %v2719 = vld [vmem:[%s612 + $0x13a] sm:$0xff]
        %v2720 = vld [vmem:[%s612 + $0x142] sm:$0xff]
        %v2721 = vld [vmem:[%s612 + $0x152] sm:$0xff]
        %v2722 = vld [vmem:[%s612 + $0x15a] sm:$0xff]
        %v2723 = vld [vmem:[%s612 + $0x16a] sm:$0xff]
        %v2724 = vld [vmem:[%s612 + $0x172] sm:$0xff]
        %v2725 = vpack.c.bf16 %v2438, %v2437
        %v2726 = vpack.c.bf16 %v2470, %v2469
        %v2727 = vpack.c.bf16 %v2502, %v2501
        %v2728 = vpack.c.bf16 %v2534, %v2533
        %v2729 = vpack.c.bf16 %v2566, %v2565
        %v2730 = vpack.c.bf16 %v2598, %v2597
        %v2731 = vpack.c.bf16 %v2630, %v2629
        %v2732 = vpack.c.bf16 %v2662, %v2661
        %v2733 = vpack.c.bf16 %v2694, %v2693
        %v2734 = vpack.c.bf16 %v2440, %v2439
        %v2735 = vpack.c.bf16 %v2472, %v2471
        %v2736 = vpack.c.bf16 %v2504, %v2503
        %v2737 = vpack.c.bf16 %v2536, %v2535
        %v2738 = vpack.c.bf16 %v2568, %v2567
        %v2739 = vpack.c.bf16 %v2600, %v2599
        %v2740 = vpack.c.bf16 %v2632, %v2631
        %v2741 = vpack.c.bf16 %v2664, %v2663
        %v2742 = vpack.c.bf16 %v2696, %v2695
        %v2743 = vpack.c.bf16 %v2442, %v2441
        %v2744 = vpack.c.bf16 %v2474, %v2473
        %v2745 = vpack.c.bf16 %v2506, %v2505
        %v2746 = vpack.c.bf16 %v2538, %v2537
        %v2747 = vpack.c.bf16 %v2570, %v2569
        %v2748 = vpack.c.bf16 %v2602, %v2601
        %v2749 = vpack.c.bf16 %v2634, %v2633
        %v2750 = vpack.c.bf16 %v2666, %v2665
        %v2751 = vpack.c.bf16 %v2698, %v2697
        %v2752 = vpack.c.bf16 %v2444, %v2443
        %v2753 = vpack.c.bf16 %v2476, %v2475
        %v2754 = vpack.c.bf16 %v2508, %v2507
        %v2755 = vpack.c.bf16 %v2540, %v2539
        %v2756 = vpack.c.bf16 %v2572, %v2571
        %v2757 = vpack.c.bf16 %v2604, %v2603
        %v2758 = vpack.c.bf16 %v2636, %v2635
        %v2759 = vpack.c.bf16 %v2668, %v2667
        %v2760 = vpack.c.bf16 %v2700, %v2699
        %v2761 = vpack.c.bf16 %v2446, %v2445
        %v2762 = vpack.c.bf16 %v2478, %v2477
        %v2763 = vpack.c.bf16 %v2510, %v2509
        %v2764 = vpack.c.bf16 %v2542, %v2541
        %v2765 = vpack.c.bf16 %v2574, %v2573
        %v2766 = vpack.c.bf16 %v2606, %v2605
        %v2767 = vpack.c.bf16 %v2638, %v2637
        %v2768 = vpack.c.bf16 %v2670, %v2669
        %v2769 = vpack.c.bf16 %v2702, %v2701
        %v2770 = vpack.c.bf16 %v2448, %v2447
        %v2771 = vpack.c.bf16 %v2480, %v2479
        %v2772 = vpack.c.bf16 %v2512, %v2511
        %v2773 = vpack.c.bf16 %v2544, %v2543
        %v2774 = vpack.c.bf16 %v2576, %v2575
        %v2775 = vpack.c.bf16 %v2608, %v2607
        %v2776 = vpack.c.bf16 %v2640, %v2639
        %v2777 = vpack.c.bf16 %v2672, %v2671
        %v2778 = vpack.c.bf16 %v2704, %v2703
        %v2779 = vpack.c.bf16 %v2450, %v2449
        %v2780 = vpack.c.bf16 %v2482, %v2481
        %v2781 = vpack.c.bf16 %v2514, %v2513
        %v2782 = vpack.c.bf16 %v2546, %v2545
        %v2783 = vpack.c.bf16 %v2578, %v2577
        %v2784 = vpack.c.bf16 %v2610, %v2609
        %v2785 = vpack.c.bf16 %v2642, %v2641
        %v2786 = vpack.c.bf16 %v2674, %v2673
        %v2787 = vpack.c.bf16 %v2706, %v2705
        %v2788 = vpack.c.bf16 %v2452, %v2451
        %v2789 = vpack.c.bf16 %v2484, %v2483
        %v2790 = vpack.c.bf16 %v2516, %v2515
        %v2791 = vpack.c.bf16 %v2548, %v2547
        %v2792 = vpack.c.bf16 %v2580, %v2579
        %v2793 = vpack.c.bf16 %v2612, %v2611
        %v2794 = vpack.c.bf16 %v2644, %v2643
        %v2795 = vpack.c.bf16 %v2676, %v2675
        %v2796 = vpack.c.bf16 %v2708, %v2707
        %v2797 = vpack.c.bf16 %v2454, %v2453
        %v2798 = vpack.c.bf16 %v2486, %v2485
        %v2799 = vpack.c.bf16 %v2518, %v2517
        %v2800 = vpack.c.bf16 %v2550, %v2549
        %v2801 = vpack.c.bf16 %v2582, %v2581
        %v2802 = vpack.c.bf16 %v2614, %v2613
        %v2803 = vpack.c.bf16 %v2646, %v2645
        %v2804 = vpack.c.bf16 %v2678, %v2677
        %v2805 = vpack.c.bf16 %v2710, %v2709
        %v2806 = vpack.c.bf16 %v2456, %v2455
        %v2807 = vpack.c.bf16 %v2488, %v2487
        %v2808 = vpack.c.bf16 %v2520, %v2519
        %v2809 = vpack.c.bf16 %v2552, %v2551
        %v2810 = vpack.c.bf16 %v2584, %v2583
        %v2811 = vpack.c.bf16 %v2616, %v2615
        %v2812 = vpack.c.bf16 %v2648, %v2647
        %v2813 = vpack.c.bf16 %v2680, %v2679
        %v2814 = vpack.c.bf16 %v2712, %v2711
        %v2815 = vpack.c.bf16 %v2458, %v2457
        %v2816 = vpack.c.bf16 %v2490, %v2489
        %v2817 = vpack.c.bf16 %v2522, %v2521
        %v2818 = vpack.c.bf16 %v2554, %v2553
        %v2819 = vpack.c.bf16 %v2586, %v2585
        %v2820 = vpack.c.bf16 %v2618, %v2617
        %v2821 = vpack.c.bf16 %v2650, %v2649
        %v2822 = vpack.c.bf16 %v2682, %v2681
        %v2823 = vpack.c.bf16 %v2714, %v2713
        %v2824 = vpack.c.bf16 %v2460, %v2459
        %v2825 = vpack.c.bf16 %v2492, %v2491
        %v2826 = vpack.c.bf16 %v2524, %v2523
        %v2827 = vpack.c.bf16 %v2556, %v2555
        %v2828 = vpack.c.bf16 %v2588, %v2587
        %v2829 = vpack.c.bf16 %v2620, %v2619
        %v2830 = vpack.c.bf16 %v2652, %v2651
        %v2831 = vpack.c.bf16 %v2684, %v2683
        %v2832 = vpack.c.bf16 %v2716, %v2715
        %v2833 = vpack.c.bf16 %v2462, %v2461
        %v2834 = vpack.c.bf16 %v2494, %v2493
        %v2835 = vpack.c.bf16 %v2526, %v2525
        %v2836 = vpack.c.bf16 %v2558, %v2557
        %v2837 = vpack.c.bf16 %v2590, %v2589
        %v2838 = vpack.c.bf16 %v2622, %v2621
        %v2839 = vpack.c.bf16 %v2654, %v2653
        %v2840 = vpack.c.bf16 %v2686, %v2685
        %v2841 = vpack.c.bf16 %v2718, %v2717
        %v2842 = vpack.c.bf16 %v2464, %v2463
        %v2843 = vpack.c.bf16 %v2496, %v2495
        %v2844 = vpack.c.bf16 %v2528, %v2527
        %v2845 = vpack.c.bf16 %v2560, %v2559
        %v2846 = vpack.c.bf16 %v2592, %v2591
        %v2847 = vpack.c.bf16 %v2624, %v2623
        %v2848 = vpack.c.bf16 %v2656, %v2655
        %v2849 = vpack.c.bf16 %v2688, %v2687
        %v2850 = vpack.c.bf16 %v2720, %v2719
        %v2851 = vpack.c.bf16 %v2466, %v2465
        %v2852 = vpack.c.bf16 %v2498, %v2497
        %v2853 = vpack.c.bf16 %v2530, %v2529
        %v2854 = vpack.c.bf16 %v2562, %v2561
        %v2855 = vpack.c.bf16 %v2594, %v2593
        %v2856 = vpack.c.bf16 %v2626, %v2625
        %v2857 = vpack.c.bf16 %v2658, %v2657
        %v2858 = vpack.c.bf16 %v2690, %v2689
        %v2859 = vpack.c.bf16 %v2722, %v2721
        %v2860 = vpack.c.bf16 %v2468, %v2467
        %v2861 = vpack.c.bf16 %v2500, %v2499
        %v2862 = vpack.c.bf16 %v2532, %v2531
        %v2863 = vpack.c.bf16 %v2564, %v2563
        %v2864 = vpack.c.bf16 %v2596, %v2595
        %v2865 = vpack.c.bf16 %v2628, %v2627
        %v2866 = vpack.c.bf16 %v2660, %v2659
        %v2867 = vpack.c.bf16 %v2692, %v2691
        %v2868 = vpack.c.bf16 %v2724, %v2723
        %v2869 = vld [vmem:[#allocation8] sm:$0xf]
        %v2870 = vld [vmem:[#allocation8 + $0x4] sm:$0xf]
        %v2871 = vld [vmem:[#allocation8 + $0x8] sm:$0xf]
        %v2872 = vld [vmem:[#allocation8 + $0xc] sm:$0xf]
        %v2873 = vld [vmem:[#allocation8 + $0x10] sm:$0xf]
        %v2874 = vld [vmem:[#allocation8 + $0x14] sm:$0xf]
        %v2875 = vld [vmem:[#allocation8 + $0x18] sm:$0xf]
        %v2876 = vld [vmem:[#allocation8 + $0x1c] sm:$0xf]
        %v2877 = vld [vmem:[#allocation8 + $0x20] sm:$0xf]
        %v2878 = vld [vmem:[#allocation8 + $0x24] sm:$0xf]
        %v2879 = vld [vmem:[#allocation8 + $0x28] sm:$0xf]
        %v2880 = vld [vmem:[#allocation8 + $0x2c] sm:$0xf]
        %v2881 = vld [vmem:[#allocation8 + $0x30] sm:$0xf]
        %v2882 = vld [vmem:[#allocation8 + $0x34] sm:$0xf]
        %v2883 = vld [vmem:[#allocation8 + $0x38] sm:$0xf]
        %v2884 = vld [vmem:[#allocation8 + $0x3c] sm:$0xf]
        %v2885 = vld [vmem:[#allocation8 + $0x40] sm:$0xf]
        %v2886 = vld [vmem:[#allocation8 + $0x44] sm:$0xf]
        %v2887 = vld [vmem:[#allocation8 + $0x48] sm:$0xf]
        %v2888 = vld [vmem:[#allocation8 + $0x4c] sm:$0xf]
        %v2889 = vld [vmem:[#allocation8 + $0x50] sm:$0xf]
        %v2890 = vld [vmem:[#allocation8 + $0x54] sm:$0xf]
        %v2891 = vld [vmem:[#allocation8 + $0x58] sm:$0xf]
        %v2892 = vld [vmem:[#allocation8 + $0x5c] sm:$0xf]
        %v2893 = vld [vmem:[#allocation8 + $0x60] sm:$0xf]
        %v2894 = vld [vmem:[#allocation8 + $0x64] sm:$0xf]
        %v2895 = vld [vmem:[#allocation8 + $0x68] sm:$0xf]
        %v2896 = vld [vmem:[#allocation8 + $0x6c] sm:$0xf]
        %v2897 = vld [vmem:[#allocation8 + $0x70] sm:$0xf]
        %v2898 = vld [vmem:[#allocation8 + $0x74] sm:$0xf]
        %v2899 = vld [vmem:[#allocation8 + $0x78] sm:$0xf]
        %v2900 = vld [vmem:[#allocation8 + $0x7c] sm:$0xf]
        %v2901 = vld [vmem:[#allocation8 + $0x80] sm:$0xf]
        %v2902 = vld [vmem:[#allocation8 + $0x84] sm:$0xf]
        %v2903 = vld [vmem:[#allocation8 + $0x88] sm:$0xf]
        %v2904 = vld [vmem:[#allocation8 + $0x8c] sm:$0xf]
        %v2905 = vld [vmem:[#allocation8 + $0x90] sm:$0xf]
        %v2906 = vld [vmem:[#allocation8 + $0x94] sm:$0xf]
        %v2907 = vld [vmem:[#allocation8 + $0x98] sm:$0xf]
        %v2908 = vld [vmem:[#allocation8 + $0x9c] sm:$0xf]
        %v2909 = vld [vmem:[#allocation8 + $0xa0] sm:$0xf]
        %v2910 = vld [vmem:[#allocation8 + $0xa4] sm:$0xf]
        %v2911 = vld [vmem:[#allocation8 + $0xa8] sm:$0xf]
        %v2912 = vld [vmem:[#allocation8 + $0xac] sm:$0xf]
        %v2913 = vld [vmem:[#allocation8 + $0xb0] sm:$0xf]
        %v2914 = vld [vmem:[#allocation8 + $0xb4] sm:$0xf]
        %v2915 = vld [vmem:[#allocation8 + $0xb8] sm:$0xf]
        %v2916 = vld [vmem:[#allocation8 + $0xbc] sm:$0xf]
        %v2917 = vld [vmem:[#allocation8 + $0xc0] sm:$0xf]
        %v2918 = vld [vmem:[#allocation8 + $0xc4] sm:$0xf]
        %v2919 = vld [vmem:[#allocation8 + $0xc8] sm:$0xf]
        %v2920 = vld [vmem:[#allocation8 + $0xcc] sm:$0xf]
        %v2921 = vld [vmem:[#allocation8 + $0xd0] sm:$0xf]
        %v2922 = vld [vmem:[#allocation8 + $0xd4] sm:$0xf]
        %v2923 = vld [vmem:[#allocation8 + $0xd8] sm:$0xf]
        %v2924 = vld [vmem:[#allocation8 + $0xdc] sm:$0xf]
        %v2925 = vld [vmem:[#allocation8 + $0xe0] sm:$0xf]
        %v2926 = vld [vmem:[#allocation8 + $0xe4] sm:$0xf]
        %v2927 = vld [vmem:[#allocation8 + $0xe8] sm:$0xf]
        %v2928 = vld [vmem:[#allocation8 + $0xec] sm:$0xf]
        %v2929 = vld [vmem:[#allocation8 + $0xf0] sm:$0xf]
        %v2930 = vld [vmem:[#allocation8 + $0xf4] sm:$0xf]
        %v2931 = vld [vmem:[#allocation8 + $0xf8] sm:$0xf]
        %v2932 = vld [vmem:[#allocation8 + $0xfc] sm:$0xf]
        %v2933 = vld [vmem:[#allocation8 + $0x100] sm:$0xf]
        %v2934 = vld [vmem:[#allocation8 + $0x104] sm:$0xf]
        %v2935 = vld [vmem:[#allocation8 + $0x108] sm:$0xf]
        %v2936 = vld [vmem:[#allocation8 + $0x10c] sm:$0xf]
        %v2937 = vld [vmem:[#allocation8 + $0x110] sm:$0xf]
        %v2938 = vld [vmem:[#allocation8 + $0x114] sm:$0xf]
        %v2939 = vld [vmem:[#allocation8 + $0x118] sm:$0xf]
        %v2940 = vld [vmem:[#allocation8 + $0x11c] sm:$0xf]
        %v2941 = vld [vmem:[#allocation8 + $0x120] sm:$0xf]
        %v2942 = vld [vmem:[#allocation8 + $0x124] sm:$0xf]
        %v2943 = vld [vmem:[#allocation8 + $0x128] sm:$0xf]
        %v2944 = vld [vmem:[#allocation8 + $0x12c] sm:$0xf]
        %v2945 = vld [vmem:[#allocation8 + $0x130] sm:$0xf]
        %v2946 = vld [vmem:[#allocation8 + $0x134] sm:$0xf]
        %v2947 = vld [vmem:[#allocation8 + $0x138] sm:$0xf]
        %v2948 = vld [vmem:[#allocation8 + $0x13c] sm:$0xf]
        %v2949 = vld [vmem:[#allocation8 + $0x140] sm:$0xf]
        %v2950 = vld [vmem:[#allocation8 + $0x144] sm:$0xf]
        %v2951 = vld [vmem:[#allocation8 + $0x148] sm:$0xf]
        %v2952 = vld [vmem:[#allocation8 + $0x14c] sm:$0xf]
        %v2953 = vld [vmem:[#allocation8 + $0x150] sm:$0xf]
        %v2954 = vld [vmem:[#allocation8 + $0x154] sm:$0xf]
        %v2955 = vld [vmem:[#allocation8 + $0x158] sm:$0xf]
        %v2956 = vld [vmem:[#allocation8 + $0x15c] sm:$0xf]
        %v2957 = vld [vmem:[#allocation8 + $0x160] sm:$0xf]
        %v2958 = vld [vmem:[#allocation8 + $0x164] sm:$0xf]
        %v2959 = vld [vmem:[#allocation8 + $0x168] sm:$0xf]
        %v2960 = vld [vmem:[#allocation8 + $0x16c] sm:$0xf]
        %v2961 = vld [vmem:[#allocation8 + $0x170] sm:$0xf]
        %v2962 = vld [vmem:[#allocation8 + $0x174] sm:$0xf]
        %v2963 = vld [vmem:[#allocation8 + $0x178] sm:$0xf]
        %v2964 = vld [vmem:[#allocation8 + $0x17c] sm:$0xf]
        %v2965 = vld [vmem:[#allocation8 + $0x180] sm:$0xf]
        %v2966 = vld [vmem:[#allocation8 + $0x184] sm:$0xf]
        %v2967 = vld [vmem:[#allocation8 + $0x188] sm:$0xf]
        %v2968 = vld [vmem:[#allocation8 + $0x18c] sm:$0xf]
        %v2969 = vld [vmem:[#allocation8 + $0x190] sm:$0xf]
        %v2970 = vld [vmem:[#allocation8 + $0x194] sm:$0xf]
        %v2971 = vld [vmem:[#allocation8 + $0x198] sm:$0xf]
        %v2972 = vld [vmem:[#allocation8 + $0x19c] sm:$0xf]
        %v2973 = vld [vmem:[#allocation8 + $0x1a0] sm:$0xf]
        %v2974 = vld [vmem:[#allocation8 + $0x1a4] sm:$0xf]
        %v2975 = vld [vmem:[#allocation8 + $0x1a8] sm:$0xf]
        %v2976 = vld [vmem:[#allocation8 + $0x1ac] sm:$0xf]
        %v2977 = vld [vmem:[#allocation8 + $0x1b0] sm:$0xf]
        %v2978 = vld [vmem:[#allocation8 + $0x1b4] sm:$0xf]
        %v2979 = vld [vmem:[#allocation8 + $0x1b8] sm:$0xf]
        %v2980 = vld [vmem:[#allocation8 + $0x1bc] sm:$0xf]
        %v2981 = vld [vmem:[#allocation8 + $0x1c0] sm:$0xf]
        %v2982 = vld [vmem:[#allocation8 + $0x1c4] sm:$0xf]
        %v2983 = vld [vmem:[#allocation8 + $0x1c8] sm:$0xf]
        %v2984 = vld [vmem:[#allocation8 + $0x1cc] sm:$0xf]
        %v2985 = vld [vmem:[#allocation8 + $0x1d0] sm:$0xf]
        %v2986 = vld [vmem:[#allocation8 + $0x1d4] sm:$0xf]
        %v2987 = vld [vmem:[#allocation8 + $0x1d8] sm:$0xf]
        %v2988 = vld [vmem:[#allocation8 + $0x1dc] sm:$0xf]
        %v2989 = vld [vmem:[#allocation8 + $0x1e0] sm:$0xf]
        %v2990 = vld [vmem:[#allocation8 + $0x1e4] sm:$0xf]
        %v2991 = vld [vmem:[#allocation8 + $0x1e8] sm:$0xf]
        %v2992 = vld [vmem:[#allocation8 + $0x1ec] sm:$0xf]
        %v2993 = vld [vmem:[#allocation8 + $0x1f0] sm:$0xf]
        %v2994 = vld [vmem:[#allocation8 + $0x1f4] sm:$0xf]
        %v2995 = vld [vmem:[#allocation8 + $0x1f8] sm:$0xf]
        %v2996 = vld [vmem:[#allocation8 + $0x1fc] sm:$0xf]
        %v2997 = vld [vmem:[#allocation8 + $0x200] sm:$0xf]
        %v2998 = vld [vmem:[#allocation8 + $0x204] sm:$0xf]
        %v2999 = vld [vmem:[#allocation8 + $0x208] sm:$0xf]
        %v3000 = vld [vmem:[#allocation8 + $0x20c] sm:$0xf]
        %v3001 = vld [vmem:[#allocation8 + $0x210] sm:$0xf]
        %v3002 = vld [vmem:[#allocation8 + $0x214] sm:$0xf]
        %v3003 = vld [vmem:[#allocation8 + $0x218] sm:$0xf]
        %v3004 = vld [vmem:[#allocation8 + $0x21c] sm:$0xf]
        %v3005 = vld [vmem:[#allocation8 + $0x220] sm:$0xf]
        %v3006 = vld [vmem:[#allocation8 + $0x224] sm:$0xf]
        %v3007 = vld [vmem:[#allocation8 + $0x228] sm:$0xf]
        %v3008 = vld [vmem:[#allocation8 + $0x22c] sm:$0xf]
        %v3009 = vld [vmem:[#allocation8 + $0x230] sm:$0xf]
        %v3010 = vld [vmem:[#allocation8 + $0x234] sm:$0xf]
        %v3011 = vld [vmem:[#allocation8 + $0x238] sm:$0xf]
        %v3012 = vld [vmem:[#allocation8 + $0x23c] sm:$0xf]
        %v3157 = vunpack.c.l.b16 %v2869
        %v3158 = vunpack.c.l.b16 %v2870
        %v3159 = vunpack.c.l.b16 %v2871
        %v3160 = vunpack.c.l.b16 %v2872
        %v3161 = vunpack.c.l.b16 %v2873
        %v3162 = vunpack.c.l.b16 %v2874
        %v3163 = vunpack.c.l.b16 %v2875
        %v3164 = vunpack.c.l.b16 %v2876
        %v3165 = vunpack.c.l.b16 %v2877
        %v3166 = vunpack.c.l.b16 %v2878
        %v3167 = vunpack.c.l.b16 %v2879
        %v3168 = vunpack.c.l.b16 %v2880
        %v3169 = vunpack.c.l.b16 %v2881
        %v3170 = vunpack.c.l.b16 %v2882
        %v3171 = vunpack.c.l.b16 %v2883
        %v3172 = vunpack.c.l.b16 %v2884
        %v3173 = vunpack.c.l.b16 %v2885
        %v3174 = vunpack.c.l.b16 %v2886
        %v3175 = vunpack.c.l.b16 %v2887
        %v3176 = vunpack.c.l.b16 %v2888
        %v3177 = vunpack.c.l.b16 %v2889
        %v3178 = vunpack.c.l.b16 %v2890
        %v3179 = vunpack.c.l.b16 %v2891
        %v3180 = vunpack.c.l.b16 %v2892
        %v3181 = vunpack.c.l.b16 %v2893
        %v3182 = vunpack.c.l.b16 %v2894
        %v3183 = vunpack.c.l.b16 %v2895
        %v3184 = vunpack.c.l.b16 %v2896
        %v3185 = vunpack.c.l.b16 %v2897
        %v3186 = vunpack.c.l.b16 %v2898
        %v3187 = vunpack.c.l.b16 %v2899
        %v3188 = vunpack.c.l.b16 %v2900
        %v3189 = vunpack.c.l.b16 %v2901
        %v3190 = vunpack.c.l.b16 %v2902
        %v3191 = vunpack.c.l.b16 %v2903
        %v3192 = vunpack.c.l.b16 %v2904
        %v3193 = vunpack.c.l.b16 %v2905
        %v3194 = vunpack.c.l.b16 %v2906
        %v3195 = vunpack.c.l.b16 %v2907
        %v3196 = vunpack.c.l.b16 %v2908
        %v3197 = vunpack.c.l.b16 %v2909
        %v3198 = vunpack.c.l.b16 %v2910
        %v3199 = vunpack.c.l.b16 %v2911
        %v3200 = vunpack.c.l.b16 %v2912
        %v3201 = vunpack.c.l.b16 %v2913
        %v3202 = vunpack.c.l.b16 %v2914
        %v3203 = vunpack.c.l.b16 %v2915
        %v3204 = vunpack.c.l.b16 %v2916
        %v3205 = vunpack.c.l.b16 %v2917
        %v3206 = vunpack.c.l.b16 %v2918
        %v3207 = vunpack.c.l.b16 %v2919
        %v3208 = vunpack.c.l.b16 %v2920
        %v3209 = vunpack.c.l.b16 %v2921
        %v3210 = vunpack.c.l.b16 %v2922
        %v3211 = vunpack.c.l.b16 %v2923
        %v3212 = vunpack.c.l.b16 %v2924
        %v3213 = vunpack.c.l.b16 %v2925
        %v3214 = vunpack.c.l.b16 %v2926
        %v3215 = vunpack.c.l.b16 %v2927
        %v3216 = vunpack.c.l.b16 %v2928
        %v3217 = vunpack.c.l.b16 %v2929
        %v3218 = vunpack.c.l.b16 %v2930
        %v3219 = vunpack.c.l.b16 %v2931
        %v3220 = vunpack.c.l.b16 %v2932
        %v3221 = vunpack.c.l.b16 %v2933
        %v3222 = vunpack.c.l.b16 %v2934
        %v3223 = vunpack.c.l.b16 %v2935
        %v3224 = vunpack.c.l.b16 %v2936
        %v3225 = vunpack.c.l.b16 %v2937
        %v3226 = vunpack.c.l.b16 %v2938
        %v3227 = vunpack.c.l.b16 %v2939
        %v3228 = vunpack.c.l.b16 %v2940
        %v3229 = vunpack.c.l.b16 %v2941
        %v3230 = vunpack.c.l.b16 %v2942
        %v3231 = vunpack.c.l.b16 %v2943
        %v3232 = vunpack.c.l.b16 %v2944
        %v3233 = vunpack.c.l.b16 %v2945
        %v3234 = vunpack.c.l.b16 %v2946
        %v3235 = vunpack.c.l.b16 %v2947
        %v3236 = vunpack.c.l.b16 %v2948
        %v3237 = vunpack.c.l.b16 %v2949
        %v3238 = vunpack.c.l.b16 %v2950
        %v3239 = vunpack.c.l.b16 %v2951
        %v3240 = vunpack.c.l.b16 %v2952
        %v3241 = vunpack.c.l.b16 %v2953
        %v3242 = vunpack.c.l.b16 %v2954
        %v3243 = vunpack.c.l.b16 %v2955
        %v3244 = vunpack.c.l.b16 %v2956
        %v3245 = vunpack.c.l.b16 %v2957
        %v3246 = vunpack.c.l.b16 %v2958
        %v3247 = vunpack.c.l.b16 %v2959
        %v3248 = vunpack.c.l.b16 %v2960
        %v3249 = vunpack.c.l.b16 %v2961
        %v3250 = vunpack.c.l.b16 %v2962
        %v3251 = vunpack.c.l.b16 %v2963
        %v3252 = vunpack.c.l.b16 %v2964
        %v3253 = vunpack.c.l.b16 %v2965
        %v3254 = vunpack.c.l.b16 %v2966
        %v3255 = vunpack.c.l.b16 %v2967
        %v3256 = vunpack.c.l.b16 %v2968
        %v3257 = vunpack.c.l.b16 %v2969
        %v3258 = vunpack.c.l.b16 %v2970
        %v3259 = vunpack.c.l.b16 %v2971
        %v3260 = vunpack.c.l.b16 %v2972
        %v3261 = vunpack.c.l.b16 %v2973
        %v3262 = vunpack.c.l.b16 %v2974
        %v3263 = vunpack.c.l.b16 %v2975
        %v3264 = vunpack.c.l.b16 %v2976
        %v3265 = vunpack.c.l.b16 %v2977
        %v3266 = vunpack.c.l.b16 %v2978
        %v3267 = vunpack.c.l.b16 %v2979
        %v3268 = vunpack.c.l.b16 %v2980
        %v3269 = vunpack.c.l.b16 %v2981
        %v3270 = vunpack.c.l.b16 %v2982
        %v3271 = vunpack.c.l.b16 %v2983
        %v3272 = vunpack.c.l.b16 %v2984
        %v3273 = vunpack.c.l.b16 %v2985
        %v3274 = vunpack.c.l.b16 %v2986
        %v3275 = vunpack.c.l.b16 %v2987
        %v3276 = vunpack.c.l.b16 %v2988
        %v3277 = vunpack.c.l.b16 %v2989
        %v3278 = vunpack.c.l.b16 %v2990
        %v3279 = vunpack.c.l.b16 %v2991
        %v3280 = vunpack.c.l.b16 %v2992
        %v3281 = vunpack.c.l.b16 %v2993
        %v3282 = vunpack.c.l.b16 %v2994
        %v3283 = vunpack.c.l.b16 %v2995
        %v3284 = vunpack.c.l.b16 %v2996
        %v3285 = vunpack.c.l.b16 %v2997
        %v3286 = vunpack.c.l.b16 %v2998
        %v3287 = vunpack.c.l.b16 %v2999
        %v3288 = vunpack.c.l.b16 %v3000
        %v3289 = vunpack.c.l.b16 %v3001
        %v3290 = vunpack.c.l.b16 %v3002
        %v3291 = vunpack.c.l.b16 %v3003
        %v3292 = vunpack.c.l.b16 %v3004
        %v3293 = vunpack.c.l.b16 %v3005
        %v3294 = vunpack.c.l.b16 %v3006
        %v3295 = vunpack.c.l.b16 %v3007
        %v3296 = vunpack.c.l.b16 %v3008
        %v3297 = vunpack.c.l.b16 %v3009
        %v3298 = vunpack.c.l.b16 %v3010
        %v3299 = vunpack.c.l.b16 %v3011
        %v3300 = vunpack.c.l.b16 %v3012
        %v3301 = vpack.c.b16 %v3158, %v3157
        %v3302 = vpack.c.b16 %v3160, %v3159
        %v3303 = vpack.c.b16 %v3162, %v3161
        %v3304 = vpack.c.b16 %v3164, %v3163
        %v3305 = vpack.c.b16 %v3166, %v3165
        %v3306 = vpack.c.b16 %v3168, %v3167
        %v3307 = vpack.c.b16 %v3170, %v3169
        %v3308 = vpack.c.b16 %v3172, %v3171
        %v3309 = vpack.c.b16 %v3174, %v3173
        %v3310 = vpack.c.b16 %v3176, %v3175
        %v3311 = vpack.c.b16 %v3178, %v3177
        %v3312 = vpack.c.b16 %v3180, %v3179
        %v3313 = vpack.c.b16 %v3182, %v3181
        %v3314 = vpack.c.b16 %v3184, %v3183
        %v3315 = vpack.c.b16 %v3186, %v3185
        %v3316 = vpack.c.b16 %v3188, %v3187
        %v3317 = vpack.c.b16 %v3190, %v3189
        %v3318 = vpack.c.b16 %v3192, %v3191
        %v3319 = vpack.c.b16 %v3194, %v3193
        %v3320 = vpack.c.b16 %v3196, %v3195
        %v3321 = vpack.c.b16 %v3198, %v3197
        %v3322 = vpack.c.b16 %v3200, %v3199
        %v3323 = vpack.c.b16 %v3202, %v3201
        %v3324 = vpack.c.b16 %v3204, %v3203
        %v3325 = vpack.c.b16 %v3206, %v3205
        %v3326 = vpack.c.b16 %v3208, %v3207
        %v3327 = vpack.c.b16 %v3210, %v3209
        %v3328 = vpack.c.b16 %v3212, %v3211
        %v3329 = vpack.c.b16 %v3214, %v3213
        %v3330 = vpack.c.b16 %v3216, %v3215
        %v3331 = vpack.c.b16 %v3218, %v3217
        %v3332 = vpack.c.b16 %v3220, %v3219
        %v3333 = vpack.c.b16 %v3222, %v3221
        %v3334 = vpack.c.b16 %v3224, %v3223
        %v3335 = vpack.c.b16 %v3226, %v3225
        %v3336 = vpack.c.b16 %v3228, %v3227
        %v3337 = vpack.c.b16 %v3230, %v3229
        %v3338 = vpack.c.b16 %v3232, %v3231
        %v3339 = vpack.c.b16 %v3234, %v3233
        %v3340 = vpack.c.b16 %v3236, %v3235
        %v3341 = vpack.c.b16 %v3238, %v3237
        %v3342 = vpack.c.b16 %v3240, %v3239
        %v3343 = vpack.c.b16 %v3242, %v3241
        %v3344 = vpack.c.b16 %v3244, %v3243
        %v3345 = vpack.c.b16 %v3246, %v3245
        %v3346 = vpack.c.b16 %v3248, %v3247
        %v3347 = vpack.c.b16 %v3250, %v3249
        %v3348 = vpack.c.b16 %v3252, %v3251
        %v3349 = vpack.c.b16 %v3254, %v3253
        %v3350 = vpack.c.b16 %v3256, %v3255
        %v3351 = vpack.c.b16 %v3258, %v3257
        %v3352 = vpack.c.b16 %v3260, %v3259
        %v3353 = vpack.c.b16 %v3262, %v3261
        %v3354 = vpack.c.b16 %v3264, %v3263
        %v3355 = vpack.c.b16 %v3266, %v3265
        %v3356 = vpack.c.b16 %v3268, %v3267
        %v3357 = vpack.c.b16 %v3270, %v3269
        %v3358 = vpack.c.b16 %v3272, %v3271
        %v3359 = vpack.c.b16 %v3274, %v3273
        %v3360 = vpack.c.b16 %v3276, %v3275
        %v3361 = vpack.c.b16 %v3278, %v3277
        %v3362 = vpack.c.b16 %v3280, %v3279
        %v3363 = vpack.c.b16 %v3282, %v3281
        %v3364 = vpack.c.b16 %v3284, %v3283
        %v3365 = vpack.c.b16 %v3286, %v3285
        %v3366 = vpack.c.b16 %v3288, %v3287
        %v3367 = vpack.c.b16 %v3290, %v3289
        %v3368 = vpack.c.b16 %v3292, %v3291
        %v3369 = vpack.c.b16 %v3294, %v3293
        %v3370 = vpack.c.b16 %v3296, %v3295
        %v3371 = vpack.c.b16 %v3298, %v3297
        %v3372 = vpack.c.b16 %v3300, %v3299
        %3445 = vmatpush.bf16.msra.mxu0 %v3308
        %3446 = vmatpush.bf16.msra.mxu0 %v3307
        %3447 = vmatpush.bf16.msra.mxu0 %v3306
        %3448 = vmatpush.bf16.msra.mxu0 %v3305
        %3449 = vmatpush.bf16.msra.mxu0 %v3304
        %3450 = vmatpush.bf16.msra.mxu0 %v3303
        %3451 = vmatpush.bf16.msra.mxu0 %v3302
        %3452 = vmatpush.bf16.msra.mxu0 %v3301
        %3453 = vmatmul.bf16.gmra.mxu0 %v2725
        %v3454 = vpop.f32.mrf.mxu0
        %v3455 = vadd.f32 0.0, %v3454
        %v3456 = vpop.f32.mrf.mxu0
        %v3457 = vadd.f32 0.0, %v3456
        %3458 = vmatmul.bf16.gmra.mxu0 %v2734
        %v3459 = vpop.f32.mrf.mxu0
        %v3460 = vadd.f32 0.0, %v3459
        %v3461 = vpop.f32.mrf.mxu0
        %v3462 = vadd.f32 0.0, %v3461
        %3463 = vmatmul.bf16.gmra.mxu0 %v2743
        %v3464 = vpop.f32.mrf.mxu0
        %v3465 = vadd.f32 0.0, %v3464
        %v3466 = vpop.f32.mrf.mxu0
        %v3467 = vadd.f32 0.0, %v3466
        %3468 = vmatmul.bf16.gmra.mxu0 %v2752
        %v3469 = vpop.f32.mrf.mxu0
        %v3470 = vadd.f32 0.0, %v3469
        %v3471 = vpop.f32.mrf.mxu0
        %v3472 = vadd.f32 0.0, %v3471
        %3473 = vmatmul.bf16.gmra.mxu0 %v2761
        %v3474 = vpop.f32.mrf.mxu0
        %v3475 = vadd.f32 0.0, %v3474
        %v3476 = vpop.f32.mrf.mxu0
        %v3477 = vadd.f32 0.0, %v3476
        %3478 = vmatmul.bf16.gmra.mxu0 %v2770
        %v3479 = vpop.f32.mrf.mxu0
        %v3480 = vadd.f32 0.0, %v3479
        %v3481 = vpop.f32.mrf.mxu0
        %v3482 = vadd.f32 0.0, %v3481
        %3483 = vmatmul.bf16.gmra.mxu0 %v2779
        %v3484 = vpop.f32.mrf.mxu0
        %v3485 = vadd.f32 0.0, %v3484
        %v3486 = vpop.f32.mrf.mxu0
        %v3487 = vadd.f32 0.0, %v3486
        %3488 = vmatmul.bf16.gmra.mxu0 %v2788
        %v3489 = vpop.f32.mrf.mxu0
        %v3490 = vadd.f32 0.0, %v3489
        %v3491 = vpop.f32.mrf.mxu0
        %v3492 = vadd.f32 0.0, %v3491
        %3493 = vmatmul.bf16.gmra.mxu0 %v2797
        %v3494 = vpop.f32.mrf.mxu0
        %v3495 = vadd.f32 0.0, %v3494
        %v3496 = vpop.f32.mrf.mxu0
        %v3497 = vadd.f32 0.0, %v3496
        %3498 = vmatmul.bf16.gmra.mxu0 %v2806
        %v3499 = vpop.f32.mrf.mxu0
        %v3500 = vadd.f32 0.0, %v3499
        %v3501 = vpop.f32.mrf.mxu0
        %v3502 = vadd.f32 0.0, %v3501
        %3503 = vmatmul.bf16.gmra.mxu0 %v2815
        %v3504 = vpop.f32.mrf.mxu0
        %v3505 = vadd.f32 0.0, %v3504
        %v3506 = vpop.f32.mrf.mxu0
        %v3507 = vadd.f32 0.0, %v3506
        %3508 = vmatmul.bf16.gmra.mxu0 %v2824
        %v3509 = vpop.f32.mrf.mxu0
        %v3510 = vadd.f32 0.0, %v3509
        %v3511 = vpop.f32.mrf.mxu0
        %v3512 = vadd.f32 0.0, %v3511
        %3513 = vmatmul.bf16.gmra.mxu0 %v2833
        %v3514 = vpop.f32.mrf.mxu0
        %v3515 = vadd.f32 0.0, %v3514
        %v3516 = vpop.f32.mrf.mxu0
        %v3517 = vadd.f32 0.0, %v3516
        %3518 = vmatmul.bf16.gmra.mxu0 %v2842
        %v3519 = vpop.f32.mrf.mxu0
        %v3520 = vadd.f32 0.0, %v3519
        %v3521 = vpop.f32.mrf.mxu0
        %v3522 = vadd.f32 0.0, %v3521
        %3523 = vmatmul.bf16.gmra.mxu0 %v2851
        %v3524 = vpop.f32.mrf.mxu0
        %v3525 = vadd.f32 0.0, %v3524
        %v3526 = vpop.f32.mrf.mxu0
        %v3527 = vadd.f32 0.0, %v3526
        %3528 = vmatmul.bf16.gmra.mxu0 %v2860
        %v3529 = vpop.f32.mrf.mxu0
        %v3530 = vadd.f32 0.0, %v3529
        %v3531 = vpop.f32.mrf.mxu0
        %v3532 = vadd.f32 0.0, %v3531
        %3533 = vdwg.mxu0
        %3534 = vmatpush.bf16.msra.mxu0 %v3316
        %3535 = vmatpush.bf16.msra.mxu0 %v3315
        %3536 = vmatpush.bf16.msra.mxu0 %v3314
        %3537 = vmatpush.bf16.msra.mxu0 %v3313
        %3538 = vmatpush.bf16.msra.mxu0 %v3312
        %3539 = vmatpush.bf16.msra.mxu0 %v3311
        %3540 = vmatpush.bf16.msra.mxu0 %v3310
        %3541 = vmatpush.bf16.msra.mxu0 %v3309
        %3542 = vmatmul.bf16.gmra.mxu0 %v2726
        %v3543 = vpop.f32.mrf.mxu0
        %v3544 = vadd.f32 %v3455, %v3543
        %v3545 = vpop.f32.mrf.mxu0
        %v3546 = vadd.f32 %v3457, %v3545
        %3547 = vmatmul.bf16.gmra.mxu0 %v2735
        %v3548 = vpop.f32.mrf.mxu0
        %v3549 = vadd.f32 %v3460, %v3548
        %v3550 = vpop.f32.mrf.mxu0
        %v3551 = vadd.f32 %v3462, %v3550
        %3552 = vmatmul.bf16.gmra.mxu0 %v2744
        %v3553 = vpop.f32.mrf.mxu0
        %v3554 = vadd.f32 %v3465, %v3553
        %v3555 = vpop.f32.mrf.mxu0
        %v3556 = vadd.f32 %v3467, %v3555
        %3557 = vmatmul.bf16.gmra.mxu0 %v2753
        %v3558 = vpop.f32.mrf.mxu0
        %v3559 = vadd.f32 %v3470, %v3558
        %v3560 = vpop.f32.mrf.mxu0
        %v3561 = vadd.f32 %v3472, %v3560
        %3562 = vmatmul.bf16.gmra.mxu0 %v2762
        %v3563 = vpop.f32.mrf.mxu0
        %v3564 = vadd.f32 %v3475, %v3563
        %v3565 = vpop.f32.mrf.mxu0
        %v3566 = vadd.f32 %v3477, %v3565
        %3567 = vmatmul.bf16.gmra.mxu0 %v2771
        %v3568 = vpop.f32.mrf.mxu0
        %v3569 = vadd.f32 %v3480, %v3568
        %v3570 = vpop.f32.mrf.mxu0
        %v3571 = vadd.f32 %v3482, %v3570
        %3572 = vmatmul.bf16.gmra.mxu0 %v2780
        %v3573 = vpop.f32.mrf.mxu0
        %v3574 = vadd.f32 %v3485, %v3573
        %v3575 = vpop.f32.mrf.mxu0
        %v3576 = vadd.f32 %v3487, %v3575
        %3577 = vmatmul.bf16.gmra.mxu0 %v2789
        %v3578 = vpop.f32.mrf.mxu0
        %v3579 = vadd.f32 %v3490, %v3578
        %v3580 = vpop.f32.mrf.mxu0
        %v3581 = vadd.f32 %v3492, %v3580
        %3582 = vmatmul.bf16.gmra.mxu0 %v2798
        %v3583 = vpop.f32.mrf.mxu0
        %v3584 = vadd.f32 %v3495, %v3583
        %v3585 = vpop.f32.mrf.mxu0
        %v3586 = vadd.f32 %v3497, %v3585
        %3587 = vmatmul.bf16.gmra.mxu0 %v2807
        %v3588 = vpop.f32.mrf.mxu0
        %v3589 = vadd.f32 %v3500, %v3588
        %v3590 = vpop.f32.mrf.mxu0
        %v3591 = vadd.f32 %v3502, %v3590
        %3592 = vmatmul.bf16.gmra.mxu0 %v2816
        %v3593 = vpop.f32.mrf.mxu0
        %v3594 = vadd.f32 %v3505, %v3593
        %v3595 = vpop.f32.mrf.mxu0
        %v3596 = vadd.f32 %v3507, %v3595
        %3597 = vmatmul.bf16.gmra.mxu0 %v2825
        %v3598 = vpop.f32.mrf.mxu0
        %v3599 = vadd.f32 %v3510, %v3598
        %v3600 = vpop.f32.mrf.mxu0
        %v3601 = vadd.f32 %v3512, %v3600
        %3602 = vmatmul.bf16.gmra.mxu0 %v2834
        %v3603 = vpop.f32.mrf.mxu0
        %v3604 = vadd.f32 %v3515, %v3603
        %v3605 = vpop.f32.mrf.mxu0
        %v3606 = vadd.f32 %v3517, %v3605
        %3607 = vmatmul.bf16.gmra.mxu0 %v2843
        %v3608 = vpop.f32.mrf.mxu0
        %v3609 = vadd.f32 %v3520, %v3608
        %v3610 = vpop.f32.mrf.mxu0
        %v3611 = vadd.f32 %v3522, %v3610
        %3612 = vmatmul.bf16.gmra.mxu0 %v2852
        %v3613 = vpop.f32.mrf.mxu0
        %v3614 = vadd.f32 %v3525, %v3613
        %v3615 = vpop.f32.mrf.mxu0
        %v3616 = vadd.f32 %v3527, %v3615
        %3617 = vmatmul.bf16.gmra.mxu0 %v2861
        %v3618 = vpop.f32.mrf.mxu0
        %v3619 = vadd.f32 %v3530, %v3618
        %v3620 = vpop.f32.mrf.mxu0
        %v3621 = vadd.f32 %v3532, %v3620
        %3622 = vdwg.mxu0
        %3623 = vmatpush.bf16.msra.mxu0 %v3324
        %3624 = vmatpush.bf16.msra.mxu0 %v3323
        %3625 = vmatpush.bf16.msra.mxu0 %v3322
        %3626 = vmatpush.bf16.msra.mxu0 %v3321
        %3627 = vmatpush.bf16.msra.mxu0 %v3320
        %3628 = vmatpush.bf16.msra.mxu0 %v3319
        %3629 = vmatpush.bf16.msra.mxu0 %v3318
        %3630 = vmatpush.bf16.msra.mxu0 %v3317
        %3631 = vmatmul.bf16.gmra.mxu0 %v2727
        %v3632 = vpop.f32.mrf.mxu0
        %v3633 = vadd.f32 %v3544, %v3632
        %v3634 = vpop.f32.mrf.mxu0
        %v3635 = vadd.f32 %v3546, %v3634
        %3636 = vmatmul.bf16.gmra.mxu0 %v2736
        %v3637 = vpop.f32.mrf.mxu0
        %v3638 = vadd.f32 %v3549, %v3637
        %v3639 = vpop.f32.mrf.mxu0
        %v3640 = vadd.f32 %v3551, %v3639
        %3641 = vmatmul.bf16.gmra.mxu0 %v2745
        %v3642 = vpop.f32.mrf.mxu0
        %v3643 = vadd.f32 %v3554, %v3642
        %v3644 = vpop.f32.mrf.mxu0
        %v3645 = vadd.f32 %v3556, %v3644
        %3646 = vmatmul.bf16.gmra.mxu0 %v2754
        %v3647 = vpop.f32.mrf.mxu0
        %v3648 = vadd.f32 %v3559, %v3647
        %v3649 = vpop.f32.mrf.mxu0
        %v3650 = vadd.f32 %v3561, %v3649
        %3651 = vmatmul.bf16.gmra.mxu0 %v2763
        %v3652 = vpop.f32.mrf.mxu0
        %v3653 = vadd.f32 %v3564, %v3652
        %v3654 = vpop.f32.mrf.mxu0
        %v3655 = vadd.f32 %v3566, %v3654
        %3656 = vmatmul.bf16.gmra.mxu0 %v2772
        %v3657 = vpop.f32.mrf.mxu0
        %v3658 = vadd.f32 %v3569, %v3657
        %v3659 = vpop.f32.mrf.mxu0
        %v3660 = vadd.f32 %v3571, %v3659
        %3661 = vmatmul.bf16.gmra.mxu0 %v2781
        %v3662 = vpop.f32.mrf.mxu0
        %v3663 = vadd.f32 %v3574, %v3662
        %v3664 = vpop.f32.mrf.mxu0
        %v3665 = vadd.f32 %v3576, %v3664
        %3666 = vmatmul.bf16.gmra.mxu0 %v2790
        %v3667 = vpop.f32.mrf.mxu0
        %v3668 = vadd.f32 %v3579, %v3667
        %v3669 = vpop.f32.mrf.mxu0
        %v3670 = vadd.f32 %v3581, %v3669
        %3671 = vmatmul.bf16.gmra.mxu0 %v2799
        %v3672 = vpop.f32.mrf.mxu0
        %v3673 = vadd.f32 %v3584, %v3672
        %v3674 = vpop.f32.mrf.mxu0
        %v3675 = vadd.f32 %v3586, %v3674
        %3676 = vmatmul.bf16.gmra.mxu0 %v2808
        %v3677 = vpop.f32.mrf.mxu0
        %v3678 = vadd.f32 %v3589, %v3677
        %v3679 = vpop.f32.mrf.mxu0
        %v3680 = vadd.f32 %v3591, %v3679
        %3681 = vmatmul.bf16.gmra.mxu0 %v2817
        %v3682 = vpop.f32.mrf.mxu0
        %v3683 = vadd.f32 %v3594, %v3682
        %v3684 = vpop.f32.mrf.mxu0
        %v3685 = vadd.f32 %v3596, %v3684
        %3686 = vmatmul.bf16.gmra.mxu0 %v2826
        %v3687 = vpop.f32.mrf.mxu0
        %v3688 = vadd.f32 %v3599, %v3687
        %v3689 = vpop.f32.mrf.mxu0
        %v3690 = vadd.f32 %v3601, %v3689
        %3691 = vmatmul.bf16.gmra.mxu0 %v2835
        %v3692 = vpop.f32.mrf.mxu0
        %v3693 = vadd.f32 %v3604, %v3692
        %v3694 = vpop.f32.mrf.mxu0
        %v3695 = vadd.f32 %v3606, %v3694
        %3696 = vmatmul.bf16.gmra.mxu0 %v2844
        %v3697 = vpop.f32.mrf.mxu0
        %v3698 = vadd.f32 %v3609, %v3697
        %v3699 = vpop.f32.mrf.mxu0
        %v3700 = vadd.f32 %v3611, %v3699
        %3701 = vmatmul.bf16.gmra.mxu0 %v2853
        %v3702 = vpop.f32.mrf.mxu0
        %v3703 = vadd.f32 %v3614, %v3702
        %v3704 = vpop.f32.mrf.mxu0
        %v3705 = vadd.f32 %v3616, %v3704
        %3706 = vmatmul.bf16.gmra.mxu0 %v2862
        %v3707 = vpop.f32.mrf.mxu0
        %v3708 = vadd.f32 %v3619, %v3707
        %v3709 = vpop.f32.mrf.mxu0
        %v3710 = vadd.f32 %v3621, %v3709
        %3711 = vdwg.mxu0
        %3712 = vmatpush.bf16.msra.mxu0 %v3332
        %3713 = vmatpush.bf16.msra.mxu0 %v3331
        %3714 = vmatpush.bf16.msra.mxu0 %v3330
        %3715 = vmatpush.bf16.msra.mxu0 %v3329
        %3716 = vmatpush.bf16.msra.mxu0 %v3328
        %3717 = vmatpush.bf16.msra.mxu0 %v3327
        %3718 = vmatpush.bf16.msra.mxu0 %v3326
        %3719 = vmatpush.bf16.msra.mxu0 %v3325
        %3720 = vmatmul.bf16.gmra.mxu0 %v2728
        %v3721 = vpop.f32.mrf.mxu0
        %v3722 = vadd.f32 %v3633, %v3721
        %v3723 = vpop.f32.mrf.mxu0
        %v3724 = vadd.f32 %v3635, %v3723
        %3725 = vmatmul.bf16.gmra.mxu0 %v2737
        %v3726 = vpop.f32.mrf.mxu0
        %v3727 = vadd.f32 %v3638, %v3726
        %v3728 = vpop.f32.mrf.mxu0
        %v3729 = vadd.f32 %v3640, %v3728
        %3730 = vmatmul.bf16.gmra.mxu0 %v2746
        %v3731 = vpop.f32.mrf.mxu0
        %v3732 = vadd.f32 %v3643, %v3731
        %v3733 = vpop.f32.mrf.mxu0
        %v3734 = vadd.f32 %v3645, %v3733
        %3735 = vmatmul.bf16.gmra.mxu0 %v2755
        %v3736 = vpop.f32.mrf.mxu0
        %v3737 = vadd.f32 %v3648, %v3736
        %v3738 = vpop.f32.mrf.mxu0
        %v3739 = vadd.f32 %v3650, %v3738
        %3740 = vmatmul.bf16.gmra.mxu0 %v2764
        %v3741 = vpop.f32.mrf.mxu0
        %v3742 = vadd.f32 %v3653, %v3741
        %v3743 = vpop.f32.mrf.mxu0
        %v3744 = vadd.f32 %v3655, %v3743
        %3745 = vmatmul.bf16.gmra.mxu0 %v2773
        %v3746 = vpop.f32.mrf.mxu0
        %v3747 = vadd.f32 %v3658, %v3746
        %v3748 = vpop.f32.mrf.mxu0
        %v3749 = vadd.f32 %v3660, %v3748
        %3750 = vmatmul.bf16.gmra.mxu0 %v2782
        %v3751 = vpop.f32.mrf.mxu0
        %v3752 = vadd.f32 %v3663, %v3751
        %v3753 = vpop.f32.mrf.mxu0
        %v3754 = vadd.f32 %v3665, %v3753
        %3755 = vmatmul.bf16.gmra.mxu0 %v2791
        %v3756 = vpop.f32.mrf.mxu0
        %v3757 = vadd.f32 %v3668, %v3756
        %v3758 = vpop.f32.mrf.mxu0
        %v3759 = vadd.f32 %v3670, %v3758
        %3760 = vmatmul.bf16.gmra.mxu0 %v2800
        %v3761 = vpop.f32.mrf.mxu0
        %v3762 = vadd.f32 %v3673, %v3761
        %v3763 = vpop.f32.mrf.mxu0
        %v3764 = vadd.f32 %v3675, %v3763
        %3765 = vmatmul.bf16.gmra.mxu0 %v2809
        %v3766 = vpop.f32.mrf.mxu0
        %v3767 = vadd.f32 %v3678, %v3766
        %v3768 = vpop.f32.mrf.mxu0
        %v3769 = vadd.f32 %v3680, %v3768
        %3770 = vmatmul.bf16.gmra.mxu0 %v2818
        %v3771 = vpop.f32.mrf.mxu0
        %v3772 = vadd.f32 %v3683, %v3771
        %v3773 = vpop.f32.mrf.mxu0
        %v3774 = vadd.f32 %v3685, %v3773
        %3775 = vmatmul.bf16.gmra.mxu0 %v2827
        %v3776 = vpop.f32.mrf.mxu0
        %v3777 = vadd.f32 %v3688, %v3776
        %v3778 = vpop.f32.mrf.mxu0
        %v3779 = vadd.f32 %v3690, %v3778
        %3780 = vmatmul.bf16.gmra.mxu0 %v2836
        %v3781 = vpop.f32.mrf.mxu0
        %v3782 = vadd.f32 %v3693, %v3781
        %v3783 = vpop.f32.mrf.mxu0
        %v3784 = vadd.f32 %v3695, %v3783
        %3785 = vmatmul.bf16.gmra.mxu0 %v2845
        %v3786 = vpop.f32.mrf.mxu0
        %v3787 = vadd.f32 %v3698, %v3786
        %v3788 = vpop.f32.mrf.mxu0
        %v3789 = vadd.f32 %v3700, %v3788
        %3790 = vmatmul.bf16.gmra.mxu0 %v2854
        %v3791 = vpop.f32.mrf.mxu0
        %v3792 = vadd.f32 %v3703, %v3791
        %v3793 = vpop.f32.mrf.mxu0
        %v3794 = vadd.f32 %v3705, %v3793
        %3795 = vmatmul.bf16.gmra.mxu0 %v2863
        %v3796 = vpop.f32.mrf.mxu0
        %v3797 = vadd.f32 %v3708, %v3796
        %v3798 = vpop.f32.mrf.mxu0
        %v3799 = vadd.f32 %v3710, %v3798
        %3800 = vdwg.mxu0
        %3801 = vmatpush.bf16.msra.mxu0 %v3340
        %3802 = vmatpush.bf16.msra.mxu0 %v3339
        %3803 = vmatpush.bf16.msra.mxu0 %v3338
        %3804 = vmatpush.bf16.msra.mxu0 %v3337
        %3805 = vmatpush.bf16.msra.mxu0 %v3336
        %3806 = vmatpush.bf16.msra.mxu0 %v3335
        %3807 = vmatpush.bf16.msra.mxu0 %v3334
        %3808 = vmatpush.bf16.msra.mxu0 %v3333
        %3809 = vmatmul.bf16.gmra.mxu0 %v2729
        %v3810 = vpop.f32.mrf.mxu0
        %v3811 = vadd.f32 %v3722, %v3810
        %v3812 = vpop.f32.mrf.mxu0
        %v3813 = vadd.f32 %v3724, %v3812
        %3814 = vmatmul.bf16.gmra.mxu0 %v2738
        %v3815 = vpop.f32.mrf.mxu0
        %v3816 = vadd.f32 %v3727, %v3815
        %v3817 = vpop.f32.mrf.mxu0
        %v3818 = vadd.f32 %v3729, %v3817
        %3819 = vmatmul.bf16.gmra.mxu0 %v2747
        %v3820 = vpop.f32.mrf.mxu0
        %v3821 = vadd.f32 %v3732, %v3820
        %v3822 = vpop.f32.mrf.mxu0
        %v3823 = vadd.f32 %v3734, %v3822
        %3824 = vmatmul.bf16.gmra.mxu0 %v2756
        %v3825 = vpop.f32.mrf.mxu0
        %v3826 = vadd.f32 %v3737, %v3825
        %v3827 = vpop.f32.mrf.mxu0
        %v3828 = vadd.f32 %v3739, %v3827
        %3829 = vmatmul.bf16.gmra.mxu0 %v2765
        %v3830 = vpop.f32.mrf.mxu0
        %v3831 = vadd.f32 %v3742, %v3830
        %v3832 = vpop.f32.mrf.mxu0
        %v3833 = vadd.f32 %v3744, %v3832
        %3834 = vmatmul.bf16.gmra.mxu0 %v2774
        %v3835 = vpop.f32.mrf.mxu0
        %v3836 = vadd.f32 %v3747, %v3835
        %v3837 = vpop.f32.mrf.mxu0
        %v3838 = vadd.f32 %v3749, %v3837
        %3839 = vmatmul.bf16.gmra.mxu0 %v2783
        %v3840 = vpop.f32.mrf.mxu0
        %v3841 = vadd.f32 %v3752, %v3840
        %v3842 = vpop.f32.mrf.mxu0
        %v3843 = vadd.f32 %v3754, %v3842
        %3844 = vmatmul.bf16.gmra.mxu0 %v2792
        %v3845 = vpop.f32.mrf.mxu0
        %v3846 = vadd.f32 %v3757, %v3845
        %v3847 = vpop.f32.mrf.mxu0
        %v3848 = vadd.f32 %v3759, %v3847
        %3849 = vmatmul.bf16.gmra.mxu0 %v2801
        %v3850 = vpop.f32.mrf.mxu0
        %v3851 = vadd.f32 %v3762, %v3850
        %v3852 = vpop.f32.mrf.mxu0
        %v3853 = vadd.f32 %v3764, %v3852
        %3854 = vmatmul.bf16.gmra.mxu0 %v2810
        %v3855 = vpop.f32.mrf.mxu0
        %v3856 = vadd.f32 %v3767, %v3855
        %v3857 = vpop.f32.mrf.mxu0
        %v3858 = vadd.f32 %v3769, %v3857
        %3859 = vmatmul.bf16.gmra.mxu0 %v2819
        %v3860 = vpop.f32.mrf.mxu0
        %v3861 = vadd.f32 %v3772, %v3860
        %v3862 = vpop.f32.mrf.mxu0
        %v3863 = vadd.f32 %v3774, %v3862
        %3864 = vmatmul.bf16.gmra.mxu0 %v2828
        %v3865 = vpop.f32.mrf.mxu0
        %v3866 = vadd.f32 %v3777, %v3865
        %v3867 = vpop.f32.mrf.mxu0
        %v3868 = vadd.f32 %v3779, %v3867
        %3869 = vmatmul.bf16.gmra.mxu0 %v2837
        %v3870 = vpop.f32.mrf.mxu0
        %v3871 = vadd.f32 %v3782, %v3870
        %v3872 = vpop.f32.mrf.mxu0
        %v3873 = vadd.f32 %v3784, %v3872
        %3874 = vmatmul.bf16.gmra.mxu0 %v2846
        %v3875 = vpop.f32.mrf.mxu0
        %v3876 = vadd.f32 %v3787, %v3875
        %v3877 = vpop.f32.mrf.mxu0
        %v3878 = vadd.f32 %v3789, %v3877
        %3879 = vmatmul.bf16.gmra.mxu0 %v2855
        %v3880 = vpop.f32.mrf.mxu0
        %v3881 = vadd.f32 %v3792, %v3880
        %v3882 = vpop.f32.mrf.mxu0
        %v3883 = vadd.f32 %v3794, %v3882
        %3884 = vmatmul.bf16.gmra.mxu0 %v2864
        %v3885 = vpop.f32.mrf.mxu0
        %v3886 = vadd.f32 %v3797, %v3885
        %v3887 = vpop.f32.mrf.mxu0
        %v3888 = vadd.f32 %v3799, %v3887
        %3889 = vdwg.mxu0
        %3890 = vmatpush.bf16.msra.mxu0 %v3348
        %3891 = vmatpush.bf16.msra.mxu0 %v3347
        %3892 = vmatpush.bf16.msra.mxu0 %v3346
        %3893 = vmatpush.bf16.msra.mxu0 %v3345
        %3894 = vmatpush.bf16.msra.mxu0 %v3344
        %3895 = vmatpush.bf16.msra.mxu0 %v3343
        %3896 = vmatpush.bf16.msra.mxu0 %v3342
        %3897 = vmatpush.bf16.msra.mxu0 %v3341
        %3898 = vmatmul.bf16.gmra.mxu0 %v2730
        %v3899 = vpop.f32.mrf.mxu0
        %v3900 = vadd.f32 %v3811, %v3899
        %v3901 = vpop.f32.mrf.mxu0
        %v3902 = vadd.f32 %v3813, %v3901
        %3903 = vmatmul.bf16.gmra.mxu0 %v2739
        %v3904 = vpop.f32.mrf.mxu0
        %v3905 = vadd.f32 %v3816, %v3904
        %v3906 = vpop.f32.mrf.mxu0
        %v3907 = vadd.f32 %v3818, %v3906
        %3908 = vmatmul.bf16.gmra.mxu0 %v2748
        %v3909 = vpop.f32.mrf.mxu0
        %v3910 = vadd.f32 %v3821, %v3909
        %v3911 = vpop.f32.mrf.mxu0
        %v3912 = vadd.f32 %v3823, %v3911
        %3913 = vmatmul.bf16.gmra.mxu0 %v2757
        %v3914 = vpop.f32.mrf.mxu0
        %v3915 = vadd.f32 %v3826, %v3914
        %v3916 = vpop.f32.mrf.mxu0
        %v3917 = vadd.f32 %v3828, %v3916
        %3918 = vmatmul.bf16.gmra.mxu0 %v2766
        %v3919 = vpop.f32.mrf.mxu0
        %v3920 = vadd.f32 %v3831, %v3919
        %v3921 = vpop.f32.mrf.mxu0
        %v3922 = vadd.f32 %v3833, %v3921
        %3923 = vmatmul.bf16.gmra.mxu0 %v2775
        %v3924 = vpop.f32.mrf.mxu0
        %v3925 = vadd.f32 %v3836, %v3924
        %v3926 = vpop.f32.mrf.mxu0
        %v3927 = vadd.f32 %v3838, %v3926
        %3928 = vmatmul.bf16.gmra.mxu0 %v2784
        %v3929 = vpop.f32.mrf.mxu0
        %v3930 = vadd.f32 %v3841, %v3929
        %v3931 = vpop.f32.mrf.mxu0
        %v3932 = vadd.f32 %v3843, %v3931
        %3933 = vmatmul.bf16.gmra.mxu0 %v2793
        %v3934 = vpop.f32.mrf.mxu0
        %v3935 = vadd.f32 %v3846, %v3934
        %v3936 = vpop.f32.mrf.mxu0
        %v3937 = vadd.f32 %v3848, %v3936
        %3938 = vmatmul.bf16.gmra.mxu0 %v2802
        %v3939 = vpop.f32.mrf.mxu0
        %v3940 = vadd.f32 %v3851, %v3939
        %v3941 = vpop.f32.mrf.mxu0
        %v3942 = vadd.f32 %v3853, %v3941
        %3943 = vmatmul.bf16.gmra.mxu0 %v2811
        %v3944 = vpop.f32.mrf.mxu0
        %v3945 = vadd.f32 %v3856, %v3944
        %v3946 = vpop.f32.mrf.mxu0
        %v3947 = vadd.f32 %v3858, %v3946
        %3948 = vmatmul.bf16.gmra.mxu0 %v2820
        %v3949 = vpop.f32.mrf.mxu0
        %v3950 = vadd.f32 %v3861, %v3949
        %v3951 = vpop.f32.mrf.mxu0
        %v3952 = vadd.f32 %v3863, %v3951
        %3953 = vmatmul.bf16.gmra.mxu0 %v2829
        %v3954 = vpop.f32.mrf.mxu0
        %v3955 = vadd.f32 %v3866, %v3954
        %v3956 = vpop.f32.mrf.mxu0
        %v3957 = vadd.f32 %v3868, %v3956
        %3958 = vmatmul.bf16.gmra.mxu0 %v2838
        %v3959 = vpop.f32.mrf.mxu0
        %v3960 = vadd.f32 %v3871, %v3959
        %v3961 = vpop.f32.mrf.mxu0
        %v3962 = vadd.f32 %v3873, %v3961
        %3963 = vmatmul.bf16.gmra.mxu0 %v2847
        %v3964 = vpop.f32.mrf.mxu0
        %v3965 = vadd.f32 %v3876, %v3964
        %v3966 = vpop.f32.mrf.mxu0
        %v3967 = vadd.f32 %v3878, %v3966
        %3968 = vmatmul.bf16.gmra.mxu0 %v2856
        %v3969 = vpop.f32.mrf.mxu0
        %v3970 = vadd.f32 %v3881, %v3969
        %v3971 = vpop.f32.mrf.mxu0
        %v3972 = vadd.f32 %v3883, %v3971
        %3973 = vmatmul.bf16.gmra.mxu0 %v2865
        %v3974 = vpop.f32.mrf.mxu0
        %v3975 = vadd.f32 %v3886, %v3974
        %v3976 = vpop.f32.mrf.mxu0
        %v3977 = vadd.f32 %v3888, %v3976
        %3978 = vdwg.mxu0
        %3979 = vmatpush.bf16.msra.mxu0 %v3356
        %3980 = vmatpush.bf16.msra.mxu0 %v3355
        %3981 = vmatpush.bf16.msra.mxu0 %v3354
        %3982 = vmatpush.bf16.msra.mxu0 %v3353
        %3983 = vmatpush.bf16.msra.mxu0 %v3352
        %3984 = vmatpush.bf16.msra.mxu0 %v3351
        %3985 = vmatpush.bf16.msra.mxu0 %v3350
        %3986 = vmatpush.bf16.msra.mxu0 %v3349
        %3987 = vmatmul.bf16.gmra.mxu0 %v2731
        %v3988 = vpop.f32.mrf.mxu0
        %v3989 = vadd.f32 %v3900, %v3988
        %v3990 = vpop.f32.mrf.mxu0
        %v3991 = vadd.f32 %v3902, %v3990
        %3992 = vmatmul.bf16.gmra.mxu0 %v2740
        %v3993 = vpop.f32.mrf.mxu0
        %v3994 = vadd.f32 %v3905, %v3993
        %v3995 = vpop.f32.mrf.mxu0
        %v3996 = vadd.f32 %v3907, %v3995
        %3997 = vmatmul.bf16.gmra.mxu0 %v2749
        %v3998 = vpop.f32.mrf.mxu0
        %v3999 = vadd.f32 %v3910, %v3998
        %v4000 = vpop.f32.mrf.mxu0
        %v4001 = vadd.f32 %v3912, %v4000
        %4002 = vmatmul.bf16.gmra.mxu0 %v2758
        %v4003 = vpop.f32.mrf.mxu0
        %v4004 = vadd.f32 %v3915, %v4003
        %v4005 = vpop.f32.mrf.mxu0
        %v4006 = vadd.f32 %v3917, %v4005
        %4007 = vmatmul.bf16.gmra.mxu0 %v2767
        %v4008 = vpop.f32.mrf.mxu0
        %v4009 = vadd.f32 %v3920, %v4008
        %v4010 = vpop.f32.mrf.mxu0
        %v4011 = vadd.f32 %v3922, %v4010
        %4012 = vmatmul.bf16.gmra.mxu0 %v2776
        %v4013 = vpop.f32.mrf.mxu0
        %v4014 = vadd.f32 %v3925, %v4013
        %v4015 = vpop.f32.mrf.mxu0
        %v4016 = vadd.f32 %v3927, %v4015
        %4017 = vmatmul.bf16.gmra.mxu0 %v2785
        %v4018 = vpop.f32.mrf.mxu0
        %v4019 = vadd.f32 %v3930, %v4018
        %v4020 = vpop.f32.mrf.mxu0
        %v4021 = vadd.f32 %v3932, %v4020
        %4022 = vmatmul.bf16.gmra.mxu0 %v2794
        %v4023 = vpop.f32.mrf.mxu0
        %v4024 = vadd.f32 %v3935, %v4023
        %v4025 = vpop.f32.mrf.mxu0
        %v4026 = vadd.f32 %v3937, %v4025
        %4027 = vmatmul.bf16.gmra.mxu0 %v2803
        %v4028 = vpop.f32.mrf.mxu0
        %v4029 = vadd.f32 %v3940, %v4028
        %v4030 = vpop.f32.mrf.mxu0
        %v4031 = vadd.f32 %v3942, %v4030
        %4032 = vmatmul.bf16.gmra.mxu0 %v2812
        %v4033 = vpop.f32.mrf.mxu0
        %v4034 = vadd.f32 %v3945, %v4033
        %v4035 = vpop.f32.mrf.mxu0
        %v4036 = vadd.f32 %v3947, %v4035
        %4037 = vmatmul.bf16.gmra.mxu0 %v2821
        %v4038 = vpop.f32.mrf.mxu0
        %v4039 = vadd.f32 %v3950, %v4038
        %v4040 = vpop.f32.mrf.mxu0
        %v4041 = vadd.f32 %v3952, %v4040
        %4042 = vmatmul.bf16.gmra.mxu0 %v2830
        %v4043 = vpop.f32.mrf.mxu0
        %v4044 = vadd.f32 %v3955, %v4043
        %v4045 = vpop.f32.mrf.mxu0
        %v4046 = vadd.f32 %v3957, %v4045
        %4047 = vmatmul.bf16.gmra.mxu0 %v2839
        %v4048 = vpop.f32.mrf.mxu0
        %v4049 = vadd.f32 %v3960, %v4048
        %v4050 = vpop.f32.mrf.mxu0
        %v4051 = vadd.f32 %v3962, %v4050
        %4052 = vmatmul.bf16.gmra.mxu0 %v2848
        %v4053 = vpop.f32.mrf.mxu0
        %v4054 = vadd.f32 %v3965, %v4053
        %v4055 = vpop.f32.mrf.mxu0
        %v4056 = vadd.f32 %v3967, %v4055
        %4057 = vmatmul.bf16.gmra.mxu0 %v2857
        %v4058 = vpop.f32.mrf.mxu0
        %v4059 = vadd.f32 %v3970, %v4058
        %v4060 = vpop.f32.mrf.mxu0
        %v4061 = vadd.f32 %v3972, %v4060
        %4062 = vmatmul.bf16.gmra.mxu0 %v2866
        %v4063 = vpop.f32.mrf.mxu0
        %v4064 = vadd.f32 %v3975, %v4063
        %v4065 = vpop.f32.mrf.mxu0
        %v4066 = vadd.f32 %v3977, %v4065
        %4067 = vdwg.mxu0
        %4068 = vmatpush.bf16.msra.mxu0 %v3364
        %4069 = vmatpush.bf16.msra.mxu0 %v3363
        %4070 = vmatpush.bf16.msra.mxu0 %v3362
        %4071 = vmatpush.bf16.msra.mxu0 %v3361
        %4072 = vmatpush.bf16.msra.mxu0 %v3360
        %4073 = vmatpush.bf16.msra.mxu0 %v3359
        %4074 = vmatpush.bf16.msra.mxu0 %v3358
        %4075 = vmatpush.bf16.msra.mxu0 %v3357
        %4076 = vmatmul.bf16.gmra.mxu0 %v2732
        %v4077 = vpop.f32.mrf.mxu0
        %v4078 = vadd.f32 %v3989, %v4077
        %v4079 = vpop.f32.mrf.mxu0
        %v4080 = vadd.f32 %v3991, %v4079
        %4081 = vmatmul.bf16.gmra.mxu0 %v2741
        %v4082 = vpop.f32.mrf.mxu0
        %v4083 = vadd.f32 %v3994, %v4082
        %v4084 = vpop.f32.mrf.mxu0
        %v4085 = vadd.f32 %v3996, %v4084
        %4086 = vmatmul.bf16.gmra.mxu0 %v2750
        %v4087 = vpop.f32.mrf.mxu0
        %v4088 = vadd.f32 %v3999, %v4087
        %v4089 = vpop.f32.mrf.mxu0
        %v4090 = vadd.f32 %v4001, %v4089
        %4091 = vmatmul.bf16.gmra.mxu0 %v2759
        %v4092 = vpop.f32.mrf.mxu0
        %v4093 = vadd.f32 %v4004, %v4092
        %v4094 = vpop.f32.mrf.mxu0
        %v4095 = vadd.f32 %v4006, %v4094
        %4096 = vmatmul.bf16.gmra.mxu0 %v2768
        %v4097 = vpop.f32.mrf.mxu0
        %v4098 = vadd.f32 %v4009, %v4097
        %v4099 = vpop.f32.mrf.mxu0
        %v4100 = vadd.f32 %v4011, %v4099
        %4101 = vmatmul.bf16.gmra.mxu0 %v2777
        %v4102 = vpop.f32.mrf.mxu0
        %v4103 = vadd.f32 %v4014, %v4102
        %v4104 = vpop.f32.mrf.mxu0
        %v4105 = vadd.f32 %v4016, %v4104
        %4106 = vmatmul.bf16.gmra.mxu0 %v2786
        %v4107 = vpop.f32.mrf.mxu0
        %v4108 = vadd.f32 %v4019, %v4107
        %v4109 = vpop.f32.mrf.mxu0
        %v4110 = vadd.f32 %v4021, %v4109
        %4111 = vmatmul.bf16.gmra.mxu0 %v2795
        %v4112 = vpop.f32.mrf.mxu0
        %v4113 = vadd.f32 %v4024, %v4112
        %v4114 = vpop.f32.mrf.mxu0
        %v4115 = vadd.f32 %v4026, %v4114
        %4116 = vmatmul.bf16.gmra.mxu0 %v2804
        %v4117 = vpop.f32.mrf.mxu0
        %v4118 = vadd.f32 %v4029, %v4117
        %v4119 = vpop.f32.mrf.mxu0
        %v4120 = vadd.f32 %v4031, %v4119
        %4121 = vmatmul.bf16.gmra.mxu0 %v2813
        %v4122 = vpop.f32.mrf.mxu0
        %v4123 = vadd.f32 %v4034, %v4122
        %v4124 = vpop.f32.mrf.mxu0
        %v4125 = vadd.f32 %v4036, %v4124
        %4126 = vmatmul.bf16.gmra.mxu0 %v2822
        %v4127 = vpop.f32.mrf.mxu0
        %v4128 = vadd.f32 %v4039, %v4127
        %v4129 = vpop.f32.mrf.mxu0
        %v4130 = vadd.f32 %v4041, %v4129
        %4131 = vmatmul.bf16.gmra.mxu0 %v2831
        %v4132 = vpop.f32.mrf.mxu0
        %v4133 = vadd.f32 %v4044, %v4132
        %v4134 = vpop.f32.mrf.mxu0
        %v4135 = vadd.f32 %v4046, %v4134
        %4136 = vmatmul.bf16.gmra.mxu0 %v2840
        %v4137 = vpop.f32.mrf.mxu0
        %v4138 = vadd.f32 %v4049, %v4137
        %v4139 = vpop.f32.mrf.mxu0
        %v4140 = vadd.f32 %v4051, %v4139
        %4141 = vmatmul.bf16.gmra.mxu0 %v2849
        %v4142 = vpop.f32.mrf.mxu0
        %v4143 = vadd.f32 %v4054, %v4142
        %v4144 = vpop.f32.mrf.mxu0
        %v4145 = vadd.f32 %v4056, %v4144
        %4146 = vmatmul.bf16.gmra.mxu0 %v2858
        %v4147 = vpop.f32.mrf.mxu0
        %v4148 = vadd.f32 %v4059, %v4147
        %v4149 = vpop.f32.mrf.mxu0
        %v4150 = vadd.f32 %v4061, %v4149
        %4151 = vmatmul.bf16.gmra.mxu0 %v2867
        %v4152 = vpop.f32.mrf.mxu0
        %v4153 = vadd.f32 %v4064, %v4152
        %v4154 = vpop.f32.mrf.mxu0
        %v4155 = vadd.f32 %v4066, %v4154
        %4156 = vdwg.mxu0
        %4157 = vmatpush.bf16.msra.mxu0 %v3372
        %4158 = vmatpush.bf16.msra.mxu0 %v3371
        %4159 = vmatpush.bf16.msra.mxu0 %v3370
        %4160 = vmatpush.bf16.msra.mxu0 %v3369
        %4161 = vmatpush.bf16.msra.mxu0 %v3368
        %4162 = vmatpush.bf16.msra.mxu0 %v3367
        %4163 = vmatpush.bf16.msra.mxu0 %v3366
        %4164 = vmatpush.bf16.msra.mxu0 %v3365
        %4165 = vmatmul.bf16.gmra.mxu0 %v2733
        %v4166 = vpop.f32.mrf.mxu0
        %v4167 = vadd.f32 %v4078, %v4166
        %v4168 = vpop.f32.mrf.mxu0
        %v4169 = vadd.f32 %v4080, %v4168
        %4170 = vmatmul.bf16.gmra.mxu0 %v2742
        %v4171 = vpop.f32.mrf.mxu0
        %v4172 = vadd.f32 %v4083, %v4171
        %v4173 = vpop.f32.mrf.mxu0
        %v4174 = vadd.f32 %v4085, %v4173
        %4175 = vmatmul.bf16.gmra.mxu0 %v2751
        %v4176 = vpop.f32.mrf.mxu0
        %v4177 = vadd.f32 %v4088, %v4176
        %v4178 = vpop.f32.mrf.mxu0
        %v4179 = vadd.f32 %v4090, %v4178
        %4180 = vmatmul.bf16.gmra.mxu0 %v2760
        %v4181 = vpop.f32.mrf.mxu0
        %v4182 = vadd.f32 %v4093, %v4181
        %v4183 = vpop.f32.mrf.mxu0
        %v4184 = vadd.f32 %v4095, %v4183
        %4185 = vmatmul.bf16.gmra.mxu0 %v2769
        %v4186 = vpop.f32.mrf.mxu0
        %v4187 = vadd.f32 %v4098, %v4186
        %v4188 = vpop.f32.mrf.mxu0
        %v4189 = vadd.f32 %v4100, %v4188
        %4190 = vmatmul.bf16.gmra.mxu0 %v2778
        %v4191 = vpop.f32.mrf.mxu0
        %v4192 = vadd.f32 %v4103, %v4191
        %v4193 = vpop.f32.mrf.mxu0
        %v4194 = vadd.f32 %v4105, %v4193
        %4195 = vmatmul.bf16.gmra.mxu0 %v2787
        %v4196 = vpop.f32.mrf.mxu0
        %v4197 = vadd.f32 %v4108, %v4196
        %v4198 = vpop.f32.mrf.mxu0
        %v4199 = vadd.f32 %v4110, %v4198
        %4200 = vmatmul.bf16.gmra.mxu0 %v2796
        %v4201 = vpop.f32.mrf.mxu0
        %v4202 = vadd.f32 %v4113, %v4201
        %v4203 = vpop.f32.mrf.mxu0
        %v4204 = vadd.f32 %v4115, %v4203
        %4205 = vmatmul.bf16.gmra.mxu0 %v2805
        %v4206 = vpop.f32.mrf.mxu0
        %v4207 = vadd.f32 %v4118, %v4206
        %v4208 = vpop.f32.mrf.mxu0
        %v4209 = vadd.f32 %v4120, %v4208
        %4210 = vmatmul.bf16.gmra.mxu0 %v2814
        %v4211 = vpop.f32.mrf.mxu0
        %v4212 = vadd.f32 %v4123, %v4211
        %v4213 = vpop.f32.mrf.mxu0
        %v4214 = vadd.f32 %v4125, %v4213
        %4215 = vmatmul.bf16.gmra.mxu0 %v2823
        %v4216 = vpop.f32.mrf.mxu0
        %v4217 = vadd.f32 %v4128, %v4216
        %v4218 = vpop.f32.mrf.mxu0
        %v4219 = vadd.f32 %v4130, %v4218
        %4220 = vmatmul.bf16.gmra.mxu0 %v2832
        %v4221 = vpop.f32.mrf.mxu0
        %v4222 = vadd.f32 %v4133, %v4221
        %v4223 = vpop.f32.mrf.mxu0
        %v4224 = vadd.f32 %v4135, %v4223
        %4225 = vmatmul.bf16.gmra.mxu0 %v2841
        %v4226 = vpop.f32.mrf.mxu0
        %v4227 = vadd.f32 %v4138, %v4226
        %v4228 = vpop.f32.mrf.mxu0
        %v4229 = vadd.f32 %v4140, %v4228
        %4230 = vmatmul.bf16.gmra.mxu0 %v2850
        %v4231 = vpop.f32.mrf.mxu0
        %v4232 = vadd.f32 %v4143, %v4231
        %v4233 = vpop.f32.mrf.mxu0
        %v4234 = vadd.f32 %v4145, %v4233
        %4235 = vmatmul.bf16.gmra.mxu0 %v2859
        %v4236 = vpop.f32.mrf.mxu0
        %v4237 = vadd.f32 %v4148, %v4236
        %v4238 = vpop.f32.mrf.mxu0
        %v4239 = vadd.f32 %v4150, %v4238
        %4240 = vmatmul.bf16.gmra.mxu0 %v2868
        %v4241 = vpop.f32.mrf.mxu0
        %v4242 = vadd.f32 %v4153, %v4241
        %v4243 = vpop.f32.mrf.mxu0
        %v4244 = vadd.f32 %v4155, %v4243
        %4245 = vdwg.mxu0
        %v4246 = vld [vmem:[%s4] sm:$0x3]
        %v4247 = vperm.slane %v4246, 0
        %v4248 = vmul.f32 %v4167, %v4247
        %v4249 = vmul.f32 %v4169, %v4247
        %v4250 = vmul.f32 %v4172, %v4247
        %v4251 = vmul.f32 %v4174, %v4247
        %v4252 = vmul.f32 %v4177, %v4247
        %v4253 = vmul.f32 %v4179, %v4247
        %v4254 = vmul.f32 %v4182, %v4247
        %v4255 = vmul.f32 %v4184, %v4247
        %v4256 = vmul.f32 %v4187, %v4247
        %v4257 = vmul.f32 %v4189, %v4247
        %v4258 = vmul.f32 %v4192, %v4247
        %v4259 = vmul.f32 %v4194, %v4247
        %v4260 = vmul.f32 %v4197, %v4247
        %v4261 = vmul.f32 %v4199, %v4247
        %v4262 = vmul.f32 %v4202, %v4247
        %v4263 = vmul.f32 %v4204, %v4247
        %v4264 = vmul.f32 %v4207, %v4247
        %v4265 = vmul.f32 %v4209, %v4247
        %v4266 = vmul.f32 %v4212, %v4247
        %v4267 = vmul.f32 %v4214, %v4247
        %v4268 = vmul.f32 %v4217, %v4247
        %v4269 = vmul.f32 %v4219, %v4247
        %v4270 = vmul.f32 %v4222, %v4247
        %v4271 = vmul.f32 %v4224, %v4247
        %v4272 = vmul.f32 %v4227, %v4247
        %v4273 = vmul.f32 %v4229, %v4247
        %v4274 = vmul.f32 %v4232, %v4247
        %v4275 = vmul.f32 %v4234, %v4247
        %v4276 = vmul.f32 %v4237, %v4247
        %v4277 = vmul.f32 %v4239, %v4247
        %v4278 = vmul.f32 %v4242, %v4247
        %v4279 = vmul.f32 %v4244, %v4247
        %v4280 = vperm.slane %v4246, 1
        %v4281 = vadd.f32 %v4248, %v4280
        %v4282 = vadd.f32 %v4249, %v4280
        %v4283 = vadd.f32 %v4250, %v4280
        %v4284 = vadd.f32 %v4251, %v4280
        %v4285 = vadd.f32 %v4252, %v4280
        %v4286 = vadd.f32 %v4253, %v4280
        %v4287 = vadd.f32 %v4254, %v4280
        %v4288 = vadd.f32 %v4255, %v4280
        %v4289 = vadd.f32 %v4256, %v4280
        %v4290 = vadd.f32 %v4257, %v4280
        %v4291 = vadd.f32 %v4258, %v4280
        %v4292 = vadd.f32 %v4259, %v4280
        %v4293 = vadd.f32 %v4260, %v4280
        %v4294 = vadd.f32 %v4261, %v4280
        %v4295 = vadd.f32 %v4262, %v4280
        %v4296 = vadd.f32 %v4263, %v4280
        %v4297 = vadd.f32 %v4264, %v4280
        %v4298 = vadd.f32 %v4265, %v4280
        %v4299 = vadd.f32 %v4266, %v4280
        %v4300 = vadd.f32 %v4267, %v4280
        %v4301 = vadd.f32 %v4268, %v4280
        %v4302 = vadd.f32 %v4269, %v4280
        %v4303 = vadd.f32 %v4270, %v4280
        %v4304 = vadd.f32 %v4271, %v4280
        %v4305 = vadd.f32 %v4272, %v4280
        %v4306 = vadd.f32 %v4273, %v4280
        %v4307 = vadd.f32 %v4274, %v4280
        %v4308 = vadd.f32 %v4275, %v4280
        %v4309 = vadd.f32 %v4276, %v4280
        %v4310 = vadd.f32 %v4277, %v4280
        %v4311 = vadd.f32 %v4278, %v4280
        %v4312 = vadd.f32 %v4279, %v4280
        %v4313 = vadd.f32 %v278, %v4281
        %v4314 = vadd.f32 %v279, %v4282
        %v4315 = vadd.f32 %v280, %v4283
        %v4316 = vadd.f32 %v281, %v4284
        %v4317 = vadd.f32 %v282, %v4285
        %v4318 = vadd.f32 %v283, %v4286
        %v4319 = vadd.f32 %v284, %v4287
        %v4320 = vadd.f32 %v285, %v4288
        %v4321 = vadd.f32 %v286, %v4289
        %v4322 = vadd.f32 %v287, %v4290
        %v4323 = vadd.f32 %v288, %v4291
        %v4324 = vadd.f32 %v289, %v4292
        %v4325 = vadd.f32 %v290, %v4293
        %v4326 = vadd.f32 %v291, %v4294
        %v4327 = vadd.f32 %v292, %v4295
        %v4328 = vadd.f32 %v293, %v4296
        %v4329 = vadd.f32 %v294, %v4297
        %v4330 = vadd.f32 %v295, %v4298
        %v4331 = vadd.f32 %v296, %v4299
        %v4332 = vadd.f32 %v297, %v4300
        %v4333 = vadd.f32 %v298, %v4301
        %v4334 = vadd.f32 %v299, %v4302
        %v4335 = vadd.f32 %v300, %v4303
        %v4336 = vadd.f32 %v301, %v4304
        %v4337 = vadd.f32 %v302, %v4305
        %v4338 = vadd.f32 %v303, %v4306
        %v4339 = vadd.f32 %v304, %v4307
        %v4340 = vadd.f32 %v305, %v4308
        %v4341 = vadd.f32 %v306, %v4309
        %v4342 = vadd.f32 %v307, %v4310
        %v4343 = vadd.f32 %v308, %v4311
        %v4344 = vadd.f32 %v309, %v4312
        %4345 = vst [vmem:[%s277] sm:$0xff] %v4313
        %4346 = vst [vmem:[%s277 + $0x8] sm:$0xff] %v4314
        %4347 = vst [vmem:[%s277 + $0x10] sm:$0xff] %v4315
        %4348 = vst [vmem:[%s277 + $0x18] sm:$0xff] %v4316
        %4349 = vst [vmem:[%s277 + $0x20] sm:$0xff] %v4317
        %4350 = vst [vmem:[%s277 + $0x28] sm:$0xff] %v4318
        %4351 = vst [vmem:[%s277 + $0x30] sm:$0xff] %v4319
        %4352 = vst [vmem:[%s277 + $0x38] sm:$0xff] %v4320
        %4353 = vst [vmem:[%s277 + $0x40] sm:$0xff] %v4321
        %4354 = vst [vmem:[%s277 + $0x48] sm:$0xff] %v4322
        %4355 = vst [vmem:[%s277 + $0x50] sm:$0xff] %v4323
        %4356 = vst [vmem:[%s277 + $0x58] sm:$0xff] %v4324
        %4357 = vst [vmem:[%s277 + $0x60] sm:$0xff] %v4325
        %4358 = vst [vmem:[%s277 + $0x68] sm:$0xff] %v4326
        %4359 = vst [vmem:[%s277 + $0x70] sm:$0xff] %v4327
        %4360 = vst [vmem:[%s277 + $0x78] sm:$0xff] %v4328
        %4361 = vst [vmem:[%s277 + $0x80] sm:$0xff] %v4329
        %4362 = vst [vmem:[%s277 + $0x88] sm:$0xff] %v4330
        %4363 = vst [vmem:[%s277 + $0x90] sm:$0xff] %v4331
        %4364 = vst [vmem:[%s277 + $0x98] sm:$0xff] %v4332
        %4365 = vst [vmem:[%s277 + $0xa0] sm:$0xff] %v4333
        %4366 = vst [vmem:[%s277 + $0xa8] sm:$0xff] %v4334
        %4367 = vst [vmem:[%s277 + $0xb0] sm:$0xff] %v4335
        %4368 = vst [vmem:[%s277 + $0xb8] sm:$0xff] %v4336
        %4369 = vst [vmem:[%s277 + $0xc0] sm:$0xff] %v4337
        %4370 = vst [vmem:[%s277 + $0xc8] sm:$0xff] %v4338
        %4371 = vst [vmem:[%s277 + $0xd0] sm:$0xff] %v4339
        %4372 = vst [vmem:[%s277 + $0xd8] sm:$0xff] %v4340
        %4373 = vst [vmem:[%s277 + $0xe0] sm:$0xff] %v4341
        %4374 = vst [vmem:[%s277 + $0xe8] sm:$0xff] %v4342
        %4375 = vst [vmem:[%s277 + $0xf0] sm:$0xff] %v4343
        %4376 = vst [vmem:[%s277 + $0xf8] sm:$0xff] %v4344
        %s4377 = sand.u32 %s141, 1
        %s4378 = scalar_lea.sflag [#allocation5], %s4377
        %s4379 = sand.u32 %s141, 1
        %s4380 = smul.addr %s4379, 256
        %s4381 = scalar_lea.vmem [#allocation9], %s4380
        // Predicated region
        $region53: #{residual_block_forward.1} parent=39 // pred_check
          %p4382 = pneg %p151
        $region54: #{residual_block_forward.1} parent=39 // pred_check_branch
          %4384 = sbr.rel (%p4382) target = $region56
        $region55: #{residual_block_forward.1} parent=39 // pred_region
          %4386 = vsyncadd %s4378, 0
          %s4387 = smul.addr %s23, 32
          %s4388 = smul.addr %s4387, 8
          %s4389 = scalar_lea.hbm %s5, %s4388
          %s4390 = sshll.u32 %s4381, 4
          %s4391 = int_to_ptr.vmem [resolvable:$true] %s4390
          %s4392 = sshll.u32 %s4389, 4
          %s4393 = int_to_ptr.hbm [resolvable:$true] %s4392
          %4398 = dma.vmem_to_hbm [thread:$0]  %s4391, 4096, %s4393, %s4378, 128, 128, 8
        $region56: #{residual_block_forward.1} parent=39 // pred_fallthru
          _
      $region40: #{residual_block_forward.1} parent=5 // pred_fallthru
        _
      %p4399 = scmp.le.s32.totalorder 2, %s18
      // Predicated region
      $region57: #{residual_block_forward.1} parent=5 // pred_check
        %p4400 = pneg %p4399
      $region58: #{residual_block_forward.1} parent=5 // pred_check_branch
        %4402 = sbr.rel (%p4400) target = $region60
      $region59: #{residual_block_forward.1} parent=5 // pred_region
        %s4403 = ssub.s32 %s18, 2
        // Predicated region
        $region61: #{residual_block_forward.1} parent=59 // pred_check
          %p4404 = pneg %p157
        $region62: #{residual_block_forward.1} parent=59 // pred_check_branch
          %4406 = sbr.rel (%p4404) target = $region64
        $region63: #{residual_block_forward.1} parent=59 // pred_region
          %s4407 = sand.u32 %s142, 1
          %s4408 = scalar_lea.sflag [#allocation5], %s4407
          %s4409 = sand.u32 %s142, 1
          %s4410 = smul.addr %s4409, 256
          %s4411 = scalar_lea.vmem [#allocation9], %s4410
          %4413 = dma.done %s4408, 4096
        $region64: #{residual_block_forward.1} parent=59 // pred_fallthru
          _
      $region60: #{residual_block_forward.1} parent=5 // pred_fallthru
        _
    $region6: #{residual_block_forward.1} parent=1 // loop_footer
      %s22 = sadd.s32 1, %s18
    $region7: #{residual_block_forward.1} parent=1 // loop_footer_branch
      %17 = sbr.rel target = $region3
    $region8: #{residual_block_forward.1} parent=1 // loop_exit
      _
    %4414 = vsyncpa [#allocation4], 1
    %s4415 = scalar_lea.sflag [#allocation4], 1
    %4416 = vsyncpa %s4415, 1
    %4417 = vsyncpa [#allocation7], 1
    %4418 = vsyncpa [#allocation5], 1
    %s4419 = scalar_lea.sflag [#allocation5], 1
    %4420 = vsyncpa %s4419, 1

</llo_original>
